<compile_context>
chip_gen: v7x
topology: tpu7x:2x2x1
jax: 0.10.0
libtpu: 0.0.40
codegen_flags: <defaults>
</compile_context>

<pallas_src>
import functools

import jax
import jax.numpy as jnp
from jax.experimental import pallas as pl
from jax.experimental.pallas import tpu as pltpu

IN_FEATURES = 768
N_HIDDEN = 30
N_OUT = 3


def _round_up(n: int, m: int) -> int:
    return ((n + m - 1) // m) * m


def mlp_head_kernel(x_ref, w1_ref, b1_ref, w2_ref, b2_ref, ot_ref, *, precision):
    # x:  (TB, 768)   w1: (768, 30)  b1: (1, 30)
    # w2: (30, 3)     b2: (1, 3)     ot: (3, TB)   <- transposed, lane-dense output
    x = x_ref[...]
    # fc: x @ w1 + b1, ReLU (MXU matmul, f32 accumulation)
    h = jnp.dot(x, w1_ref[...], preferred_element_type=jnp.float32, precision=precision)
    h = jnp.maximum(h + b1_ref[...], 0.0)
    # out: h @ w2 + b2 (tiny, stays f32; ~2% of FLOPs, hidden under the x DMA)
    y = jnp.dot(h, w2_ref[...], preferred_element_type=jnp.float32, precision=precision)
    y = y + b2_ref[...]
    # Store transposed: (TB, 3) -> (3, TB). Dense unmasked 128-lane stores + contiguous
    # writeback DMA instead of 3-of-128 masked stores with 12-byte-per-row fragments.
    ot_ref[...] = y.T.astype(ot_ref.dtype)


def mlp_head(x, w1, b1, w2, b2, *, block_b: int = 1024, precision=None):
    """Fused Linear(768->30) + ReLU + Linear(30->3).

    x: (B, 768) float32 or bfloat16 (read from HBM as-is, no wrapper cast).
    w1: (768, 30); b1: (1, 30); w2: (30, 3); b2: (1, 3). Returns (B, 3) float32.
    """
    B = x.shape[0]
    assert x.shape[1] == IN_FEATURES

    # Weights/biases are ~92 KiB total: casting them in the wrapper is free.
    w1 = w1.astype(x.dtype)
    b1 = b1.astype(jnp.float32)
    w2 = w2.astype(jnp.float32)
    b2 = b2.astype(jnp.float32)

    if precision is None and x.dtype == jnp.float32:
        # Strict f32 parity with the reference. On v5e consider Precision.DEFAULT.
        precision = jax.lax.Precision.HIGHEST

    # Batch tile. No wrapper padding: Pallas handles the ragged last block.
    #  - B <= 128: single block (block == full array dims is always legal).
    #  - otherwise tb is a multiple of 128 (x sublanes + transposed-output lanes aligned)
    #    and the grid has >= 2 steps (v7x megacore sharding + DMA/compute overlap).
    block_b = max(128, (block_b // 128) * 128)
    if B <= 128:
        tb = B
    elif B <= block_b:
        tb = _round_up(pl.cdiv(B, 2), 128)
    else:
        tb = block_b
    grid = (pl.cdiv(B, tb),)

    itemsize = jnp.dtype(x.dtype).itemsize
    cost = pl.CostEstimate(
        flops=2 * B * (IN_FEATURES * N_HIDDEN + N_HIDDEN * N_OUT),
        transcendentals=0,
        bytes_accessed=(
            B * IN_FEATURES * itemsize          # x (dominant)
            + B * N_OUT * 4                     # output
            + IN_FEATURES * N_HIDDEN * itemsize # w1
            + N_HIDDEN * N_OUT * 4              # w2
            + (N_HIDDEN + N_OUT) * 4            # biases
        ),
    )

    # Double-buffered x tile dominates VMEM; only raise the scoped limit if a big
    # block_b (e.g. 4096 f32 on v7x) actually needs it.
    vmem_estimate = 2 * tb * IN_FEATURES * itemsize + (2 << 20)
    vmem_limit = None
    if vmem_estimate > (16 << 20):
        vmem_limit = min(max(vmem_estimate, 32 << 20), 56 << 20)

    out_t = pl.pallas_call(
        functools.partial(mlp_head_kernel, precision=precision),
        out_shape=jax.ShapeDtypeStruct((N_OUT, B), jnp.float32),
        grid=grid,
        in_specs=[
            # x tiles over batch; weights/biases keep a constant index_map so they stay
            # resident in VMEM instead of being re-DMAed each tile.
            pl.BlockSpec((tb, IN_FEATURES), lambda i: (i, 0)),
            pl.BlockSpec((IN_FEATURES, N_HIDDEN), lambda i: (0, 0)),
            pl.BlockSpec((1, N_HIDDEN), lambda i: (0, 0)),
            pl.BlockSpec((N_HIDDEN, N_OUT), lambda i: (0, 0)),
            pl.BlockSpec((1, N_OUT), lambda i: (0, 0)),
        ],
        out_specs=pl.BlockSpec((N_OUT, tb), lambda i: (0, i)),
        compiler_params=pltpu.CompilerParams(
            dimension_semantics=("parallel",),  # batch tiles independent -> megacore
            vmem_limit_bytes=vmem_limit,
        ),
        cost_estimate=cost,
    )(x, w1, b1, w2, b2)

    # Tiny (3, B) -> (B, 3) transpose in the wrapper (12 bytes/row, negligible).
    return out_t.T


if __name__ == "__main__":
    key = jax.random.PRNGKey(0)
    kx, kw1, kb1, kw2, kb2 = jax.random.split(key, 5)

    # PyTorch nn.Linear weights are (out, in); stored here pre-transposed as (in, out).
    w1 = jax.random.normal(kw1, (IN_FEATURES, N_HIDDEN), dtype=jnp.float32) * 0.02
    b1 = jax.random.normal(kb1, (1, N_HIDDEN), dtype=jnp.float32) * 0.02
    w2 = jax.random.normal(kw2, (N_HIDDEN, N_OUT), dtype=jnp.float32) * 0.02
    b2 = jax.random.normal(kb2, (1, N_OUT), dtype=jnp.float32) * 0.02

    def reference(xf):
        hp = jax.lax.Precision.HIGHEST
        h = jnp.maximum(jnp.dot(xf, w1, precision=hp) + b1, 0.0)
        return jnp.dot(h, w2, precision=hp) + b2

    # --- Small-batch f32 path (single block, strict parity with reference) ---
    B = 8
    x = jax.random.normal(kx, (B, IN_FEATURES), dtype=jnp.float32)
    out = jax.block_until_ready(mlp_head(x, w1, b1, w2, b2))
    ref = reference(x)
    assert out.shape == (B, N_OUT)
    assert jnp.allclose(out, ref, atol=1e-4, rtol=1e-4), "f32 path mismatch vs reference"

    # --- Multi-block + ragged last block + bf16-from-producer path ---
    B2 = 200
    x2 = jax.random.normal(kx, (B2, IN_FEATURES), dtype=jnp.float32)
    x2_bf16 = x2.astype(jnp.bfloat16)  # "producer emits bf16": kernel reads bf16 from HBM
    out2 = jax.block_until_ready(mlp_head(x2_bf16, w1, b1, w2, b2, block_b=128))
    ref2 = reference(x2)
    assert out2.shape == (B2, N_OUT)
    assert out2.dtype == jnp.float32
    assert jnp.allclose(out2, ref2, atol=2e-2, rtol=5e-2), "bf16 path mismatch vs reference"

    print("KERNEL_OK")
</pallas_src>

<mosaic_0001>
module attributes {stable_mosaic.version = 11 : i64} {
  func.func @mlp_head_kernel(%arg0: i32, %arg1: memref<8x768xf32, #tpu.memory_space<vmem>>, %arg2: memref<768x30xf32, #tpu.memory_space<vmem>>, %arg3: memref<1x30xf32, #tpu.memory_space<vmem>>, %arg4: memref<30x3xf32, #tpu.memory_space<vmem>>, %arg5: memref<1x3xf32, #tpu.memory_space<vmem>>, %arg6: memref<3x8xf32, #tpu.memory_space<vmem>>) attributes {dimension_semantics = [#tpu.dimension_semantics<parallel>], iteration_bounds = array<i64: 1>, scalar_prefetch = 0 : i64, scratch_operands = 0 : i64, tpu.core_type = #tpu.core_type<tc>, window_params = [{transform_indices = @transform_0, window_bounds = array<i64: 8, 768>}, {pipeline_mode = #tpu.pipeline_mode<synchronous>, transform_indices = @transform_1, window_bounds = array<i64: 768, 30>}, {pipeline_mode = #tpu.pipeline_mode<synchronous>, transform_indices = @transform_2, window_bounds = array<i64: 1, 30>}, {pipeline_mode = #tpu.pipeline_mode<synchronous>, transform_indices = @transform_3, window_bounds = array<i64: 30, 3>}, {pipeline_mode = #tpu.pipeline_mode<synchronous>, transform_indices = @transform_4, window_bounds = array<i64: 1, 3>}, {transform_indices = @transform_5, window_bounds = array<i64: 3, 8>}]} {
    %c0 = arith.constant 0 : index
    %c0_0 = arith.constant 0 : index
    %0 = vector.load %arg1[%c0, %c0_0] : memref<8x768xf32, #tpu.memory_space<vmem>>, vector<8x768xf32>
    %c0_1 = arith.constant 0 : index
    %c0_2 = arith.constant 0 : index
    %1 = vector.load %arg2[%c0_1, %c0_2] : memref<768x30xf32, #tpu.memory_space<vmem>>, vector<768x30xf32>
    %cst = arith.constant dense<0.000000e+00> : vector<8x30xf32>
    %2 = tpu.matmul %0, %1, %cst {dimension_numbers = #tpu.dot_dimension_numbers<[1], [0], [0], [1], [0, 0, 1, 1], [], []>, precision = #tpu.contract_precision<fp32>} : vector<8x768xf32>, vector<768x30xf32>, vector<8x30xf32> -> vector<8x30xf32>
    %c0_3 = arith.constant 0 : index
    %c0_4 = arith.constant 0 : index
    %3 = vector.load %arg3[%c0_3, %c0_4] : memref<1x30xf32, #tpu.memory_space<vmem>>, vector<1x30xf32>
    %4 = vector.broadcast %3 : vector<1x30xf32> to vector<8x30xf32>
    %5 = arith.addf %2, %4 : vector<8x30xf32>
    %cst_5 = arith.constant 0.000000e+00 : f32
    %6 = vector.broadcast %cst_5 : f32 to vector<8x30xf32>
    %7 = arith.maximumf %5, %6 : vector<8x30xf32>
    %c0_6 = arith.constant 0 : index
    %c0_7 = arith.constant 0 : index
    %8 = vector.load %arg4[%c0_6, %c0_7] : memref<30x3xf32, #tpu.memory_space<vmem>>, vector<30x3xf32>
    %cst_8 = arith.constant dense<0.000000e+00> : vector<8x3xf32>
    %9 = tpu.matmul %7, %8, %cst_8 {dimension_numbers = #tpu.dot_dimension_numbers<[1], [0], [0], [1], [0, 0, 1, 1], [], []>, precision = #tpu.contract_precision<fp32>} : vector<8x30xf32>, vector<30x3xf32>, vector<8x3xf32> -> vector<8x3xf32>
    %c0_9 = arith.constant 0 : index
    %c0_10 = arith.constant 0 : index
    %10 = vector.load %arg5[%c0_9, %c0_10] : memref<1x3xf32, #tpu.memory_space<vmem>>, vector<1x3xf32>
    %11 = vector.broadcast %10 : vector<1x3xf32> to vector<8x3xf32>
    %12 = arith.addf %9, %11 : vector<8x3xf32>
    %13 = tpu.transpose %12, [1, 0] : vector<8x3xf32> -> vector<3x8xf32>
    %c0_11 = arith.constant 0 : index
    %c0_12 = arith.constant 0 : index
    %14 = vector.load %arg6[%c0_11, %c0_12] : memref<3x8xf32, #tpu.memory_space<vmem>>, vector<3x8xf32>
    tpu.vector_store %arg6[%c0_11, %c0_12], %13 {strides = array<i32>} : memref<3x8xf32, #tpu.memory_space<vmem>>, vector<3x8xf32>,
    return
  }
  func.func @transform_0(%arg0: i32) -> (i32, i32) {
    %c0_i32 = arith.constant 0 : i32
    %c0_i32_0 = arith.constant 0 : i32
    return %arg0, %c0_i32 : i32, i32
  }
  func.func @transform_1(%arg0: i32) -> (i32, i32) {
    %c0_i32 = arith.constant 0 : i32
    %c0_i32_0 = arith.constant 0 : i32
    %c0_i32_1 = arith.constant 0 : i32
    return %c0_i32, %c0_i32_0 : i32, i32
  }
  func.func @transform_2(%arg0: i32) -> (i32, i32) {
    %c0_i32 = arith.constant 0 : i32
    %c0_i32_0 = arith.constant 0 : i32
    %c0_i32_1 = arith.constant 0 : i32
    return %c0_i32, %c0_i32_0 : i32, i32
  }
  func.func @transform_3(%arg0: i32) -> (i32, i32) {
    %c0_i32 = arith.constant 0 : i32
    %c0_i32_0 = arith.constant 0 : i32
    %c0_i32_1 = arith.constant 0 : i32
    return %c0_i32, %c0_i32_0 : i32, i32
  }
  func.func @transform_4(%arg0: i32) -> (i32, i32) {
    %c0_i32 = arith.constant 0 : i32
    %c0_i32_0 = arith.constant 0 : i32
    %c0_i32_1 = arith.constant 0 : i32
    return %c0_i32, %c0_i32_0 : i32, i32
  }
  func.func @transform_5(%arg0: i32) -> (i32, i32) {
    %c0_i32 = arith.constant 0 : i32
    %c0_i32_0 = arith.constant 0 : i32
    return %c0_i32, %arg0 : i32, i32
  }
}

</mosaic_0001>

<llo_original>
// kernel: tpu_custom_call.1
$region0: #{tpu_custom_call.1}
  #allocation0 [shape = 'u32[]', space=smem, size = 0x4, offset = 0x4, fixed_abs, tag = 'smem constant byte address 0x4 - core index']
  #allocation1 [shape = 'u32[144,128]{1,0:T(1,128)}', space=vmem, size = 0x12000, scoped, tag = 'internal scratch']
  %s0 = inlined_call_operand.vmem [shape: f32[8,768], index: 0, kind: input, shape index: {}]
  %s1 = inlined_call_operand.vmem [shape: f32[768,30], index: 1, kind: input, shape index: {}]
  %s2 = inlined_call_operand.vmem [shape: f32[1,30], index: 2, kind: input, shape index: {}]
  %s3 = inlined_call_operand.vmem [shape: f32[30,3], index: 3, kind: input, shape index: {}]
  %s4 = inlined_call_operand.vmem [shape: f32[1,3], index: 4, kind: input, shape index: {}]
  %s5 = inlined_call_operand.hbm [shape: f32[3,8], index: 5, kind: output, shape index: {}]
  %s6 = sld [smem:[#allocation0]]
  $region30: #{tpu_custom_call.1} parent=0
    _
  %s8 = ssub.s32 1, %s6
  %s9 = scalar_select 0, %s8, %s6
  $region1: #{tpu_custom_call.1} parent=0
    #allocation2 [shape = 'u8[2048]{0}', space=vmem, size = 0x800, scoped, tag = 'output window, operand 0, single buffered']
    #allocation3 [shape = 's32[1]{0}', space=sflag, size = 0x4, scoped, tag = 'scoped memory for tpu_custom_call.1']
    %10 = vsyncpa [#allocation3], 0
    // Predicated region
    $region2: #{tpu_custom_call.1} parent=1 // pred_check
      _
    $region3: #{tpu_custom_call.1} parent=1 // pred_check_branch
      %12 = sbr.rel (0) target = $region5
    $region4: #{tpu_custom_call.1} parent=1 // pred_region
      _
    $region5: #{tpu_custom_call.1} parent=1 // pred_fallthru
      _
    // Predicated region
    $region6: #{tpu_custom_call.1} parent=1 // pred_check
      _
    $region7: #{tpu_custom_call.1} parent=1 // pred_check_branch
      %14 = sbr.rel (0) target = $region9
    $region8: #{tpu_custom_call.1} parent=1 // pred_region
      _
    $region9: #{tpu_custom_call.1} parent=1 // pred_fallthru
      _
    // Predicated region
    $region10: #{tpu_custom_call.1} parent=1 // pred_check
      _
    $region11: #{tpu_custom_call.1} parent=1 // pred_check_branch
      %16 = sbr.rel (0) target = $region13
    $region12: #{tpu_custom_call.1} parent=1 // pred_region
      _
    $region13: #{tpu_custom_call.1} parent=1 // pred_fallthru
      _
    // Predicated region
    $region14: #{tpu_custom_call.1} parent=1 // pred_check
      _
    $region15: #{tpu_custom_call.1} parent=1 // pred_check_branch
      %18 = sbr.rel (0) target = $region17
    $region16: #{tpu_custom_call.1} parent=1 // pred_region
      _
    $region17: #{tpu_custom_call.1} parent=1 // pred_fallthru
      _
    // Predicated region
    $region18: #{tpu_custom_call.1} parent=1 // pred_check
      _
    $region19: #{tpu_custom_call.1} parent=1 // pred_check_branch
      %20 = sbr.rel (0) target = $region21
    $region20: #{tpu_custom_call.1} parent=1 // pred_region
      _
    $region21: #{tpu_custom_call.1} parent=1 // pred_fallthru
      _
    %v21 = vld [vmem:[%s0] sm:$0xff]
    %v22 = vld [vmem:[%s0 + $0x8] sm:$0xff]
    %v23 = vld [vmem:[%s0 + $0x10] sm:$0xff]
    %v24 = vld [vmem:[%s0 + $0x18] sm:$0xff]
    %v25 = vld [vmem:[%s0 + $0x20] sm:$0xff]
    %v26 = vld [vmem:[%s0 + $0x28] sm:$0xff]
    %v27 = vld [vmem:[%s1] sm:$0xff]
    %v28 = vld [vmem:[%s1 + $0x8] sm:$0xff]
    %v29 = vld [vmem:[%s1 + $0x10] sm:$0xff]
    %v30 = vld [vmem:[%s1 + $0x18] sm:$0xff]
    %v31 = vld [vmem:[%s1 + $0x20] sm:$0xff]
    %v32 = vld [vmem:[%s1 + $0x28] sm:$0xff]
    %v33 = vld [vmem:[%s1 + $0x30] sm:$0xff]
    %v34 = vld [vmem:[%s1 + $0x38] sm:$0xff]
    %v35 = vld [vmem:[%s1 + $0x40] sm:$0xff]
    %v36 = vld [vmem:[%s1 + $0x48] sm:$0xff]
    %v37 = vld [vmem:[%s1 + $0x50] sm:$0xff]
    %v38 = vld [vmem:[%s1 + $0x58] sm:$0xff]
    %v39 = vld [vmem:[%s1 + $0x60] sm:$0xff]
    %v40 = vld [vmem:[%s1 + $0x68] sm:$0xff]
    %v41 = vld [vmem:[%s1 + $0x70] sm:$0xff]
    %v42 = vld [vmem:[%s1 + $0x78] sm:$0xff]
    %v43 = vld [vmem:[%s1 + $0x80] sm:$0xff]
    %v44 = vld [vmem:[%s1 + $0x88] sm:$0xff]
    %v45 = vld [vmem:[%s1 + $0x90] sm:$0xff]
    %v46 = vld [vmem:[%s1 + $0x98] sm:$0xff]
    %v47 = vld [vmem:[%s1 + $0xa0] sm:$0xff]
    %v48 = vld [vmem:[%s1 + $0xa8] sm:$0xff]
    %v49 = vld [vmem:[%s1 + $0xb0] sm:$0xff]
    %v50 = vld [vmem:[%s1 + $0xb8] sm:$0xff]
    %v51 = vld [vmem:[%s1 + $0xc0] sm:$0xff]
    %v52 = vld [vmem:[%s1 + $0xc8] sm:$0xff]
    %v53 = vld [vmem:[%s1 + $0xd0] sm:$0xff]
    %v54 = vld [vmem:[%s1 + $0xd8] sm:$0xff]
    %v55 = vld [vmem:[%s1 + $0xe0] sm:$0xff]
    %v56 = vld [vmem:[%s1 + $0xe8] sm:$0xff]
    %v57 = vld [vmem:[%s1 + $0xf0] sm:$0xff]
    %v58 = vld [vmem:[%s1 + $0xf8] sm:$0xff]
    %v59 = vld [vmem:[%s1 + $0x100] sm:$0xff]
    %v60 = vld [vmem:[%s1 + $0x108] sm:$0xff]
    %v61 = vld [vmem:[%s1 + $0x110] sm:$0xff]
    %v62 = vld [vmem:[%s1 + $0x118] sm:$0xff]
    %v63 = vld [vmem:[%s1 + $0x120] sm:$0xff]
    %v64 = vld [vmem:[%s1 + $0x128] sm:$0xff]
    %v65 = vld [vmem:[%s1 + $0x130] sm:$0xff]
    %v66 = vld [vmem:[%s1 + $0x138] sm:$0xff]
    %v67 = vld [vmem:[%s1 + $0x140] sm:$0xff]
    %v68 = vld [vmem:[%s1 + $0x148] sm:$0xff]
    %v69 = vld [vmem:[%s1 + $0x150] sm:$0xff]
    %v70 = vld [vmem:[%s1 + $0x158] sm:$0xff]
    %v71 = vld [vmem:[%s1 + $0x160] sm:$0xff]
    %v72 = vld [vmem:[%s1 + $0x168] sm:$0xff]
    %v73 = vld [vmem:[%s1 + $0x170] sm:$0xff]
    %v74 = vld [vmem:[%s1 + $0x178] sm:$0xff]
    %v75 = vld [vmem:[%s1 + $0x180] sm:$0xff]
    %v76 = vld [vmem:[%s1 + $0x188] sm:$0xff]
    %v77 = vld [vmem:[%s1 + $0x190] sm:$0xff]
    %v78 = vld [vmem:[%s1 + $0x198] sm:$0xff]
    %v79 = vld [vmem:[%s1 + $0x1a0] sm:$0xff]
    %v80 = vld [vmem:[%s1 + $0x1a8] sm:$0xff]
    %v81 = vld [vmem:[%s1 + $0x1b0] sm:$0xff]
    %v82 = vld [vmem:[%s1 + $0x1b8] sm:$0xff]
    %v83 = vld [vmem:[%s1 + $0x1c0] sm:$0xff]
    %v84 = vld [vmem:[%s1 + $0x1c8] sm:$0xff]
    %v85 = vld [vmem:[%s1 + $0x1d0] sm:$0xff]
    %v86 = vld [vmem:[%s1 + $0x1d8] sm:$0xff]
    %v87 = vld [vmem:[%s1 + $0x1e0] sm:$0xff]
    %v88 = vld [vmem:[%s1 + $0x1e8] sm:$0xff]
    %v89 = vld [vmem:[%s1 + $0x1f0] sm:$0xff]
    %v90 = vld [vmem:[%s1 + $0x1f8] sm:$0xff]
    %v91 = vld [vmem:[%s1 + $0x200] sm:$0xff]
    %v92 = vld [vmem:[%s1 + $0x208] sm:$0xff]
    %v93 = vld [vmem:[%s1 + $0x210] sm:$0xff]
    %v94 = vld [vmem:[%s1 + $0x218] sm:$0xff]
    %v95 = vld [vmem:[%s1 + $0x220] sm:$0xff]
    %v96 = vld [vmem:[%s1 + $0x228] sm:$0xff]
    %v97 = vld [vmem:[%s1 + $0x230] sm:$0xff]
    %v98 = vld [vmem:[%s1 + $0x238] sm:$0xff]
    %v99 = vld [vmem:[%s1 + $0x240] sm:$0xff]
    %v100 = vld [vmem:[%s1 + $0x248] sm:$0xff]
    %v101 = vld [vmem:[%s1 + $0x250] sm:$0xff]
    %v102 = vld [vmem:[%s1 + $0x258] sm:$0xff]
    %v103 = vld [vmem:[%s1 + $0x260] sm:$0xff]
    %v104 = vld [vmem:[%s1 + $0x268] sm:$0xff]
    %v105 = vld [vmem:[%s1 + $0x270] sm:$0xff]
    %v106 = vld [vmem:[%s1 + $0x278] sm:$0xff]
    %v107 = vld [vmem:[%s1 + $0x280] sm:$0xff]
    %v108 = vld [vmem:[%s1 + $0x288] sm:$0xff]
    %v109 = vld [vmem:[%s1 + $0x290] sm:$0xff]
    %v110 = vld [vmem:[%s1 + $0x298] sm:$0xff]
    %v111 = vld [vmem:[%s1 + $0x2a0] sm:$0xff]
    %v112 = vld [vmem:[%s1 + $0x2a8] sm:$0xff]
    %v113 = vld [vmem:[%s1 + $0x2b0] sm:$0xff]
    %v114 = vld [vmem:[%s1 + $0x2b8] sm:$0xff]
    %v115 = vld [vmem:[%s1 + $0x2c0] sm:$0xff]
    %v116 = vld [vmem:[%s1 + $0x2c8] sm:$0xff]
    %v117 = vld [vmem:[%s1 + $0x2d0] sm:$0xff]
    %v118 = vld [vmem:[%s1 + $0x2d8] sm:$0xff]
    %v119 = vld [vmem:[%s1 + $0x2e0] sm:$0xff]
    %v120 = vld [vmem:[%s1 + $0x2e8] sm:$0xff]
    %v121 = vld [vmem:[%s1 + $0x2f0] sm:$0xff]
    %v122 = vld [vmem:[%s1 + $0x2f8] sm:$0xff]
    %v123 = vld [vmem:[%s2] sm:$0x1]
    %v125 = vlaneseq
    %v126 = vshrl.u32 %v125, 7
    %v127 = vsub.s32 0, %v126
    %v128 = vrot.slane %v123, %v127
    %130 = vmatprep.subr.mxu0 0.0
    %v131 = vand.u32 %v27, 4294901760
    %132 = vmatpush1.msra.mxu0 %v131
    %133 = vmatprep.subr.mxu0 0.0
    %v134 = vand.u32 %v28, 4294901760
    %135 = vmatpush1.msra.mxu0 %v134
    %136 = vmatprep.subr.mxu0 0.0
    %v137 = vand.u32 %v29, 4294901760
    %138 = vmatpush1.msra.mxu0 %v137
    %139 = vmatprep.subr.mxu0 0.0
    %v140 = vand.u32 %v30, 4294901760
    %141 = vmatpush1.msra.mxu0 %v140
    %142 = vmatprep.subr.mxu0 0.0
    %v143 = vand.u32 %v31, 4294901760
    %144 = vmatpush1.msra.mxu0 %v143
    %145 = vmatprep.subr.mxu0 0.0
    %v146 = vand.u32 %v32, 4294901760
    %147 = vmatpush1.msra.mxu0 %v146
    %148 = vmatprep.subr.mxu0 0.0
    %v149 = vand.u32 %v33, 4294901760
    %150 = vmatpush1.msra.mxu0 %v149
    %151 = vmatprep.subr.mxu0 0.0
    %v152 = vand.u32 %v34, 4294901760
    %153 = vmatpush1.msra.mxu0 %v152
    %154 = vmatprep.subr.mxu0 0.0
    %v155 = vand.u32 %v35, 4294901760
    %156 = vmatpush1.msra.mxu0 %v155
    %157 = vmatprep.subr.mxu0 0.0
    %v158 = vand.u32 %v36, 4294901760
    %159 = vmatpush1.msra.mxu0 %v158
    %160 = vmatprep.subr.mxu0 0.0
    %v161 = vand.u32 %v37, 4294901760
    %162 = vmatpush1.msra.mxu0 %v161
    %163 = vmatprep.subr.mxu0 0.0
    %v164 = vand.u32 %v38, 4294901760
    %165 = vmatpush1.msra.mxu0 %v164
    %166 = vmatprep.subr.mxu0 0.0
    %v167 = vand.u32 %v39, 4294901760
    %168 = vmatpush1.msra.mxu0 %v167
    %169 = vmatprep.subr.mxu0 0.0
    %v170 = vand.u32 %v40, 4294901760
    %171 = vmatpush1.msra.mxu0 %v170
    %172 = vmatprep.subr.mxu0 0.0
    %v173 = vand.u32 %v41, 4294901760
    %174 = vmatpush1.msra.mxu0 %v173
    %175 = vmatprep.subr.mxu0 0.0
    %v176 = vand.u32 %v42, 4294901760
    %177 = vmatpush1.msra.mxu0 %v176
    %178 = vmatprep.subr.mxu0 0.0
    %v179 = vand.u32 %v43, 4294901760
    %180 = vmatpush1.msra.mxu0 %v179
    %181 = vmatprep.subr.mxu0 0.0
    %v182 = vand.u32 %v44, 4294901760
    %183 = vmatpush1.msra.mxu0 %v182
    %184 = vmatprep.subr.mxu0 0.0
    %v185 = vand.u32 %v45, 4294901760
    %186 = vmatpush1.msra.mxu0 %v185
    %187 = vmatprep.subr.mxu0 0.0
    %v188 = vand.u32 %v46, 4294901760
    %189 = vmatpush1.msra.mxu0 %v188
    %190 = vmatprep.subr.mxu0 0.0
    %v191 = vand.u32 %v47, 4294901760
    %192 = vmatpush1.msra.mxu0 %v191
    %193 = vmatprep.subr.mxu0 0.0
    %v194 = vand.u32 %v48, 4294901760
    %195 = vmatpush1.msra.mxu0 %v194
    %196 = vmatprep.subr.mxu0 0.0
    %v197 = vand.u32 %v49, 4294901760
    %198 = vmatpush1.msra.mxu0 %v197
    %199 = vmatprep.subr.mxu0 0.0
    %v200 = vand.u32 %v50, 4294901760
    %201 = vmatpush1.msra.mxu0 %v200
    %202 = vmatprep.subr.mxu0 0.0
    %v203 = vand.u32 %v51, 4294901760
    %204 = vmatpush1.msra.mxu0 %v203
    %205 = vmatprep.subr.mxu0 0.0
    %v206 = vand.u32 %v52, 4294901760
    %207 = vmatpush1.msra.mxu0 %v206
    %208 = vmatprep.subr.mxu0 0.0
    %v209 = vand.u32 %v53, 4294901760
    %210 = vmatpush1.msra.mxu0 %v209
    %211 = vmatprep.subr.mxu0 0.0
    %v212 = vand.u32 %v54, 4294901760
    %213 = vmatpush1.msra.mxu0 %v212
    %214 = vmatprep.subr.mxu0 0.0
    %v215 = vand.u32 %v55, 4294901760
    %216 = vmatpush1.msra.mxu0 %v215
    %217 = vmatprep.subr.mxu0 0.0
    %v218 = vand.u32 %v56, 4294901760
    %219 = vmatpush1.msra.mxu0 %v218
    %220 = vmatprep.subr.mxu0 0.0
    %v221 = vand.u32 %v57, 4294901760
    %222 = vmatpush1.msra.mxu0 %v221
    %223 = vmatprep.subr.mxu0 0.0
    %v224 = vand.u32 %v58, 4294901760
    %225 = vmatpush1.msra.mxu0 %v224
    %v226 = vand.u32 %v22, 4294901760
    %v227 = vsub.f32 %v22, %v226
    %v228 = vand.u32 %v227, 4294901760
    %v229 = vsub.f32 %v227, %v228
    %v230 = vand.u32 %v229, 4294901760
    %231 = vmatprep.mubr.f32.mxu0 %v230
    %v232 = vand.u32 %v21, 4294901760
    %v233 = vsub.f32 %v21, %v232
    %v234 = vand.u32 %v233, 4294901760
    %v235 = vsub.f32 %v233, %v234
    %v236 = vand.u32 %v235, 4294901760
    %237 = vmatmul.mubr.f32.gmra.mrb[0].mxu0 %v236
    %v238 = vpop.f32.mrb[0].mxu0
    %v239 = vadd.f32 %v128, %v238
    %v240 = vpop.f32.mrb[0].mxu0
    %241 = vdwg.mxu0
    %242 = vmatprep.subr.mxu0 0.0
    %v243 = vand.u32 %v27, 4294901760
    %v244 = vsub.f32 %v27, %v243
    %v245 = vand.u32 %v244, 4294901760
    %v246 = vsub.f32 %v244, %v245
    %v247 = vand.u32 %v246, 4294901760
    %248 = vmatpush1.msra.mxu0 %v247
    %249 = vmatprep.subr.mxu0 0.0
    %v250 = vand.u32 %v28, 4294901760
    %v251 = vsub.f32 %v28, %v250
    %v252 = vand.u32 %v251, 4294901760
    %v253 = vsub.f32 %v251, %v252
    %v254 = vand.u32 %v253, 4294901760
    %255 = vmatpush1.msra.mxu0 %v254
    %256 = vmatprep.subr.mxu0 0.0
    %v257 = vand.u32 %v29, 4294901760
    %v258 = vsub.f32 %v29, %v257
    %v259 = vand.u32 %v258, 4294901760
    %v260 = vsub.f32 %v258, %v259
    %v261 = vand.u32 %v260, 4294901760
    %262 = vmatpush1.msra.mxu0 %v261
    %263 = vmatprep.subr.mxu0 0.0
    %v264 = vand.u32 %v30, 4294901760
    %v265 = vsub.f32 %v30, %v264
    %v266 = vand.u32 %v265, 4294901760
    %v267 = vsub.f32 %v265, %v266
    %v268 = vand.u32 %v267, 4294901760
    %269 = vmatpush1.msra.mxu0 %v268
    %270 = vmatprep.subr.mxu0 0.0
    %v271 = vand.u32 %v31, 4294901760
    %v272 = vsub.f32 %v31, %v271
    %v273 = vand.u32 %v272, 4294901760
    %v274 = vsub.f32 %v272, %v273
    %v275 = vand.u32 %v274, 4294901760
    %276 = vmatpush1.msra.mxu0 %v275
    %277 = vmatprep.subr.mxu0 0.0
    %v278 = vand.u32 %v32, 4294901760
    %v279 = vsub.f32 %v32, %v278
    %v280 = vand.u32 %v279, 4294901760
    %v281 = vsub.f32 %v279, %v280
    %v282 = vand.u32 %v281, 4294901760
    %283 = vmatpush1.msra.mxu0 %v282
    %284 = vmatprep.subr.mxu0 0.0
    %v285 = vand.u32 %v33, 4294901760
    %v286 = vsub.f32 %v33, %v285
    %v287 = vand.u32 %v286, 4294901760
    %v288 = vsub.f32 %v286, %v287
    %v289 = vand.u32 %v288, 4294901760
    %290 = vmatpush1.msra.mxu0 %v289
    %291 = vmatprep.subr.mxu0 0.0
    %v292 = vand.u32 %v34, 4294901760
    %v293 = vsub.f32 %v34, %v292
    %v294 = vand.u32 %v293, 4294901760
    %v295 = vsub.f32 %v293, %v294
    %v296 = vand.u32 %v295, 4294901760
    %297 = vmatpush1.msra.mxu0 %v296
    %298 = vmatprep.subr.mxu0 0.0
    %v299 = vand.u32 %v35, 4294901760
    %v300 = vsub.f32 %v35, %v299
    %v301 = vand.u32 %v300, 4294901760
    %v302 = vsub.f32 %v300, %v301
    %v303 = vand.u32 %v302, 4294901760
    %304 = vmatpush1.msra.mxu0 %v303
    %305 = vmatprep.subr.mxu0 0.0
    %v306 = vand.u32 %v36, 4294901760
    %v307 = vsub.f32 %v36, %v306
    %v308 = vand.u32 %v307, 4294901760
    %v309 = vsub.f32 %v307, %v308
    %v310 = vand.u32 %v309, 4294901760
    %311 = vmatpush1.msra.mxu0 %v310
    %312 = vmatprep.subr.mxu0 0.0
    %v313 = vand.u32 %v37, 4294901760
    %v314 = vsub.f32 %v37, %v313
    %v315 = vand.u32 %v314, 4294901760
    %v316 = vsub.f32 %v314, %v315
    %v317 = vand.u32 %v316, 4294901760
    %318 = vmatpush1.msra.mxu0 %v317
    %319 = vmatprep.subr.mxu0 0.0
    %v320 = vand.u32 %v38, 4294901760
    %v321 = vsub.f32 %v38, %v320
    %v322 = vand.u32 %v321, 4294901760
    %v323 = vsub.f32 %v321, %v322
    %v324 = vand.u32 %v323, 4294901760
    %325 = vmatpush1.msra.mxu0 %v324
    %326 = vmatprep.subr.mxu0 0.0
    %v327 = vand.u32 %v39, 4294901760
    %v328 = vsub.f32 %v39, %v327
    %v329 = vand.u32 %v328, 4294901760
    %v330 = vsub.f32 %v328, %v329
    %v331 = vand.u32 %v330, 4294901760
    %332 = vmatpush1.msra.mxu0 %v331
    %333 = vmatprep.subr.mxu0 0.0
    %v334 = vand.u32 %v40, 4294901760
    %v335 = vsub.f32 %v40, %v334
    %v336 = vand.u32 %v335, 4294901760
    %v337 = vsub.f32 %v335, %v336
    %v338 = vand.u32 %v337, 4294901760
    %339 = vmatpush1.msra.mxu0 %v338
    %340 = vmatprep.subr.mxu0 0.0
    %v341 = vand.u32 %v41, 4294901760
    %v342 = vsub.f32 %v41, %v341
    %v343 = vand.u32 %v342, 4294901760
    %v344 = vsub.f32 %v342, %v343
    %v345 = vand.u32 %v344, 4294901760
    %346 = vmatpush1.msra.mxu0 %v345
    %347 = vmatprep.subr.mxu0 0.0
    %v348 = vand.u32 %v42, 4294901760
    %v349 = vsub.f32 %v42, %v348
    %v350 = vand.u32 %v349, 4294901760
    %v351 = vsub.f32 %v349, %v350
    %v352 = vand.u32 %v351, 4294901760
    %353 = vmatpush1.msra.mxu0 %v352
    %354 = vmatprep.subr.mxu0 0.0
    %v355 = vand.u32 %v43, 4294901760
    %v356 = vsub.f32 %v43, %v355
    %v357 = vand.u32 %v356, 4294901760
    %v358 = vsub.f32 %v356, %v357
    %v359 = vand.u32 %v358, 4294901760
    %360 = vmatpush1.msra.mxu0 %v359
    %361 = vmatprep.subr.mxu0 0.0
    %v362 = vand.u32 %v44, 4294901760
    %v363 = vsub.f32 %v44, %v362
    %v364 = vand.u32 %v363, 4294901760
    %v365 = vsub.f32 %v363, %v364
    %v366 = vand.u32 %v365, 4294901760
    %367 = vmatpush1.msra.mxu0 %v366
    %368 = vmatprep.subr.mxu0 0.0
    %v369 = vand.u32 %v45, 4294901760
    %v370 = vsub.f32 %v45, %v369
    %v371 = vand.u32 %v370, 4294901760
    %v372 = vsub.f32 %v370, %v371
    %v373 = vand.u32 %v372, 4294901760
    %374 = vmatpush1.msra.mxu0 %v373
    %375 = vmatprep.subr.mxu0 0.0
    %v376 = vand.u32 %v46, 4294901760
    %v377 = vsub.f32 %v46, %v376
    %v378 = vand.u32 %v377, 4294901760
    %v379 = vsub.f32 %v377, %v378
    %v380 = vand.u32 %v379, 4294901760
    %381 = vmatpush1.msra.mxu0 %v380
    %382 = vmatprep.subr.mxu0 0.0
    %v383 = vand.u32 %v47, 4294901760
    %v384 = vsub.f32 %v47, %v383
    %v385 = vand.u32 %v384, 4294901760
    %v386 = vsub.f32 %v384, %v385
    %v387 = vand.u32 %v386, 4294901760
    %388 = vmatpush1.msra.mxu0 %v387
    %389 = vmatprep.subr.mxu0 0.0
    %v390 = vand.u32 %v48, 4294901760
    %v391 = vsub.f32 %v48, %v390
    %v392 = vand.u32 %v391, 4294901760
    %v393 = vsub.f32 %v391, %v392
    %v394 = vand.u32 %v393, 4294901760
    %395 = vmatpush1.msra.mxu0 %v394
    %396 = vmatprep.subr.mxu0 0.0
    %v397 = vand.u32 %v49, 4294901760
    %v398 = vsub.f32 %v49, %v397
    %v399 = vand.u32 %v398, 4294901760
    %v400 = vsub.f32 %v398, %v399
    %v401 = vand.u32 %v400, 4294901760
    %402 = vmatpush1.msra.mxu0 %v401
    %403 = vmatprep.subr.mxu0 0.0
    %v404 = vand.u32 %v50, 4294901760
    %v405 = vsub.f32 %v50, %v404
    %v406 = vand.u32 %v405, 4294901760
    %v407 = vsub.f32 %v405, %v406
    %v408 = vand.u32 %v407, 4294901760
    %409 = vmatpush1.msra.mxu0 %v408
    %410 = vmatprep.subr.mxu0 0.0
    %v411 = vand.u32 %v51, 4294901760
    %v412 = vsub.f32 %v51, %v411
    %v413 = vand.u32 %v412, 4294901760
    %v414 = vsub.f32 %v412, %v413
    %v415 = vand.u32 %v414, 4294901760
    %416 = vmatpush1.msra.mxu0 %v415
    %417 = vmatprep.subr.mxu0 0.0
    %v418 = vand.u32 %v52, 4294901760
    %v419 = vsub.f32 %v52, %v418
    %v420 = vand.u32 %v419, 4294901760
    %v421 = vsub.f32 %v419, %v420
    %v422 = vand.u32 %v421, 4294901760
    %423 = vmatpush1.msra.mxu0 %v422
    %424 = vmatprep.subr.mxu0 0.0
    %v425 = vand.u32 %v53, 4294901760
    %v426 = vsub.f32 %v53, %v425
    %v427 = vand.u32 %v426, 4294901760
    %v428 = vsub.f32 %v426, %v427
    %v429 = vand.u32 %v428, 4294901760
    %430 = vmatpush1.msra.mxu0 %v429
    %431 = vmatprep.subr.mxu0 0.0
    %v432 = vand.u32 %v54, 4294901760
    %v433 = vsub.f32 %v54, %v432
    %v434 = vand.u32 %v433, 4294901760
    %v435 = vsub.f32 %v433, %v434
    %v436 = vand.u32 %v435, 4294901760
    %437 = vmatpush1.msra.mxu0 %v436
    %438 = vmatprep.subr.mxu0 0.0
    %v439 = vand.u32 %v55, 4294901760
    %v440 = vsub.f32 %v55, %v439
    %v441 = vand.u32 %v440, 4294901760
    %v442 = vsub.f32 %v440, %v441
    %v443 = vand.u32 %v442, 4294901760
    %444 = vmatpush1.msra.mxu0 %v443
    %445 = vmatprep.subr.mxu0 0.0
    %v446 = vand.u32 %v56, 4294901760
    %v447 = vsub.f32 %v56, %v446
    %v448 = vand.u32 %v447, 4294901760
    %v449 = vsub.f32 %v447, %v448
    %v450 = vand.u32 %v449, 4294901760
    %451 = vmatpush1.msra.mxu0 %v450
    %452 = vmatprep.subr.mxu0 0.0
    %v453 = vand.u32 %v57, 4294901760
    %v454 = vsub.f32 %v57, %v453
    %v455 = vand.u32 %v454, 4294901760
    %v456 = vsub.f32 %v454, %v455
    %v457 = vand.u32 %v456, 4294901760
    %458 = vmatpush1.msra.mxu0 %v457
    %459 = vmatprep.subr.mxu0 0.0
    %v460 = vand.u32 %v58, 4294901760
    %v461 = vsub.f32 %v58, %v460
    %v462 = vand.u32 %v461, 4294901760
    %v463 = vsub.f32 %v461, %v462
    %v464 = vand.u32 %v463, 4294901760
    %465 = vmatpush1.msra.mxu0 %v464
    %v466 = vand.u32 %v22, 4294901760
    %467 = vmatprep.mubr.f32.mxu0 %v466
    %v468 = vand.u32 %v21, 4294901760
    %469 = vmatmul.mubr.f32.gmra.mrb[0].mxu0 %v468
    %v470 = vpop.f32.mrb[0].mxu0
    %v471 = vadd.f32 %v239, %v470
    %v472 = vpop.f32.mrb[0].mxu0
    %473 = vdwg.mxu0
    %474 = vmatprep.subr.mxu0 0.0
    %v475 = vand.u32 %v27, 4294901760
    %v476 = vsub.f32 %v27, %v475
    %477 = vmatpush1.msra.mxu0 %v476
    %478 = vmatprep.subr.mxu0 0.0
    %v479 = vand.u32 %v28, 4294901760
    %v480 = vsub.f32 %v28, %v479
    %481 = vmatpush1.msra.mxu0 %v480
    %482 = vmatprep.subr.mxu0 0.0
    %v483 = vand.u32 %v29, 4294901760
    %v484 = vsub.f32 %v29, %v483
    %485 = vmatpush1.msra.mxu0 %v484
    %486 = vmatprep.subr.mxu0 0.0
    %v487 = vand.u32 %v30, 4294901760
    %v488 = vsub.f32 %v30, %v487
    %489 = vmatpush1.msra.mxu0 %v488
    %490 = vmatprep.subr.mxu0 0.0
    %v491 = vand.u32 %v31, 4294901760
    %v492 = vsub.f32 %v31, %v491
    %493 = vmatpush1.msra.mxu0 %v492
    %494 = vmatprep.subr.mxu0 0.0
    %v495 = vand.u32 %v32, 4294901760
    %v496 = vsub.f32 %v32, %v495
    %497 = vmatpush1.msra.mxu0 %v496
    %498 = vmatprep.subr.mxu0 0.0
    %v499 = vand.u32 %v33, 4294901760
    %v500 = vsub.f32 %v33, %v499
    %501 = vmatpush1.msra.mxu0 %v500
    %502 = vmatprep.subr.mxu0 0.0
    %v503 = vand.u32 %v34, 4294901760
    %v504 = vsub.f32 %v34, %v503
    %505 = vmatpush1.msra.mxu0 %v504
    %506 = vmatprep.subr.mxu0 0.0
    %v507 = vand.u32 %v35, 4294901760
    %v508 = vsub.f32 %v35, %v507
    %509 = vmatpush1.msra.mxu0 %v508
    %510 = vmatprep.subr.mxu0 0.0
    %v511 = vand.u32 %v36, 4294901760
    %v512 = vsub.f32 %v36, %v511
    %513 = vmatpush1.msra.mxu0 %v512
    %514 = vmatprep.subr.mxu0 0.0
    %v515 = vand.u32 %v37, 4294901760
    %v516 = vsub.f32 %v37, %v515
    %517 = vmatpush1.msra.mxu0 %v516
    %518 = vmatprep.subr.mxu0 0.0
    %v519 = vand.u32 %v38, 4294901760
    %v520 = vsub.f32 %v38, %v519
    %521 = vmatpush1.msra.mxu0 %v520
    %522 = vmatprep.subr.mxu0 0.0
    %v523 = vand.u32 %v39, 4294901760
    %v524 = vsub.f32 %v39, %v523
    %525 = vmatpush1.msra.mxu0 %v524
    %526 = vmatprep.subr.mxu0 0.0
    %v527 = vand.u32 %v40, 4294901760
    %v528 = vsub.f32 %v40, %v527
    %529 = vmatpush1.msra.mxu0 %v528
    %530 = vmatprep.subr.mxu0 0.0
    %v531 = vand.u32 %v41, 4294901760
    %v532 = vsub.f32 %v41, %v531
    %533 = vmatpush1.msra.mxu0 %v532
    %534 = vmatprep.subr.mxu0 0.0
    %v535 = vand.u32 %v42, 4294901760
    %v536 = vsub.f32 %v42, %v535
    %537 = vmatpush1.msra.mxu0 %v536
    %538 = vmatprep.subr.mxu0 0.0
    %v539 = vand.u32 %v43, 4294901760
    %v540 = vsub.f32 %v43, %v539
    %541 = vmatpush1.msra.mxu0 %v540
    %542 = vmatprep.subr.mxu0 0.0
    %v543 = vand.u32 %v44, 4294901760
    %v544 = vsub.f32 %v44, %v543
    %545 = vmatpush1.msra.mxu0 %v544
    %546 = vmatprep.subr.mxu0 0.0
    %v547 = vand.u32 %v45, 4294901760
    %v548 = vsub.f32 %v45, %v547
    %549 = vmatpush1.msra.mxu0 %v548
    %550 = vmatprep.subr.mxu0 0.0
    %v551 = vand.u32 %v46, 4294901760
    %v552 = vsub.f32 %v46, %v551
    %553 = vmatpush1.msra.mxu0 %v552
    %554 = vmatprep.subr.mxu0 0.0
    %v555 = vand.u32 %v47, 4294901760
    %v556 = vsub.f32 %v47, %v555
    %557 = vmatpush1.msra.mxu0 %v556
    %558 = vmatprep.subr.mxu0 0.0
    %v559 = vand.u32 %v48, 4294901760
    %v560 = vsub.f32 %v48, %v559
    %561 = vmatpush1.msra.mxu0 %v560
    %562 = vmatprep.subr.mxu0 0.0
    %v563 = vand.u32 %v49, 4294901760
    %v564 = vsub.f32 %v49, %v563
    %565 = vmatpush1.msra.mxu0 %v564
    %566 = vmatprep.subr.mxu0 0.0
    %v567 = vand.u32 %v50, 4294901760
    %v568 = vsub.f32 %v50, %v567
    %569 = vmatpush1.msra.mxu0 %v568
    %570 = vmatprep.subr.mxu0 0.0
    %v571 = vand.u32 %v51, 4294901760
    %v572 = vsub.f32 %v51, %v571
    %573 = vmatpush1.msra.mxu0 %v572
    %574 = vmatprep.subr.mxu0 0.0
    %v575 = vand.u32 %v52, 4294901760
    %v576 = vsub.f32 %v52, %v575
    %577 = vmatpush1.msra.mxu0 %v576
    %578 = vmatprep.subr.mxu0 0.0
    %v579 = vand.u32 %v53, 4294901760
    %v580 = vsub.f32 %v53, %v579
    %581 = vmatpush1.msra.mxu0 %v580
    %582 = vmatprep.subr.mxu0 0.0
    %v583 = vand.u32 %v54, 4294901760
    %v584 = vsub.f32 %v54, %v583
    %585 = vmatpush1.msra.mxu0 %v584
    %586 = vmatprep.subr.mxu0 0.0
    %v587 = vand.u32 %v55, 4294901760
    %v588 = vsub.f32 %v55, %v587
    %589 = vmatpush1.msra.mxu0 %v588
    %590 = vmatprep.subr.mxu0 0.0
    %v591 = vand.u32 %v56, 4294901760
    %v592 = vsub.f32 %v56, %v591
    %593 = vmatpush1.msra.mxu0 %v592
    %594 = vmatprep.subr.mxu0 0.0
    %v595 = vand.u32 %v57, 4294901760
    %v596 = vsub.f32 %v57, %v595
    %597 = vmatpush1.msra.mxu0 %v596
    %598 = vmatprep.subr.mxu0 0.0
    %v599 = vand.u32 %v58, 4294901760
    %v600 = vsub.f32 %v58, %v599
    %601 = vmatpush1.msra.mxu0 %v600
    %v602 = vand.u32 %v22, 4294901760
    %v603 = vsub.f32 %v22, %v602
    %604 = vmatprep.mubr.f32.mxu0 %v603
    %v605 = vand.u32 %v21, 4294901760
    %v606 = vsub.f32 %v21, %v605
    %607 = vmatmul.mubr.f32.gmra.mrb[0].mxu0 %v606
    %v608 = vpop.f32.mrb[0].mxu0
    %v609 = vadd.f32 %v471, %v608
    %v610 = vpop.f32.mrb[0].mxu0
    %611 = vdwg.mxu0
    %612 = vmatprep.subr.mxu0 0.0
    %v613 = vand.u32 %v27, 4294901760
    %614 = vmatpush1.msra.mxu0 %v613
    %615 = vmatprep.subr.mxu0 0.0
    %v616 = vand.u32 %v28, 4294901760
    %617 = vmatpush1.msra.mxu0 %v616
    %618 = vmatprep.subr.mxu0 0.0
    %v619 = vand.u32 %v29, 4294901760
    %620 = vmatpush1.msra.mxu0 %v619
    %621 = vmatprep.subr.mxu0 0.0
    %v622 = vand.u32 %v30, 4294901760
    %623 = vmatpush1.msra.mxu0 %v622
    %624 = vmatprep.subr.mxu0 0.0
    %v625 = vand.u32 %v31, 4294901760
    %626 = vmatpush1.msra.mxu0 %v625
    %627 = vmatprep.subr.mxu0 0.0
    %v628 = vand.u32 %v32, 4294901760
    %629 = vmatpush1.msra.mxu0 %v628
    %630 = vmatprep.subr.mxu0 0.0
    %v631 = vand.u32 %v33, 4294901760
    %632 = vmatpush1.msra.mxu0 %v631
    %633 = vmatprep.subr.mxu0 0.0
    %v634 = vand.u32 %v34, 4294901760
    %635 = vmatpush1.msra.mxu0 %v634
    %636 = vmatprep.subr.mxu0 0.0
    %v637 = vand.u32 %v35, 4294901760
    %638 = vmatpush1.msra.mxu0 %v637
    %639 = vmatprep.subr.mxu0 0.0
    %v640 = vand.u32 %v36, 4294901760
    %641 = vmatpush1.msra.mxu0 %v640
    %642 = vmatprep.subr.mxu0 0.0
    %v643 = vand.u32 %v37, 4294901760
    %644 = vmatpush1.msra.mxu0 %v643
    %645 = vmatprep.subr.mxu0 0.0
    %v646 = vand.u32 %v38, 4294901760
    %647 = vmatpush1.msra.mxu0 %v646
    %648 = vmatprep.subr.mxu0 0.0
    %v649 = vand.u32 %v39, 4294901760
    %650 = vmatpush1.msra.mxu0 %v649
    %651 = vmatprep.subr.mxu0 0.0
    %v652 = vand.u32 %v40, 4294901760
    %653 = vmatpush1.msra.mxu0 %v652
    %654 = vmatprep.subr.mxu0 0.0
    %v655 = vand.u32 %v41, 4294901760
    %656 = vmatpush1.msra.mxu0 %v655
    %657 = vmatprep.subr.mxu0 0.0
    %v658 = vand.u32 %v42, 4294901760
    %659 = vmatpush1.msra.mxu0 %v658
    %660 = vmatprep.subr.mxu0 0.0
    %v661 = vand.u32 %v43, 4294901760
    %662 = vmatpush1.msra.mxu0 %v661
    %663 = vmatprep.subr.mxu0 0.0
    %v664 = vand.u32 %v44, 4294901760
    %665 = vmatpush1.msra.mxu0 %v664
    %666 = vmatprep.subr.mxu0 0.0
    %v667 = vand.u32 %v45, 4294901760
    %668 = vmatpush1.msra.mxu0 %v667
    %669 = vmatprep.subr.mxu0 0.0
    %v670 = vand.u32 %v46, 4294901760
    %671 = vmatpush1.msra.mxu0 %v670
    %672 = vmatprep.subr.mxu0 0.0
    %v673 = vand.u32 %v47, 4294901760
    %674 = vmatpush1.msra.mxu0 %v673
    %675 = vmatprep.subr.mxu0 0.0
    %v676 = vand.u32 %v48, 4294901760
    %677 = vmatpush1.msra.mxu0 %v676
    %678 = vmatprep.subr.mxu0 0.0
    %v679 = vand.u32 %v49, 4294901760
    %680 = vmatpush1.msra.mxu0 %v679
    %681 = vmatprep.subr.mxu0 0.0
    %v682 = vand.u32 %v50, 4294901760
    %683 = vmatpush1.msra.mxu0 %v682
    %684 = vmatprep.subr.mxu0 0.0
    %v685 = vand.u32 %v51, 4294901760
    %686 = vmatpush1.msra.mxu0 %v685
    %687 = vmatprep.subr.mxu0 0.0
    %v688 = vand.u32 %v52, 4294901760
    %689 = vmatpush1.msra.mxu0 %v688
    %690 = vmatprep.subr.mxu0 0.0
    %v691 = vand.u32 %v53, 4294901760
    %692 = vmatpush1.msra.mxu0 %v691
    %693 = vmatprep.subr.mxu0 0.0
    %v694 = vand.u32 %v54, 4294901760
    %695 = vmatpush1.msra.mxu0 %v694
    %696 = vmatprep.subr.mxu0 0.0
    %v697 = vand.u32 %v55, 4294901760
    %698 = vmatpush1.msra.mxu0 %v697
    %699 = vmatprep.subr.mxu0 0.0
    %v700 = vand.u32 %v56, 4294901760
    %701 = vmatpush1.msra.mxu0 %v700
    %702 = vmatprep.subr.mxu0 0.0
    %v703 = vand.u32 %v57, 4294901760
    %704 = vmatpush1.msra.mxu0 %v703
    %705 = vmatprep.subr.mxu0 0.0
    %v706 = vand.u32 %v58, 4294901760
    %707 = vmatpush1.msra.mxu0 %v706
    %v708 = vand.u32 %v22, 4294901760
    %v709 = vsub.f32 %v22, %v708
    %v710 = vand.u32 %v709, 4294901760
    %711 = vmatprep.mubr.f32.mxu0 %v710
    %v712 = vand.u32 %v21, 4294901760
    %v713 = vsub.f32 %v21, %v712
    %v714 = vand.u32 %v713, 4294901760
    %715 = vmatmul.mubr.f32.gmra.mrb[0].mxu0 %v714
    %v716 = vpop.f32.mrb[0].mxu0
    %v717 = vadd.f32 %v609, %v716
    %v718 = vpop.f32.mrb[0].mxu0
    %719 = vdwg.mxu0
    %720 = vmatprep.subr.mxu0 0.0
    %v721 = vand.u32 %v27, 4294901760
    %v722 = vsub.f32 %v27, %v721
    %v723 = vand.u32 %v722, 4294901760
    %724 = vmatpush1.msra.mxu0 %v723
    %725 = vmatprep.subr.mxu0 0.0
    %v726 = vand.u32 %v28, 4294901760
    %v727 = vsub.f32 %v28, %v726
    %v728 = vand.u32 %v727, 4294901760
    %729 = vmatpush1.msra.mxu0 %v728
    %730 = vmatprep.subr.mxu0 0.0
    %v731 = vand.u32 %v29, 4294901760
    %v732 = vsub.f32 %v29, %v731
    %v733 = vand.u32 %v732, 4294901760
    %734 = vmatpush1.msra.mxu0 %v733
    %735 = vmatprep.subr.mxu0 0.0
    %v736 = vand.u32 %v30, 4294901760
    %v737 = vsub.f32 %v30, %v736
    %v738 = vand.u32 %v737, 4294901760
    %739 = vmatpush1.msra.mxu0 %v738
    %740 = vmatprep.subr.mxu0 0.0
    %v741 = vand.u32 %v31, 4294901760
    %v742 = vsub.f32 %v31, %v741
    %v743 = vand.u32 %v742, 4294901760
    %744 = vmatpush1.msra.mxu0 %v743
    %745 = vmatprep.subr.mxu0 0.0
    %v746 = vand.u32 %v32, 4294901760
    %v747 = vsub.f32 %v32, %v746
    %v748 = vand.u32 %v747, 4294901760
    %749 = vmatpush1.msra.mxu0 %v748
    %750 = vmatprep.subr.mxu0 0.0
    %v751 = vand.u32 %v33, 4294901760
    %v752 = vsub.f32 %v33, %v751
    %v753 = vand.u32 %v752, 4294901760
    %754 = vmatpush1.msra.mxu0 %v753
    %755 = vmatprep.subr.mxu0 0.0
    %v756 = vand.u32 %v34, 4294901760
    %v757 = vsub.f32 %v34, %v756
    %v758 = vand.u32 %v757, 4294901760
    %759 = vmatpush1.msra.mxu0 %v758
    %760 = vmatprep.subr.mxu0 0.0
    %v761 = vand.u32 %v35, 4294901760
    %v762 = vsub.f32 %v35, %v761
    %v763 = vand.u32 %v762, 4294901760
    %764 = vmatpush1.msra.mxu0 %v763
    %765 = vmatprep.subr.mxu0 0.0
    %v766 = vand.u32 %v36, 4294901760
    %v767 = vsub.f32 %v36, %v766
    %v768 = vand.u32 %v767, 4294901760
    %769 = vmatpush1.msra.mxu0 %v768
    %770 = vmatprep.subr.mxu0 0.0
    %v771 = vand.u32 %v37, 4294901760
    %v772 = vsub.f32 %v37, %v771
    %v773 = vand.u32 %v772, 4294901760
    %774 = vmatpush1.msra.mxu0 %v773
    %775 = vmatprep.subr.mxu0 0.0
    %v776 = vand.u32 %v38, 4294901760
    %v777 = vsub.f32 %v38, %v776
    %v778 = vand.u32 %v777, 4294901760
    %779 = vmatpush1.msra.mxu0 %v778
    %780 = vmatprep.subr.mxu0 0.0
    %v781 = vand.u32 %v39, 4294901760
    %v782 = vsub.f32 %v39, %v781
    %v783 = vand.u32 %v782, 4294901760
    %784 = vmatpush1.msra.mxu0 %v783
    %785 = vmatprep.subr.mxu0 0.0
    %v786 = vand.u32 %v40, 4294901760
    %v787 = vsub.f32 %v40, %v786
    %v788 = vand.u32 %v787, 4294901760
    %789 = vmatpush1.msra.mxu0 %v788
    %790 = vmatprep.subr.mxu0 0.0
    %v791 = vand.u32 %v41, 4294901760
    %v792 = vsub.f32 %v41, %v791
    %v793 = vand.u32 %v792, 4294901760
    %794 = vmatpush1.msra.mxu0 %v793
    %795 = vmatprep.subr.mxu0 0.0
    %v796 = vand.u32 %v42, 4294901760
    %v797 = vsub.f32 %v42, %v796
    %v798 = vand.u32 %v797, 4294901760
    %799 = vmatpush1.msra.mxu0 %v798
    %800 = vmatprep.subr.mxu0 0.0
    %v801 = vand.u32 %v43, 4294901760
    %v802 = vsub.f32 %v43, %v801
    %v803 = vand.u32 %v802, 4294901760
    %804 = vmatpush1.msra.mxu0 %v803
    %805 = vmatprep.subr.mxu0 0.0
    %v806 = vand.u32 %v44, 4294901760
    %v807 = vsub.f32 %v44, %v806
    %v808 = vand.u32 %v807, 4294901760
    %809 = vmatpush1.msra.mxu0 %v808
    %810 = vmatprep.subr.mxu0 0.0
    %v811 = vand.u32 %v45, 4294901760
    %v812 = vsub.f32 %v45, %v811
    %v813 = vand.u32 %v812, 4294901760
    %814 = vmatpush1.msra.mxu0 %v813
    %815 = vmatprep.subr.mxu0 0.0
    %v816 = vand.u32 %v46, 4294901760
    %v817 = vsub.f32 %v46, %v816
    %v818 = vand.u32 %v817, 4294901760
    %819 = vmatpush1.msra.mxu0 %v818
    %820 = vmatprep.subr.mxu0 0.0
    %v821 = vand.u32 %v47, 4294901760
    %v822 = vsub.f32 %v47, %v821
    %v823 = vand.u32 %v822, 4294901760
    %824 = vmatpush1.msra.mxu0 %v823
    %825 = vmatprep.subr.mxu0 0.0
    %v826 = vand.u32 %v48, 4294901760
    %v827 = vsub.f32 %v48, %v826
    %v828 = vand.u32 %v827, 4294901760
    %829 = vmatpush1.msra.mxu0 %v828
    %830 = vmatprep.subr.mxu0 0.0
    %v831 = vand.u32 %v49, 4294901760
    %v832 = vsub.f32 %v49, %v831
    %v833 = vand.u32 %v832, 4294901760
    %834 = vmatpush1.msra.mxu0 %v833
    %835 = vmatprep.subr.mxu0 0.0
    %v836 = vand.u32 %v50, 4294901760
    %v837 = vsub.f32 %v50, %v836
    %v838 = vand.u32 %v837, 4294901760
    %839 = vmatpush1.msra.mxu0 %v838
    %840 = vmatprep.subr.mxu0 0.0
    %v841 = vand.u32 %v51, 4294901760
    %v842 = vsub.f32 %v51, %v841
    %v843 = vand.u32 %v842, 4294901760
    %844 = vmatpush1.msra.mxu0 %v843
    %845 = vmatprep.subr.mxu0 0.0
    %v846 = vand.u32 %v52, 4294901760
    %v847 = vsub.f32 %v52, %v846
    %v848 = vand.u32 %v847, 4294901760
    %849 = vmatpush1.msra.mxu0 %v848
    %850 = vmatprep.subr.mxu0 0.0
    %v851 = vand.u32 %v53, 4294901760
    %v852 = vsub.f32 %v53, %v851
    %v853 = vand.u32 %v852, 4294901760
    %854 = vmatpush1.msra.mxu0 %v853
    %855 = vmatprep.subr.mxu0 0.0
    %v856 = vand.u32 %v54, 4294901760
    %v857 = vsub.f32 %v54, %v856
    %v858 = vand.u32 %v857, 4294901760
    %859 = vmatpush1.msra.mxu0 %v858
    %860 = vmatprep.subr.mxu0 0.0
    %v861 = vand.u32 %v55, 4294901760
    %v862 = vsub.f32 %v55, %v861
    %v863 = vand.u32 %v862, 4294901760
    %864 = vmatpush1.msra.mxu0 %v863
    %865 = vmatprep.subr.mxu0 0.0
    %v866 = vand.u32 %v56, 4294901760
    %v867 = vsub.f32 %v56, %v866
    %v868 = vand.u32 %v867, 4294901760
    %869 = vmatpush1.msra.mxu0 %v868
    %870 = vmatprep.subr.mxu0 0.0
    %v871 = vand.u32 %v57, 4294901760
    %v872 = vsub.f32 %v57, %v871
    %v873 = vand.u32 %v872, 4294901760
    %874 = vmatpush1.msra.mxu0 %v873
    %875 = vmatprep.subr.mxu0 0.0
    %v876 = vand.u32 %v58, 4294901760
    %v877 = vsub.f32 %v58, %v876
    %v878 = vand.u32 %v877, 4294901760
    %879 = vmatpush1.msra.mxu0 %v878
    %v880 = vand.u32 %v22, 4294901760
    %881 = vmatprep.mubr.f32.mxu0 %v880
    %v882 = vand.u32 %v21, 4294901760
    %883 = vmatmul.mubr.f32.gmra.mrb[0].mxu0 %v882
    %v884 = vpop.f32.mrb[0].mxu0
    %v885 = vadd.f32 %v717, %v884
    %v886 = vpop.f32.mrb[0].mxu0
    %887 = vdwg.mxu0
    %888 = vmatprep.subr.mxu0 0.0
    %v889 = vand.u32 %v27, 4294901760
    %890 = vmatpush1.msra.mxu0 %v889
    %891 = vmatprep.subr.mxu0 0.0
    %v892 = vand.u32 %v28, 4294901760
    %893 = vmatpush1.msra.mxu0 %v892
    %894 = vmatprep.subr.mxu0 0.0
    %v895 = vand.u32 %v29, 4294901760
    %896 = vmatpush1.msra.mxu0 %v895
    %897 = vmatprep.subr.mxu0 0.0
    %v898 = vand.u32 %v30, 4294901760
    %899 = vmatpush1.msra.mxu0 %v898
    %900 = vmatprep.subr.mxu0 0.0
    %v901 = vand.u32 %v31, 4294901760
    %902 = vmatpush1.msra.mxu0 %v901
    %903 = vmatprep.subr.mxu0 0.0
    %v904 = vand.u32 %v32, 4294901760
    %905 = vmatpush1.msra.mxu0 %v904
    %906 = vmatprep.subr.mxu0 0.0
    %v907 = vand.u32 %v33, 4294901760
    %908 = vmatpush1.msra.mxu0 %v907
    %909 = vmatprep.subr.mxu0 0.0
    %v910 = vand.u32 %v34, 4294901760
    %911 = vmatpush1.msra.mxu0 %v910
    %912 = vmatprep.subr.mxu0 0.0
    %v913 = vand.u32 %v35, 4294901760
    %914 = vmatpush1.msra.mxu0 %v913
    %915 = vmatprep.subr.mxu0 0.0
    %v916 = vand.u32 %v36, 4294901760
    %917 = vmatpush1.msra.mxu0 %v916
    %918 = vmatprep.subr.mxu0 0.0
    %v919 = vand.u32 %v37, 4294901760
    %920 = vmatpush1.msra.mxu0 %v919
    %921 = vmatprep.subr.mxu0 0.0
    %v922 = vand.u32 %v38, 4294901760
    %923 = vmatpush1.msra.mxu0 %v922
    %924 = vmatprep.subr.mxu0 0.0
    %v925 = vand.u32 %v39, 4294901760
    %926 = vmatpush1.msra.mxu0 %v925
    %927 = vmatprep.subr.mxu0 0.0
    %v928 = vand.u32 %v40, 4294901760
    %929 = vmatpush1.msra.mxu0 %v928
    %930 = vmatprep.subr.mxu0 0.0
    %v931 = vand.u32 %v41, 4294901760
    %932 = vmatpush1.msra.mxu0 %v931
    %933 = vmatprep.subr.mxu0 0.0
    %v934 = vand.u32 %v42, 4294901760
    %935 = vmatpush1.msra.mxu0 %v934
    %936 = vmatprep.subr.mxu0 0.0
    %v937 = vand.u32 %v43, 4294901760
    %938 = vmatpush1.msra.mxu0 %v937
    %939 = vmatprep.subr.mxu0 0.0
    %v940 = vand.u32 %v44, 4294901760
    %941 = vmatpush1.msra.mxu0 %v940
    %942 = vmatprep.subr.mxu0 0.0
    %v943 = vand.u32 %v45, 4294901760
    %944 = vmatpush1.msra.mxu0 %v943
    %945 = vmatprep.subr.mxu0 0.0
    %v946 = vand.u32 %v46, 4294901760
    %947 = vmatpush1.msra.mxu0 %v946
    %948 = vmatprep.subr.mxu0 0.0
    %v949 = vand.u32 %v47, 4294901760
    %950 = vmatpush1.msra.mxu0 %v949
    %951 = vmatprep.subr.mxu0 0.0
    %v952 = vand.u32 %v48, 4294901760
    %953 = vmatpush1.msra.mxu0 %v952
    %954 = vmatprep.subr.mxu0 0.0
    %v955 = vand.u32 %v49, 4294901760
    %956 = vmatpush1.msra.mxu0 %v955
    %957 = vmatprep.subr.mxu0 0.0
    %v958 = vand.u32 %v50, 4294901760
    %959 = vmatpush1.msra.mxu0 %v958
    %960 = vmatprep.subr.mxu0 0.0
    %v961 = vand.u32 %v51, 4294901760
    %962 = vmatpush1.msra.mxu0 %v961
    %963 = vmatprep.subr.mxu0 0.0
    %v964 = vand.u32 %v52, 4294901760
    %965 = vmatpush1.msra.mxu0 %v964
    %966 = vmatprep.subr.mxu0 0.0
    %v967 = vand.u32 %v53, 4294901760
    %968 = vmatpush1.msra.mxu0 %v967
    %969 = vmatprep.subr.mxu0 0.0
    %v970 = vand.u32 %v54, 4294901760
    %971 = vmatpush1.msra.mxu0 %v970
    %972 = vmatprep.subr.mxu0 0.0
    %v973 = vand.u32 %v55, 4294901760
    %974 = vmatpush1.msra.mxu0 %v973
    %975 = vmatprep.subr.mxu0 0.0
    %v976 = vand.u32 %v56, 4294901760
    %977 = vmatpush1.msra.mxu0 %v976
    %978 = vmatprep.subr.mxu0 0.0
    %v979 = vand.u32 %v57, 4294901760
    %980 = vmatpush1.msra.mxu0 %v979
    %981 = vmatprep.subr.mxu0 0.0
    %v982 = vand.u32 %v58, 4294901760
    %983 = vmatpush1.msra.mxu0 %v982
    %v984 = vand.u32 %v22, 4294901760
    %985 = vmatprep.mubr.f32.mxu0 %v984
    %v986 = vand.u32 %v21, 4294901760
    %987 = vmatmul.mubr.f32.gmra.mrb[0].mxu0 %v986
    %v988 = vpop.f32.mrb[0].mxu0
    %v989 = vadd.f32 %v885, %v988
    %v990 = vpop.f32.mrb[0].mxu0
    %991 = vdwg.mxu0
    %992 = vmatprep.subr.mxu0 0.0
    %v993 = vand.u32 %v59, 4294901760
    %994 = vmatpush1.msra.mxu0 %v993
    %995 = vmatprep.subr.mxu0 0.0
    %v996 = vand.u32 %v60, 4294901760
    %997 = vmatpush1.msra.mxu0 %v996
    %998 = vmatprep.subr.mxu0 0.0
    %v999 = vand.u32 %v61, 4294901760
    %1000 = vmatpush1.msra.mxu0 %v999
    %1001 = vmatprep.subr.mxu0 0.0
    %v1002 = vand.u32 %v62, 4294901760
    %1003 = vmatpush1.msra.mxu0 %v1002
    %1004 = vmatprep.subr.mxu0 0.0
    %v1005 = vand.u32 %v63, 4294901760
    %1006 = vmatpush1.msra.mxu0 %v1005
    %1007 = vmatprep.subr.mxu0 0.0
    %v1008 = vand.u32 %v64, 4294901760
    %1009 = vmatpush1.msra.mxu0 %v1008
    %1010 = vmatprep.subr.mxu0 0.0
    %v1011 = vand.u32 %v65, 4294901760
    %1012 = vmatpush1.msra.mxu0 %v1011
    %1013 = vmatprep.subr.mxu0 0.0
    %v1014 = vand.u32 %v66, 4294901760
    %1015 = vmatpush1.msra.mxu0 %v1014
    %1016 = vmatprep.subr.mxu0 0.0
    %v1017 = vand.u32 %v67, 4294901760
    %1018 = vmatpush1.msra.mxu0 %v1017
    %1019 = vmatprep.subr.mxu0 0.0
    %v1020 = vand.u32 %v68, 4294901760
    %1021 = vmatpush1.msra.mxu0 %v1020
    %1022 = vmatprep.subr.mxu0 0.0
    %v1023 = vand.u32 %v69, 4294901760
    %1024 = vmatpush1.msra.mxu0 %v1023
    %1025 = vmatprep.subr.mxu0 0.0
    %v1026 = vand.u32 %v70, 4294901760
    %1027 = vmatpush1.msra.mxu0 %v1026
    %1028 = vmatprep.subr.mxu0 0.0
    %v1029 = vand.u32 %v71, 4294901760
    %1030 = vmatpush1.msra.mxu0 %v1029
    %1031 = vmatprep.subr.mxu0 0.0
    %v1032 = vand.u32 %v72, 4294901760
    %1033 = vmatpush1.msra.mxu0 %v1032
    %1034 = vmatprep.subr.mxu0 0.0
    %v1035 = vand.u32 %v73, 4294901760
    %1036 = vmatpush1.msra.mxu0 %v1035
    %1037 = vmatprep.subr.mxu0 0.0
    %v1038 = vand.u32 %v74, 4294901760
    %1039 = vmatpush1.msra.mxu0 %v1038
    %1040 = vmatprep.subr.mxu0 0.0
    %v1041 = vand.u32 %v75, 4294901760
    %1042 = vmatpush1.msra.mxu0 %v1041
    %1043 = vmatprep.subr.mxu0 0.0
    %v1044 = vand.u32 %v76, 4294901760
    %1045 = vmatpush1.msra.mxu0 %v1044
    %1046 = vmatprep.subr.mxu0 0.0
    %v1047 = vand.u32 %v77, 4294901760
    %1048 = vmatpush1.msra.mxu0 %v1047
    %1049 = vmatprep.subr.mxu0 0.0
    %v1050 = vand.u32 %v78, 4294901760
    %1051 = vmatpush1.msra.mxu0 %v1050
    %1052 = vmatprep.subr.mxu0 0.0
    %v1053 = vand.u32 %v79, 4294901760
    %1054 = vmatpush1.msra.mxu0 %v1053
    %1055 = vmatprep.subr.mxu0 0.0
    %v1056 = vand.u32 %v80, 4294901760
    %1057 = vmatpush1.msra.mxu0 %v1056
    %1058 = vmatprep.subr.mxu0 0.0
    %v1059 = vand.u32 %v81, 4294901760
    %1060 = vmatpush1.msra.mxu0 %v1059
    %1061 = vmatprep.subr.mxu0 0.0
    %v1062 = vand.u32 %v82, 4294901760
    %1063 = vmatpush1.msra.mxu0 %v1062
    %1064 = vmatprep.subr.mxu0 0.0
    %v1065 = vand.u32 %v83, 4294901760
    %1066 = vmatpush1.msra.mxu0 %v1065
    %1067 = vmatprep.subr.mxu0 0.0
    %v1068 = vand.u32 %v84, 4294901760
    %1069 = vmatpush1.msra.mxu0 %v1068
    %1070 = vmatprep.subr.mxu0 0.0
    %v1071 = vand.u32 %v85, 4294901760
    %1072 = vmatpush1.msra.mxu0 %v1071
    %1073 = vmatprep.subr.mxu0 0.0
    %v1074 = vand.u32 %v86, 4294901760
    %1075 = vmatpush1.msra.mxu0 %v1074
    %1076 = vmatprep.subr.mxu0 0.0
    %v1077 = vand.u32 %v87, 4294901760
    %1078 = vmatpush1.msra.mxu0 %v1077
    %1079 = vmatprep.subr.mxu0 0.0
    %v1080 = vand.u32 %v88, 4294901760
    %1081 = vmatpush1.msra.mxu0 %v1080
    %1082 = vmatprep.subr.mxu0 0.0
    %v1083 = vand.u32 %v89, 4294901760
    %1084 = vmatpush1.msra.mxu0 %v1083
    %1085 = vmatprep.subr.mxu0 0.0
    %v1086 = vand.u32 %v90, 4294901760
    %1087 = vmatpush1.msra.mxu0 %v1086
    %v1088 = vand.u32 %v24, 4294901760
    %v1089 = vsub.f32 %v24, %v1088
    %v1090 = vand.u32 %v1089, 4294901760
    %v1091 = vsub.f32 %v1089, %v1090
    %v1092 = vand.u32 %v1091, 4294901760
    %1093 = vmatprep.mubr.f32.mxu0 %v1092
    %v1094 = vand.u32 %v23, 4294901760
    %v1095 = vsub.f32 %v23, %v1094
    %v1096 = vand.u32 %v1095, 4294901760
    %v1097 = vsub.f32 %v1095, %v1096
    %v1098 = vand.u32 %v1097, 4294901760
    %1099 = vmatmul.mubr.f32.gmra.mrb[0].mxu0 %v1098
    %v1100 = vpop.f32.mrb[0].mxu0
    %v1101 = vadd.f32 %v989, %v1100
    %v1102 = vpop.f32.mrb[0].mxu0
    %1103 = vdwg.mxu0
    %1104 = vmatprep.subr.mxu0 0.0
    %v1105 = vand.u32 %v59, 4294901760
    %v1106 = vsub.f32 %v59, %v1105
    %v1107 = vand.u32 %v1106, 4294901760
    %v1108 = vsub.f32 %v1106, %v1107
    %v1109 = vand.u32 %v1108, 4294901760
    %1110 = vmatpush1.msra.mxu0 %v1109
    %1111 = vmatprep.subr.mxu0 0.0
    %v1112 = vand.u32 %v60, 4294901760
    %v1113 = vsub.f32 %v60, %v1112
    %v1114 = vand.u32 %v1113, 4294901760
    %v1115 = vsub.f32 %v1113, %v1114
    %v1116 = vand.u32 %v1115, 4294901760
    %1117 = vmatpush1.msra.mxu0 %v1116
    %1118 = vmatprep.subr.mxu0 0.0
    %v1119 = vand.u32 %v61, 4294901760
    %v1120 = vsub.f32 %v61, %v1119
    %v1121 = vand.u32 %v1120, 4294901760
    %v1122 = vsub.f32 %v1120, %v1121
    %v1123 = vand.u32 %v1122, 4294901760
    %1124 = vmatpush1.msra.mxu0 %v1123
    %1125 = vmatprep.subr.mxu0 0.0
    %v1126 = vand.u32 %v62, 4294901760
    %v1127 = vsub.f32 %v62, %v1126
    %v1128 = vand.u32 %v1127, 4294901760
    %v1129 = vsub.f32 %v1127, %v1128
    %v1130 = vand.u32 %v1129, 4294901760
    %1131 = vmatpush1.msra.mxu0 %v1130
    %1132 = vmatprep.subr.mxu0 0.0
    %v1133 = vand.u32 %v63, 4294901760
    %v1134 = vsub.f32 %v63, %v1133
    %v1135 = vand.u32 %v1134, 4294901760
    %v1136 = vsub.f32 %v1134, %v1135
    %v1137 = vand.u32 %v1136, 4294901760
    %1138 = vmatpush1.msra.mxu0 %v1137
    %1139 = vmatprep.subr.mxu0 0.0
    %v1140 = vand.u32 %v64, 4294901760
    %v1141 = vsub.f32 %v64, %v1140
    %v1142 = vand.u32 %v1141, 4294901760
    %v1143 = vsub.f32 %v1141, %v1142
    %v1144 = vand.u32 %v1143, 4294901760
    %1145 = vmatpush1.msra.mxu0 %v1144
    %1146 = vmatprep.subr.mxu0 0.0
    %v1147 = vand.u32 %v65, 4294901760
    %v1148 = vsub.f32 %v65, %v1147
    %v1149 = vand.u32 %v1148, 4294901760
    %v1150 = vsub.f32 %v1148, %v1149
    %v1151 = vand.u32 %v1150, 4294901760
    %1152 = vmatpush1.msra.mxu0 %v1151
    %1153 = vmatprep.subr.mxu0 0.0
    %v1154 = vand.u32 %v66, 4294901760
    %v1155 = vsub.f32 %v66, %v1154
    %v1156 = vand.u32 %v1155, 4294901760
    %v1157 = vsub.f32 %v1155, %v1156
    %v1158 = vand.u32 %v1157, 4294901760
    %1159 = vmatpush1.msra.mxu0 %v1158
    %1160 = vmatprep.subr.mxu0 0.0
    %v1161 = vand.u32 %v67, 4294901760
    %v1162 = vsub.f32 %v67, %v1161
    %v1163 = vand.u32 %v1162, 4294901760
    %v1164 = vsub.f32 %v1162, %v1163
    %v1165 = vand.u32 %v1164, 4294901760
    %1166 = vmatpush1.msra.mxu0 %v1165
    %1167 = vmatprep.subr.mxu0 0.0
    %v1168 = vand.u32 %v68, 4294901760
    %v1169 = vsub.f32 %v68, %v1168
    %v1170 = vand.u32 %v1169, 4294901760
    %v1171 = vsub.f32 %v1169, %v1170
    %v1172 = vand.u32 %v1171, 4294901760
    %1173 = vmatpush1.msra.mxu0 %v1172
    %1174 = vmatprep.subr.mxu0 0.0
    %v1175 = vand.u32 %v69, 4294901760
    %v1176 = vsub.f32 %v69, %v1175
    %v1177 = vand.u32 %v1176, 4294901760
    %v1178 = vsub.f32 %v1176, %v1177
    %v1179 = vand.u32 %v1178, 4294901760
    %1180 = vmatpush1.msra.mxu0 %v1179
    %1181 = vmatprep.subr.mxu0 0.0
    %v1182 = vand.u32 %v70, 4294901760
    %v1183 = vsub.f32 %v70, %v1182
    %v1184 = vand.u32 %v1183, 4294901760
    %v1185 = vsub.f32 %v1183, %v1184
    %v1186 = vand.u32 %v1185, 4294901760
    %1187 = vmatpush1.msra.mxu0 %v1186
    %1188 = vmatprep.subr.mxu0 0.0
    %v1189 = vand.u32 %v71, 4294901760
    %v1190 = vsub.f32 %v71, %v1189
    %v1191 = vand.u32 %v1190, 4294901760
    %v1192 = vsub.f32 %v1190, %v1191
    %v1193 = vand.u32 %v1192, 4294901760
    %1194 = vmatpush1.msra.mxu0 %v1193
    %1195 = vmatprep.subr.mxu0 0.0
    %v1196 = vand.u32 %v72, 4294901760
    %v1197 = vsub.f32 %v72, %v1196
    %v1198 = vand.u32 %v1197, 4294901760
    %v1199 = vsub.f32 %v1197, %v1198
    %v1200 = vand.u32 %v1199, 4294901760
    %1201 = vmatpush1.msra.mxu0 %v1200
    %1202 = vmatprep.subr.mxu0 0.0
    %v1203 = vand.u32 %v73, 4294901760
    %v1204 = vsub.f32 %v73, %v1203
    %v1205 = vand.u32 %v1204, 4294901760
    %v1206 = vsub.f32 %v1204, %v1205
    %v1207 = vand.u32 %v1206, 4294901760
    %1208 = vmatpush1.msra.mxu0 %v1207
    %1209 = vmatprep.subr.mxu0 0.0
    %v1210 = vand.u32 %v74, 4294901760
    %v1211 = vsub.f32 %v74, %v1210
    %v1212 = vand.u32 %v1211, 4294901760
    %v1213 = vsub.f32 %v1211, %v1212
    %v1214 = vand.u32 %v1213, 4294901760
    %1215 = vmatpush1.msra.mxu0 %v1214
    %1216 = vmatprep.subr.mxu0 0.0
    %v1217 = vand.u32 %v75, 4294901760
    %v1218 = vsub.f32 %v75, %v1217
    %v1219 = vand.u32 %v1218, 4294901760
    %v1220 = vsub.f32 %v1218, %v1219
    %v1221 = vand.u32 %v1220, 4294901760
    %1222 = vmatpush1.msra.mxu0 %v1221
    %1223 = vmatprep.subr.mxu0 0.0
    %v1224 = vand.u32 %v76, 4294901760
    %v1225 = vsub.f32 %v76, %v1224
    %v1226 = vand.u32 %v1225, 4294901760
    %v1227 = vsub.f32 %v1225, %v1226
    %v1228 = vand.u32 %v1227, 4294901760
    %1229 = vmatpush1.msra.mxu0 %v1228
    %1230 = vmatprep.subr.mxu0 0.0
    %v1231 = vand.u32 %v77, 4294901760
    %v1232 = vsub.f32 %v77, %v1231
    %v1233 = vand.u32 %v1232, 4294901760
    %v1234 = vsub.f32 %v1232, %v1233
    %v1235 = vand.u32 %v1234, 4294901760
    %1236 = vmatpush1.msra.mxu0 %v1235
    %1237 = vmatprep.subr.mxu0 0.0
    %v1238 = vand.u32 %v78, 4294901760
    %v1239 = vsub.f32 %v78, %v1238
    %v1240 = vand.u32 %v1239, 4294901760
    %v1241 = vsub.f32 %v1239, %v1240
    %v1242 = vand.u32 %v1241, 4294901760
    %1243 = vmatpush1.msra.mxu0 %v1242
    %1244 = vmatprep.subr.mxu0 0.0
    %v1245 = vand.u32 %v79, 4294901760
    %v1246 = vsub.f32 %v79, %v1245
    %v1247 = vand.u32 %v1246, 4294901760
    %v1248 = vsub.f32 %v1246, %v1247
    %v1249 = vand.u32 %v1248, 4294901760
    %1250 = vmatpush1.msra.mxu0 %v1249
    %1251 = vmatprep.subr.mxu0 0.0
    %v1252 = vand.u32 %v80, 4294901760
    %v1253 = vsub.f32 %v80, %v1252
    %v1254 = vand.u32 %v1253, 4294901760
    %v1255 = vsub.f32 %v1253, %v1254
    %v1256 = vand.u32 %v1255, 4294901760
    %1257 = vmatpush1.msra.mxu0 %v1256
    %1258 = vmatprep.subr.mxu0 0.0
    %v1259 = vand.u32 %v81, 4294901760
    %v1260 = vsub.f32 %v81, %v1259
    %v1261 = vand.u32 %v1260, 4294901760
    %v1262 = vsub.f32 %v1260, %v1261
    %v1263 = vand.u32 %v1262, 4294901760
    %1264 = vmatpush1.msra.mxu0 %v1263
    %1265 = vmatprep.subr.mxu0 0.0
    %v1266 = vand.u32 %v82, 4294901760
    %v1267 = vsub.f32 %v82, %v1266
    %v1268 = vand.u32 %v1267, 4294901760
    %v1269 = vsub.f32 %v1267, %v1268
    %v1270 = vand.u32 %v1269, 4294901760
    %1271 = vmatpush1.msra.mxu0 %v1270
    %1272 = vmatprep.subr.mxu0 0.0
    %v1273 = vand.u32 %v83, 4294901760
    %v1274 = vsub.f32 %v83, %v1273
    %v1275 = vand.u32 %v1274, 4294901760
    %v1276 = vsub.f32 %v1274, %v1275
    %v1277 = vand.u32 %v1276, 4294901760
    %1278 = vmatpush1.msra.mxu0 %v1277
    %1279 = vmatprep.subr.mxu0 0.0
    %v1280 = vand.u32 %v84, 4294901760
    %v1281 = vsub.f32 %v84, %v1280
    %v1282 = vand.u32 %v1281, 4294901760
    %v1283 = vsub.f32 %v1281, %v1282
    %v1284 = vand.u32 %v1283, 4294901760
    %1285 = vmatpush1.msra.mxu0 %v1284
    %1286 = vmatprep.subr.mxu0 0.0
    %v1287 = vand.u32 %v85, 4294901760
    %v1288 = vsub.f32 %v85, %v1287
    %v1289 = vand.u32 %v1288, 4294901760
    %v1290 = vsub.f32 %v1288, %v1289
    %v1291 = vand.u32 %v1290, 4294901760
    %1292 = vmatpush1.msra.mxu0 %v1291
    %1293 = vmatprep.subr.mxu0 0.0
    %v1294 = vand.u32 %v86, 4294901760
    %v1295 = vsub.f32 %v86, %v1294
    %v1296 = vand.u32 %v1295, 4294901760
    %v1297 = vsub.f32 %v1295, %v1296
    %v1298 = vand.u32 %v1297, 4294901760
    %1299 = vmatpush1.msra.mxu0 %v1298
    %1300 = vmatprep.subr.mxu0 0.0
    %v1301 = vand.u32 %v87, 4294901760
    %v1302 = vsub.f32 %v87, %v1301
    %v1303 = vand.u32 %v1302, 4294901760
    %v1304 = vsub.f32 %v1302, %v1303
    %v1305 = vand.u32 %v1304, 4294901760
    %1306 = vmatpush1.msra.mxu0 %v1305
    %1307 = vmatprep.subr.mxu0 0.0
    %v1308 = vand.u32 %v88, 4294901760
    %v1309 = vsub.f32 %v88, %v1308
    %v1310 = vand.u32 %v1309, 4294901760
    %v1311 = vsub.f32 %v1309, %v1310
    %v1312 = vand.u32 %v1311, 4294901760
    %1313 = vmatpush1.msra.mxu0 %v1312
    %1314 = vmatprep.subr.mxu0 0.0
    %v1315 = vand.u32 %v89, 4294901760
    %v1316 = vsub.f32 %v89, %v1315
    %v1317 = vand.u32 %v1316, 4294901760
    %v1318 = vsub.f32 %v1316, %v1317
    %v1319 = vand.u32 %v1318, 4294901760
    %1320 = vmatpush1.msra.mxu0 %v1319
    %1321 = vmatprep.subr.mxu0 0.0
    %v1322 = vand.u32 %v90, 4294901760
    %v1323 = vsub.f32 %v90, %v1322
    %v1324 = vand.u32 %v1323, 4294901760
    %v1325 = vsub.f32 %v1323, %v1324
    %v1326 = vand.u32 %v1325, 4294901760
    %1327 = vmatpush1.msra.mxu0 %v1326
    %v1328 = vand.u32 %v24, 4294901760
    %1329 = vmatprep.mubr.f32.mxu0 %v1328
    %v1330 = vand.u32 %v23, 4294901760
    %1331 = vmatmul.mubr.f32.gmra.mrb[0].mxu0 %v1330
    %v1332 = vpop.f32.mrb[0].mxu0
    %v1333 = vadd.f32 %v1101, %v1332
    %v1334 = vpop.f32.mrb[0].mxu0
    %1335 = vdwg.mxu0
    %1336 = vmatprep.subr.mxu0 0.0
    %v1337 = vand.u32 %v59, 4294901760
    %v1338 = vsub.f32 %v59, %v1337
    %1339 = vmatpush1.msra.mxu0 %v1338
    %1340 = vmatprep.subr.mxu0 0.0
    %v1341 = vand.u32 %v60, 4294901760
    %v1342 = vsub.f32 %v60, %v1341
    %1343 = vmatpush1.msra.mxu0 %v1342
    %1344 = vmatprep.subr.mxu0 0.0
    %v1345 = vand.u32 %v61, 4294901760
    %v1346 = vsub.f32 %v61, %v1345
    %1347 = vmatpush1.msra.mxu0 %v1346
    %1348 = vmatprep.subr.mxu0 0.0
    %v1349 = vand.u32 %v62, 4294901760
    %v1350 = vsub.f32 %v62, %v1349
    %1351 = vmatpush1.msra.mxu0 %v1350
    %1352 = vmatprep.subr.mxu0 0.0
    %v1353 = vand.u32 %v63, 4294901760
    %v1354 = vsub.f32 %v63, %v1353
    %1355 = vmatpush1.msra.mxu0 %v1354
    %1356 = vmatprep.subr.mxu0 0.0
    %v1357 = vand.u32 %v64, 4294901760
    %v1358 = vsub.f32 %v64, %v1357
    %1359 = vmatpush1.msra.mxu0 %v1358
    %1360 = vmatprep.subr.mxu0 0.0
    %v1361 = vand.u32 %v65, 4294901760
    %v1362 = vsub.f32 %v65, %v1361
    %1363 = vmatpush1.msra.mxu0 %v1362
    %1364 = vmatprep.subr.mxu0 0.0
    %v1365 = vand.u32 %v66, 4294901760
    %v1366 = vsub.f32 %v66, %v1365
    %1367 = vmatpush1.msra.mxu0 %v1366
    %1368 = vmatprep.subr.mxu0 0.0
    %v1369 = vand.u32 %v67, 4294901760
    %v1370 = vsub.f32 %v67, %v1369
    %1371 = vmatpush1.msra.mxu0 %v1370
    %1372 = vmatprep.subr.mxu0 0.0
    %v1373 = vand.u32 %v68, 4294901760
    %v1374 = vsub.f32 %v68, %v1373
    %1375 = vmatpush1.msra.mxu0 %v1374
    %1376 = vmatprep.subr.mxu0 0.0
    %v1377 = vand.u32 %v69, 4294901760
    %v1378 = vsub.f32 %v69, %v1377
    %1379 = vmatpush1.msra.mxu0 %v1378
    %1380 = vmatprep.subr.mxu0 0.0
    %v1381 = vand.u32 %v70, 4294901760
    %v1382 = vsub.f32 %v70, %v1381
    %1383 = vmatpush1.msra.mxu0 %v1382
    %1384 = vmatprep.subr.mxu0 0.0
    %v1385 = vand.u32 %v71, 4294901760
    %v1386 = vsub.f32 %v71, %v1385
    %1387 = vmatpush1.msra.mxu0 %v1386
    %1388 = vmatprep.subr.mxu0 0.0
    %v1389 = vand.u32 %v72, 4294901760
    %v1390 = vsub.f32 %v72, %v1389
    %1391 = vmatpush1.msra.mxu0 %v1390
    %1392 = vmatprep.subr.mxu0 0.0
    %v1393 = vand.u32 %v73, 4294901760
    %v1394 = vsub.f32 %v73, %v1393
    %1395 = vmatpush1.msra.mxu0 %v1394
    %1396 = vmatprep.subr.mxu0 0.0
    %v1397 = vand.u32 %v74, 4294901760
    %v1398 = vsub.f32 %v74, %v1397
    %1399 = vmatpush1.msra.mxu0 %v1398
    %1400 = vmatprep.subr.mxu0 0.0
    %v1401 = vand.u32 %v75, 4294901760
    %v1402 = vsub.f32 %v75, %v1401
    %1403 = vmatpush1.msra.mxu0 %v1402
    %1404 = vmatprep.subr.mxu0 0.0
    %v1405 = vand.u32 %v76, 4294901760
    %v1406 = vsub.f32 %v76, %v1405
    %1407 = vmatpush1.msra.mxu0 %v1406
    %1408 = vmatprep.subr.mxu0 0.0
    %v1409 = vand.u32 %v77, 4294901760
    %v1410 = vsub.f32 %v77, %v1409
    %1411 = vmatpush1.msra.mxu0 %v1410
    %1412 = vmatprep.subr.mxu0 0.0
    %v1413 = vand.u32 %v78, 4294901760
    %v1414 = vsub.f32 %v78, %v1413
    %1415 = vmatpush1.msra.mxu0 %v1414
    %1416 = vmatprep.subr.mxu0 0.0
    %v1417 = vand.u32 %v79, 4294901760
    %v1418 = vsub.f32 %v79, %v1417
    %1419 = vmatpush1.msra.mxu0 %v1418
    %1420 = vmatprep.subr.mxu0 0.0
    %v1421 = vand.u32 %v80, 4294901760
    %v1422 = vsub.f32 %v80, %v1421
    %1423 = vmatpush1.msra.mxu0 %v1422
    %1424 = vmatprep.subr.mxu0 0.0
    %v1425 = vand.u32 %v81, 4294901760
    %v1426 = vsub.f32 %v81, %v1425
    %1427 = vmatpush1.msra.mxu0 %v1426
    %1428 = vmatprep.subr.mxu0 0.0
    %v1429 = vand.u32 %v82, 4294901760
    %v1430 = vsub.f32 %v82, %v1429
    %1431 = vmatpush1.msra.mxu0 %v1430
    %1432 = vmatprep.subr.mxu0 0.0
    %v1433 = vand.u32 %v83, 4294901760
    %v1434 = vsub.f32 %v83, %v1433
    %1435 = vmatpush1.msra.mxu0 %v1434
    %1436 = vmatprep.subr.mxu0 0.0
    %v1437 = vand.u32 %v84, 4294901760
    %v1438 = vsub.f32 %v84, %v1437
    %1439 = vmatpush1.msra.mxu0 %v1438
    %1440 = vmatprep.subr.mxu0 0.0
    %v1441 = vand.u32 %v85, 4294901760
    %v1442 = vsub.f32 %v85, %v1441
    %1443 = vmatpush1.msra.mxu0 %v1442
    %1444 = vmatprep.subr.mxu0 0.0
    %v1445 = vand.u32 %v86, 4294901760
    %v1446 = vsub.f32 %v86, %v1445
    %1447 = vmatpush1.msra.mxu0 %v1446
    %1448 = vmatprep.subr.mxu0 0.0
    %v1449 = vand.u32 %v87, 4294901760
    %v1450 = vsub.f32 %v87, %v1449
    %1451 = vmatpush1.msra.mxu0 %v1450
    %1452 = vmatprep.subr.mxu0 0.0
    %v1453 = vand.u32 %v88, 4294901760
    %v1454 = vsub.f32 %v88, %v1453
    %1455 = vmatpush1.msra.mxu0 %v1454
    %1456 = vmatprep.subr.mxu0 0.0
    %v1457 = vand.u32 %v89, 4294901760
    %v1458 = vsub.f32 %v89, %v1457
    %1459 = vmatpush1.msra.mxu0 %v1458
    %1460 = vmatprep.subr.mxu0 0.0
    %v1461 = vand.u32 %v90, 4294901760
    %v1462 = vsub.f32 %v90, %v1461
    %1463 = vmatpush1.msra.mxu0 %v1462
    %v1464 = vand.u32 %v24, 4294901760
    %v1465 = vsub.f32 %v24, %v1464
    %1466 = vmatprep.mubr.f32.mxu0 %v1465
    %v1467 = vand.u32 %v23, 4294901760
    %v1468 = vsub.f32 %v23, %v1467
    %1469 = vmatmul.mubr.f32.gmra.mrb[0].mxu0 %v1468
    %v1470 = vpop.f32.mrb[0].mxu0
    %v1471 = vadd.f32 %v1333, %v1470
    %v1472 = vpop.f32.mrb[0].mxu0
    %1473 = vdwg.mxu0
    %1474 = vmatprep.subr.mxu0 0.0
    %v1475 = vand.u32 %v59, 4294901760
    %1476 = vmatpush1.msra.mxu0 %v1475
    %1477 = vmatprep.subr.mxu0 0.0
    %v1478 = vand.u32 %v60, 4294901760
    %1479 = vmatpush1.msra.mxu0 %v1478
    %1480 = vmatprep.subr.mxu0 0.0
    %v1481 = vand.u32 %v61, 4294901760
    %1482 = vmatpush1.msra.mxu0 %v1481
    %1483 = vmatprep.subr.mxu0 0.0
    %v1484 = vand.u32 %v62, 4294901760
    %1485 = vmatpush1.msra.mxu0 %v1484
    %1486 = vmatprep.subr.mxu0 0.0
    %v1487 = vand.u32 %v63, 4294901760
    %1488 = vmatpush1.msra.mxu0 %v1487
    %1489 = vmatprep.subr.mxu0 0.0
    %v1490 = vand.u32 %v64, 4294901760
    %1491 = vmatpush1.msra.mxu0 %v1490
    %1492 = vmatprep.subr.mxu0 0.0
    %v1493 = vand.u32 %v65, 4294901760
    %1494 = vmatpush1.msra.mxu0 %v1493
    %1495 = vmatprep.subr.mxu0 0.0
    %v1496 = vand.u32 %v66, 4294901760
    %1497 = vmatpush1.msra.mxu0 %v1496
    %1498 = vmatprep.subr.mxu0 0.0
    %v1499 = vand.u32 %v67, 4294901760
    %1500 = vmatpush1.msra.mxu0 %v1499
    %1501 = vmatprep.subr.mxu0 0.0
    %v1502 = vand.u32 %v68, 4294901760
    %1503 = vmatpush1.msra.mxu0 %v1502
    %1504 = vmatprep.subr.mxu0 0.0
    %v1505 = vand.u32 %v69, 4294901760
    %1506 = vmatpush1.msra.mxu0 %v1505
    %1507 = vmatprep.subr.mxu0 0.0
    %v1508 = vand.u32 %v70, 4294901760
    %1509 = vmatpush1.msra.mxu0 %v1508
    %1510 = vmatprep.subr.mxu0 0.0
    %v1511 = vand.u32 %v71, 4294901760
    %1512 = vmatpush1.msra.mxu0 %v1511
    %1513 = vmatprep.subr.mxu0 0.0
    %v1514 = vand.u32 %v72, 4294901760
    %1515 = vmatpush1.msra.mxu0 %v1514
    %1516 = vmatprep.subr.mxu0 0.0
    %v1517 = vand.u32 %v73, 4294901760
    %1518 = vmatpush1.msra.mxu0 %v1517
    %1519 = vmatprep.subr.mxu0 0.0
    %v1520 = vand.u32 %v74, 4294901760
    %1521 = vmatpush1.msra.mxu0 %v1520
    %1522 = vmatprep.subr.mxu0 0.0
    %v1523 = vand.u32 %v75, 4294901760
    %1524 = vmatpush1.msra.mxu0 %v1523
    %1525 = vmatprep.subr.mxu0 0.0
    %v1526 = vand.u32 %v76, 4294901760
    %1527 = vmatpush1.msra.mxu0 %v1526
    %1528 = vmatprep.subr.mxu0 0.0
    %v1529 = vand.u32 %v77, 4294901760
    %1530 = vmatpush1.msra.mxu0 %v1529
    %1531 = vmatprep.subr.mxu0 0.0
    %v1532 = vand.u32 %v78, 4294901760
    %1533 = vmatpush1.msra.mxu0 %v1532
    %1534 = vmatprep.subr.mxu0 0.0
    %v1535 = vand.u32 %v79, 4294901760
    %1536 = vmatpush1.msra.mxu0 %v1535
    %1537 = vmatprep.subr.mxu0 0.0
    %v1538 = vand.u32 %v80, 4294901760
    %1539 = vmatpush1.msra.mxu0 %v1538
    %1540 = vmatprep.subr.mxu0 0.0
    %v1541 = vand.u32 %v81, 4294901760
    %1542 = vmatpush1.msra.mxu0 %v1541
    %1543 = vmatprep.subr.mxu0 0.0
    %v1544 = vand.u32 %v82, 4294901760
    %1545 = vmatpush1.msra.mxu0 %v1544
    %1546 = vmatprep.subr.mxu0 0.0
    %v1547 = vand.u32 %v83, 4294901760
    %1548 = vmatpush1.msra.mxu0 %v1547
    %1549 = vmatprep.subr.mxu0 0.0
    %v1550 = vand.u32 %v84, 4294901760
    %1551 = vmatpush1.msra.mxu0 %v1550
    %1552 = vmatprep.subr.mxu0 0.0
    %v1553 = vand.u32 %v85, 4294901760
    %1554 = vmatpush1.msra.mxu0 %v1553
    %1555 = vmatprep.subr.mxu0 0.0
    %v1556 = vand.u32 %v86, 4294901760
    %1557 = vmatpush1.msra.mxu0 %v1556
    %1558 = vmatprep.subr.mxu0 0.0
    %v1559 = vand.u32 %v87, 4294901760
    %1560 = vmatpush1.msra.mxu0 %v1559
    %1561 = vmatprep.subr.mxu0 0.0
    %v1562 = vand.u32 %v88, 4294901760
    %1563 = vmatpush1.msra.mxu0 %v1562
    %1564 = vmatprep.subr.mxu0 0.0
    %v1565 = vand.u32 %v89, 4294901760
    %1566 = vmatpush1.msra.mxu0 %v1565
    %1567 = vmatprep.subr.mxu0 0.0
    %v1568 = vand.u32 %v90, 4294901760
    %1569 = vmatpush1.msra.mxu0 %v1568
    %v1570 = vand.u32 %v24, 4294901760
    %v1571 = vsub.f32 %v24, %v1570
    %v1572 = vand.u32 %v1571, 4294901760
    %1573 = vmatprep.mubr.f32.mxu0 %v1572
    %v1574 = vand.u32 %v23, 4294901760
    %v1575 = vsub.f32 %v23, %v1574
    %v1576 = vand.u32 %v1575, 4294901760
    %1577 = vmatmul.mubr.f32.gmra.mrb[0].mxu0 %v1576
    %v1578 = vpop.f32.mrb[0].mxu0
    %v1579 = vadd.f32 %v1471, %v1578
    %v1580 = vpop.f32.mrb[0].mxu0
    %1581 = vdwg.mxu0
    %1582 = vmatprep.subr.mxu0 0.0
    %v1583 = vand.u32 %v59, 4294901760
    %v1584 = vsub.f32 %v59, %v1583
    %v1585 = vand.u32 %v1584, 4294901760
    %1586 = vmatpush1.msra.mxu0 %v1585
    %1587 = vmatprep.subr.mxu0 0.0
    %v1588 = vand.u32 %v60, 4294901760
    %v1589 = vsub.f32 %v60, %v1588
    %v1590 = vand.u32 %v1589, 4294901760
    %1591 = vmatpush1.msra.mxu0 %v1590
    %1592 = vmatprep.subr.mxu0 0.0
    %v1593 = vand.u32 %v61, 4294901760
    %v1594 = vsub.f32 %v61, %v1593
    %v1595 = vand.u32 %v1594, 4294901760
    %1596 = vmatpush1.msra.mxu0 %v1595
    %1597 = vmatprep.subr.mxu0 0.0
    %v1598 = vand.u32 %v62, 4294901760
    %v1599 = vsub.f32 %v62, %v1598
    %v1600 = vand.u32 %v1599, 4294901760
    %1601 = vmatpush1.msra.mxu0 %v1600
    %1602 = vmatprep.subr.mxu0 0.0
    %v1603 = vand.u32 %v63, 4294901760
    %v1604 = vsub.f32 %v63, %v1603
    %v1605 = vand.u32 %v1604, 4294901760
    %1606 = vmatpush1.msra.mxu0 %v1605
    %1607 = vmatprep.subr.mxu0 0.0
    %v1608 = vand.u32 %v64, 4294901760
    %v1609 = vsub.f32 %v64, %v1608
    %v1610 = vand.u32 %v1609, 4294901760
    %1611 = vmatpush1.msra.mxu0 %v1610
    %1612 = vmatprep.subr.mxu0 0.0
    %v1613 = vand.u32 %v65, 4294901760
    %v1614 = vsub.f32 %v65, %v1613
    %v1615 = vand.u32 %v1614, 4294901760
    %1616 = vmatpush1.msra.mxu0 %v1615
    %1617 = vmatprep.subr.mxu0 0.0
    %v1618 = vand.u32 %v66, 4294901760
    %v1619 = vsub.f32 %v66, %v1618
    %v1620 = vand.u32 %v1619, 4294901760
    %1621 = vmatpush1.msra.mxu0 %v1620
    %1622 = vmatprep.subr.mxu0 0.0
    %v1623 = vand.u32 %v67, 4294901760
    %v1624 = vsub.f32 %v67, %v1623
    %v1625 = vand.u32 %v1624, 4294901760
    %1626 = vmatpush1.msra.mxu0 %v1625
    %1627 = vmatprep.subr.mxu0 0.0
    %v1628 = vand.u32 %v68, 4294901760
    %v1629 = vsub.f32 %v68, %v1628
    %v1630 = vand.u32 %v1629, 4294901760
    %1631 = vmatpush1.msra.mxu0 %v1630
    %1632 = vmatprep.subr.mxu0 0.0
    %v1633 = vand.u32 %v69, 4294901760
    %v1634 = vsub.f32 %v69, %v1633
    %v1635 = vand.u32 %v1634, 4294901760
    %1636 = vmatpush1.msra.mxu0 %v1635
    %1637 = vmatprep.subr.mxu0 0.0
    %v1638 = vand.u32 %v70, 4294901760
    %v1639 = vsub.f32 %v70, %v1638
    %v1640 = vand.u32 %v1639, 4294901760
    %1641 = vmatpush1.msra.mxu0 %v1640
    %1642 = vmatprep.subr.mxu0 0.0
    %v1643 = vand.u32 %v71, 4294901760
    %v1644 = vsub.f32 %v71, %v1643
    %v1645 = vand.u32 %v1644, 4294901760
    %1646 = vmatpush1.msra.mxu0 %v1645
    %1647 = vmatprep.subr.mxu0 0.0
    %v1648 = vand.u32 %v72, 4294901760
    %v1649 = vsub.f32 %v72, %v1648
    %v1650 = vand.u32 %v1649, 4294901760
    %1651 = vmatpush1.msra.mxu0 %v1650
    %1652 = vmatprep.subr.mxu0 0.0
    %v1653 = vand.u32 %v73, 4294901760
    %v1654 = vsub.f32 %v73, %v1653
    %v1655 = vand.u32 %v1654, 4294901760
    %1656 = vmatpush1.msra.mxu0 %v1655
    %1657 = vmatprep.subr.mxu0 0.0
    %v1658 = vand.u32 %v74, 4294901760
    %v1659 = vsub.f32 %v74, %v1658
    %v1660 = vand.u32 %v1659, 4294901760
    %1661 = vmatpush1.msra.mxu0 %v1660
    %1662 = vmatprep.subr.mxu0 0.0
    %v1663 = vand.u32 %v75, 4294901760
    %v1664 = vsub.f32 %v75, %v1663
    %v1665 = vand.u32 %v1664, 4294901760
    %1666 = vmatpush1.msra.mxu0 %v1665
    %1667 = vmatprep.subr.mxu0 0.0
    %v1668 = vand.u32 %v76, 4294901760
    %v1669 = vsub.f32 %v76, %v1668
    %v1670 = vand.u32 %v1669, 4294901760
    %1671 = vmatpush1.msra.mxu0 %v1670
    %1672 = vmatprep.subr.mxu0 0.0
    %v1673 = vand.u32 %v77, 4294901760
    %v1674 = vsub.f32 %v77, %v1673
    %v1675 = vand.u32 %v1674, 4294901760
    %1676 = vmatpush1.msra.mxu0 %v1675
    %1677 = vmatprep.subr.mxu0 0.0
    %v1678 = vand.u32 %v78, 4294901760
    %v1679 = vsub.f32 %v78, %v1678
    %v1680 = vand.u32 %v1679, 4294901760
    %1681 = vmatpush1.msra.mxu0 %v1680
    %1682 = vmatprep.subr.mxu0 0.0
    %v1683 = vand.u32 %v79, 4294901760
    %v1684 = vsub.f32 %v79, %v1683
    %v1685 = vand.u32 %v1684, 4294901760
    %1686 = vmatpush1.msra.mxu0 %v1685
    %1687 = vmatprep.subr.mxu0 0.0
    %v1688 = vand.u32 %v80, 4294901760
    %v1689 = vsub.f32 %v80, %v1688
    %v1690 = vand.u32 %v1689, 4294901760
    %1691 = vmatpush1.msra.mxu0 %v1690
    %1692 = vmatprep.subr.mxu0 0.0
    %v1693 = vand.u32 %v81, 4294901760
    %v1694 = vsub.f32 %v81, %v1693
    %v1695 = vand.u32 %v1694, 4294901760
    %1696 = vmatpush1.msra.mxu0 %v1695
    %1697 = vmatprep.subr.mxu0 0.0
    %v1698 = vand.u32 %v82, 4294901760
    %v1699 = vsub.f32 %v82, %v1698
    %v1700 = vand.u32 %v1699, 4294901760
    %1701 = vmatpush1.msra.mxu0 %v1700
    %1702 = vmatprep.subr.mxu0 0.0
    %v1703 = vand.u32 %v83, 4294901760
    %v1704 = vsub.f32 %v83, %v1703
    %v1705 = vand.u32 %v1704, 4294901760
    %1706 = vmatpush1.msra.mxu0 %v1705
    %1707 = vmatprep.subr.mxu0 0.0
    %v1708 = vand.u32 %v84, 4294901760
    %v1709 = vsub.f32 %v84, %v1708
    %v1710 = vand.u32 %v1709, 4294901760
    %1711 = vmatpush1.msra.mxu0 %v1710
    %1712 = vmatprep.subr.mxu0 0.0
    %v1713 = vand.u32 %v85, 4294901760
    %v1714 = vsub.f32 %v85, %v1713
    %v1715 = vand.u32 %v1714, 4294901760
    %1716 = vmatpush1.msra.mxu0 %v1715
    %1717 = vmatprep.subr.mxu0 0.0
    %v1718 = vand.u32 %v86, 4294901760
    %v1719 = vsub.f32 %v86, %v1718
    %v1720 = vand.u32 %v1719, 4294901760
    %1721 = vmatpush1.msra.mxu0 %v1720
    %1722 = vmatprep.subr.mxu0 0.0
    %v1723 = vand.u32 %v87, 4294901760
    %v1724 = vsub.f32 %v87, %v1723
    %v1725 = vand.u32 %v1724, 4294901760
    %1726 = vmatpush1.msra.mxu0 %v1725
    %1727 = vmatprep.subr.mxu0 0.0
    %v1728 = vand.u32 %v88, 4294901760
    %v1729 = vsub.f32 %v88, %v1728
    %v1730 = vand.u32 %v1729, 4294901760
    %1731 = vmatpush1.msra.mxu0 %v1730
    %1732 = vmatprep.subr.mxu0 0.0
    %v1733 = vand.u32 %v89, 4294901760
    %v1734 = vsub.f32 %v89, %v1733
    %v1735 = vand.u32 %v1734, 4294901760
    %1736 = vmatpush1.msra.mxu0 %v1735
    %1737 = vmatprep.subr.mxu0 0.0
    %v1738 = vand.u32 %v90, 4294901760
    %v1739 = vsub.f32 %v90, %v1738
    %v1740 = vand.u32 %v1739, 4294901760
    %1741 = vmatpush1.msra.mxu0 %v1740
    %v1742 = vand.u32 %v24, 4294901760
    %1743 = vmatprep.mubr.f32.mxu0 %v1742
    %v1744 = vand.u32 %v23, 4294901760
    %1745 = vmatmul.mubr.f32.gmra.mrb[0].mxu0 %v1744
    %v1746 = vpop.f32.mrb[0].mxu0
    %v1747 = vadd.f32 %v1579, %v1746
    %v1748 = vpop.f32.mrb[0].mxu0
    %1749 = vdwg.mxu0
    %1750 = vmatprep.subr.mxu0 0.0
    %v1751 = vand.u32 %v59, 4294901760
    %1752 = vmatpush1.msra.mxu0 %v1751
    %1753 = vmatprep.subr.mxu0 0.0
    %v1754 = vand.u32 %v60, 4294901760
    %1755 = vmatpush1.msra.mxu0 %v1754
    %1756 = vmatprep.subr.mxu0 0.0
    %v1757 = vand.u32 %v61, 4294901760
    %1758 = vmatpush1.msra.mxu0 %v1757
    %1759 = vmatprep.subr.mxu0 0.0
    %v1760 = vand.u32 %v62, 4294901760
    %1761 = vmatpush1.msra.mxu0 %v1760
    %1762 = vmatprep.subr.mxu0 0.0
    %v1763 = vand.u32 %v63, 4294901760
    %1764 = vmatpush1.msra.mxu0 %v1763
    %1765 = vmatprep.subr.mxu0 0.0
    %v1766 = vand.u32 %v64, 4294901760
    %1767 = vmatpush1.msra.mxu0 %v1766
    %1768 = vmatprep.subr.mxu0 0.0
    %v1769 = vand.u32 %v65, 4294901760
    %1770 = vmatpush1.msra.mxu0 %v1769
    %1771 = vmatprep.subr.mxu0 0.0
    %v1772 = vand.u32 %v66, 4294901760
    %1773 = vmatpush1.msra.mxu0 %v1772
    %1774 = vmatprep.subr.mxu0 0.0
    %v1775 = vand.u32 %v67, 4294901760
    %1776 = vmatpush1.msra.mxu0 %v1775
    %1777 = vmatprep.subr.mxu0 0.0
    %v1778 = vand.u32 %v68, 4294901760
    %1779 = vmatpush1.msra.mxu0 %v1778
    %1780 = vmatprep.subr.mxu0 0.0
    %v1781 = vand.u32 %v69, 4294901760
    %1782 = vmatpush1.msra.mxu0 %v1781
    %1783 = vmatprep.subr.mxu0 0.0
    %v1784 = vand.u32 %v70, 4294901760
    %1785 = vmatpush1.msra.mxu0 %v1784
    %1786 = vmatprep.subr.mxu0 0.0
    %v1787 = vand.u32 %v71, 4294901760
    %1788 = vmatpush1.msra.mxu0 %v1787
    %1789 = vmatprep.subr.mxu0 0.0
    %v1790 = vand.u32 %v72, 4294901760
    %1791 = vmatpush1.msra.mxu0 %v1790
    %1792 = vmatprep.subr.mxu0 0.0
    %v1793 = vand.u32 %v73, 4294901760
    %1794 = vmatpush1.msra.mxu0 %v1793
    %1795 = vmatprep.subr.mxu0 0.0
    %v1796 = vand.u32 %v74, 4294901760
    %1797 = vmatpush1.msra.mxu0 %v1796
    %1798 = vmatprep.subr.mxu0 0.0
    %v1799 = vand.u32 %v75, 4294901760
    %1800 = vmatpush1.msra.mxu0 %v1799
    %1801 = vmatprep.subr.mxu0 0.0
    %v1802 = vand.u32 %v76, 4294901760
    %1803 = vmatpush1.msra.mxu0 %v1802
    %1804 = vmatprep.subr.mxu0 0.0
    %v1805 = vand.u32 %v77, 4294901760
    %1806 = vmatpush1.msra.mxu0 %v1805
    %1807 = vmatprep.subr.mxu0 0.0
    %v1808 = vand.u32 %v78, 4294901760
    %1809 = vmatpush1.msra.mxu0 %v1808
    %1810 = vmatprep.subr.mxu0 0.0
    %v1811 = vand.u32 %v79, 4294901760
    %1812 = vmatpush1.msra.mxu0 %v1811
    %1813 = vmatprep.subr.mxu0 0.0
    %v1814 = vand.u32 %v80, 4294901760
    %1815 = vmatpush1.msra.mxu0 %v1814
    %1816 = vmatprep.subr.mxu0 0.0
    %v1817 = vand.u32 %v81, 4294901760
    %1818 = vmatpush1.msra.mxu0 %v1817
    %1819 = vmatprep.subr.mxu0 0.0
    %v1820 = vand.u32 %v82, 4294901760
    %1821 = vmatpush1.msra.mxu0 %v1820
    %1822 = vmatprep.subr.mxu0 0.0
    %v1823 = vand.u32 %v83, 4294901760
    %1824 = vmatpush1.msra.mxu0 %v1823
    %1825 = vmatprep.subr.mxu0 0.0
    %v1826 = vand.u32 %v84, 4294901760
    %1827 = vmatpush1.msra.mxu0 %v1826
    %1828 = vmatprep.subr.mxu0 0.0
    %v1829 = vand.u32 %v85, 4294901760
    %1830 = vmatpush1.msra.mxu0 %v1829
    %1831 = vmatprep.subr.mxu0 0.0
    %v1832 = vand.u32 %v86, 4294901760
    %1833 = vmatpush1.msra.mxu0 %v1832
    %1834 = vmatprep.subr.mxu0 0.0
    %v1835 = vand.u32 %v87, 4294901760
    %1836 = vmatpush1.msra.mxu0 %v1835
    %1837 = vmatprep.subr.mxu0 0.0
    %v1838 = vand.u32 %v88, 4294901760
    %1839 = vmatpush1.msra.mxu0 %v1838
    %1840 = vmatprep.subr.mxu0 0.0
    %v1841 = vand.u32 %v89, 4294901760
    %1842 = vmatpush1.msra.mxu0 %v1841
    %1843 = vmatprep.subr.mxu0 0.0
    %v1844 = vand.u32 %v90, 4294901760
    %1845 = vmatpush1.msra.mxu0 %v1844
    %v1846 = vand.u32 %v24, 4294901760
    %1847 = vmatprep.mubr.f32.mxu0 %v1846
    %v1848 = vand.u32 %v23, 4294901760
    %1849 = vmatmul.mubr.f32.gmra.mrb[0].mxu0 %v1848
    %v1850 = vpop.f32.mrb[0].mxu0
    %v1851 = vadd.f32 %v1747, %v1850
    %v1852 = vpop.f32.mrb[0].mxu0
    %1853 = vdwg.mxu0
    %1854 = vmatprep.subr.mxu0 0.0
    %v1855 = vand.u32 %v91, 4294901760
    %1856 = vmatpush1.msra.mxu0 %v1855
    %1857 = vmatprep.subr.mxu0 0.0
    %v1858 = vand.u32 %v92, 4294901760
    %1859 = vmatpush1.msra.mxu0 %v1858
    %1860 = vmatprep.subr.mxu0 0.0
    %v1861 = vand.u32 %v93, 4294901760
    %1862 = vmatpush1.msra.mxu0 %v1861
    %1863 = vmatprep.subr.mxu0 0.0
    %v1864 = vand.u32 %v94, 4294901760
    %1865 = vmatpush1.msra.mxu0 %v1864
    %1866 = vmatprep.subr.mxu0 0.0
    %v1867 = vand.u32 %v95, 4294901760
    %1868 = vmatpush1.msra.mxu0 %v1867
    %1869 = vmatprep.subr.mxu0 0.0
    %v1870 = vand.u32 %v96, 4294901760
    %1871 = vmatpush1.msra.mxu0 %v1870
    %1872 = vmatprep.subr.mxu0 0.0
    %v1873 = vand.u32 %v97, 4294901760
    %1874 = vmatpush1.msra.mxu0 %v1873
    %1875 = vmatprep.subr.mxu0 0.0
    %v1876 = vand.u32 %v98, 4294901760
    %1877 = vmatpush1.msra.mxu0 %v1876
    %1878 = vmatprep.subr.mxu0 0.0
    %v1879 = vand.u32 %v99, 4294901760
    %1880 = vmatpush1.msra.mxu0 %v1879
    %1881 = vmatprep.subr.mxu0 0.0
    %v1882 = vand.u32 %v100, 4294901760
    %1883 = vmatpush1.msra.mxu0 %v1882
    %1884 = vmatprep.subr.mxu0 0.0
    %v1885 = vand.u32 %v101, 4294901760
    %1886 = vmatpush1.msra.mxu0 %v1885
    %1887 = vmatprep.subr.mxu0 0.0
    %v1888 = vand.u32 %v102, 4294901760
    %1889 = vmatpush1.msra.mxu0 %v1888
    %1890 = vmatprep.subr.mxu0 0.0
    %v1891 = vand.u32 %v103, 4294901760
    %1892 = vmatpush1.msra.mxu0 %v1891
    %1893 = vmatprep.subr.mxu0 0.0
    %v1894 = vand.u32 %v104, 4294901760
    %1895 = vmatpush1.msra.mxu0 %v1894
    %1896 = vmatprep.subr.mxu0 0.0
    %v1897 = vand.u32 %v105, 4294901760
    %1898 = vmatpush1.msra.mxu0 %v1897
    %1899 = vmatprep.subr.mxu0 0.0
    %v1900 = vand.u32 %v106, 4294901760
    %1901 = vmatpush1.msra.mxu0 %v1900
    %1902 = vmatprep.subr.mxu0 0.0
    %v1903 = vand.u32 %v107, 4294901760
    %1904 = vmatpush1.msra.mxu0 %v1903
    %1905 = vmatprep.subr.mxu0 0.0
    %v1906 = vand.u32 %v108, 4294901760
    %1907 = vmatpush1.msra.mxu0 %v1906
    %1908 = vmatprep.subr.mxu0 0.0
    %v1909 = vand.u32 %v109, 4294901760
    %1910 = vmatpush1.msra.mxu0 %v1909
    %1911 = vmatprep.subr.mxu0 0.0
    %v1912 = vand.u32 %v110, 4294901760
    %1913 = vmatpush1.msra.mxu0 %v1912
    %1914 = vmatprep.subr.mxu0 0.0
    %v1915 = vand.u32 %v111, 4294901760
    %1916 = vmatpush1.msra.mxu0 %v1915
    %1917 = vmatprep.subr.mxu0 0.0
    %v1918 = vand.u32 %v112, 4294901760
    %1919 = vmatpush1.msra.mxu0 %v1918
    %1920 = vmatprep.subr.mxu0 0.0
    %v1921 = vand.u32 %v113, 4294901760
    %1922 = vmatpush1.msra.mxu0 %v1921
    %1923 = vmatprep.subr.mxu0 0.0
    %v1924 = vand.u32 %v114, 4294901760
    %1925 = vmatpush1.msra.mxu0 %v1924
    %1926 = vmatprep.subr.mxu0 0.0
    %v1927 = vand.u32 %v115, 4294901760
    %1928 = vmatpush1.msra.mxu0 %v1927
    %1929 = vmatprep.subr.mxu0 0.0
    %v1930 = vand.u32 %v116, 4294901760
    %1931 = vmatpush1.msra.mxu0 %v1930
    %1932 = vmatprep.subr.mxu0 0.0
    %v1933 = vand.u32 %v117, 4294901760
    %1934 = vmatpush1.msra.mxu0 %v1933
    %1935 = vmatprep.subr.mxu0 0.0
    %v1936 = vand.u32 %v118, 4294901760
    %1937 = vmatpush1.msra.mxu0 %v1936
    %1938 = vmatprep.subr.mxu0 0.0
    %v1939 = vand.u32 %v119, 4294901760
    %1940 = vmatpush1.msra.mxu0 %v1939
    %1941 = vmatprep.subr.mxu0 0.0
    %v1942 = vand.u32 %v120, 4294901760
    %1943 = vmatpush1.msra.mxu0 %v1942
    %1944 = vmatprep.subr.mxu0 0.0
    %v1945 = vand.u32 %v121, 4294901760
    %1946 = vmatpush1.msra.mxu0 %v1945
    %1947 = vmatprep.subr.mxu0 0.0
    %v1948 = vand.u32 %v122, 4294901760
    %1949 = vmatpush1.msra.mxu0 %v1948
    %v1950 = vand.u32 %v26, 4294901760
    %v1951 = vsub.f32 %v26, %v1950
    %v1952 = vand.u32 %v1951, 4294901760
    %v1953 = vsub.f32 %v1951, %v1952
    %v1954 = vand.u32 %v1953, 4294901760
    %1955 = vmatprep.mubr.f32.mxu0 %v1954
    %v1956 = vand.u32 %v25, 4294901760
    %v1957 = vsub.f32 %v25, %v1956
    %v1958 = vand.u32 %v1957, 4294901760
    %v1959 = vsub.f32 %v1957, %v1958
    %v1960 = vand.u32 %v1959, 4294901760
    %1961 = vmatmul.mubr.f32.gmra.mrb[0].mxu0 %v1960
    %v1962 = vpop.f32.mrb[0].mxu0
    %v1963 = vadd.f32 %v1851, %v1962
    %v1964 = vpop.f32.mrb[0].mxu0
    %1965 = vdwg.mxu0
    %1966 = vmatprep.subr.mxu0 0.0
    %v1967 = vand.u32 %v91, 4294901760
    %v1968 = vsub.f32 %v91, %v1967
    %v1969 = vand.u32 %v1968, 4294901760
    %v1970 = vsub.f32 %v1968, %v1969
    %v1971 = vand.u32 %v1970, 4294901760
    %1972 = vmatpush1.msra.mxu0 %v1971
    %1973 = vmatprep.subr.mxu0 0.0
    %v1974 = vand.u32 %v92, 4294901760
    %v1975 = vsub.f32 %v92, %v1974
    %v1976 = vand.u32 %v1975, 4294901760
    %v1977 = vsub.f32 %v1975, %v1976
    %v1978 = vand.u32 %v1977, 4294901760
    %1979 = vmatpush1.msra.mxu0 %v1978
    %1980 = vmatprep.subr.mxu0 0.0
    %v1981 = vand.u32 %v93, 4294901760
    %v1982 = vsub.f32 %v93, %v1981
    %v1983 = vand.u32 %v1982, 4294901760
    %v1984 = vsub.f32 %v1982, %v1983
    %v1985 = vand.u32 %v1984, 4294901760
    %1986 = vmatpush1.msra.mxu0 %v1985
    %1987 = vmatprep.subr.mxu0 0.0
    %v1988 = vand.u32 %v94, 4294901760
    %v1989 = vsub.f32 %v94, %v1988
    %v1990 = vand.u32 %v1989, 4294901760
    %v1991 = vsub.f32 %v1989, %v1990
    %v1992 = vand.u32 %v1991, 4294901760
    %1993 = vmatpush1.msra.mxu0 %v1992
    %1994 = vmatprep.subr.mxu0 0.0
    %v1995 = vand.u32 %v95, 4294901760
    %v1996 = vsub.f32 %v95, %v1995
    %v1997 = vand.u32 %v1996, 4294901760
    %v1998 = vsub.f32 %v1996, %v1997
    %v1999 = vand.u32 %v1998, 4294901760
    %2000 = vmatpush1.msra.mxu0 %v1999
    %2001 = vmatprep.subr.mxu0 0.0
    %v2002 = vand.u32 %v96, 4294901760
    %v2003 = vsub.f32 %v96, %v2002
    %v2004 = vand.u32 %v2003, 4294901760
    %v2005 = vsub.f32 %v2003, %v2004
    %v2006 = vand.u32 %v2005, 4294901760
    %2007 = vmatpush1.msra.mxu0 %v2006
    %2008 = vmatprep.subr.mxu0 0.0
    %v2009 = vand.u32 %v97, 4294901760
    %v2010 = vsub.f32 %v97, %v2009
    %v2011 = vand.u32 %v2010, 4294901760
    %v2012 = vsub.f32 %v2010, %v2011
    %v2013 = vand.u32 %v2012, 4294901760
    %2014 = vmatpush1.msra.mxu0 %v2013
    %2015 = vmatprep.subr.mxu0 0.0
    %v2016 = vand.u32 %v98, 4294901760
    %v2017 = vsub.f32 %v98, %v2016
    %v2018 = vand.u32 %v2017, 4294901760
    %v2019 = vsub.f32 %v2017, %v2018
    %v2020 = vand.u32 %v2019, 4294901760
    %2021 = vmatpush1.msra.mxu0 %v2020
    %2022 = vmatprep.subr.mxu0 0.0
    %v2023 = vand.u32 %v99, 4294901760
    %v2024 = vsub.f32 %v99, %v2023
    %v2025 = vand.u32 %v2024, 4294901760
    %v2026 = vsub.f32 %v2024, %v2025
    %v2027 = vand.u32 %v2026, 4294901760
    %2028 = vmatpush1.msra.mxu0 %v2027
    %2029 = vmatprep.subr.mxu0 0.0
    %v2030 = vand.u32 %v100, 4294901760
    %v2031 = vsub.f32 %v100, %v2030
    %v2032 = vand.u32 %v2031, 4294901760
    %v2033 = vsub.f32 %v2031, %v2032
    %v2034 = vand.u32 %v2033, 4294901760
    %2035 = vmatpush1.msra.mxu0 %v2034
    %2036 = vmatprep.subr.mxu0 0.0
    %v2037 = vand.u32 %v101, 4294901760
    %v2038 = vsub.f32 %v101, %v2037
    %v2039 = vand.u32 %v2038, 4294901760
    %v2040 = vsub.f32 %v2038, %v2039
    %v2041 = vand.u32 %v2040, 4294901760
    %2042 = vmatpush1.msra.mxu0 %v2041
    %2043 = vmatprep.subr.mxu0 0.0
    %v2044 = vand.u32 %v102, 4294901760
    %v2045 = vsub.f32 %v102, %v2044
    %v2046 = vand.u32 %v2045, 4294901760
    %v2047 = vsub.f32 %v2045, %v2046
    %v2048 = vand.u32 %v2047, 4294901760
    %2049 = vmatpush1.msra.mxu0 %v2048
    %2050 = vmatprep.subr.mxu0 0.0
    %v2051 = vand.u32 %v103, 4294901760
    %v2052 = vsub.f32 %v103, %v2051
    %v2053 = vand.u32 %v2052, 4294901760
    %v2054 = vsub.f32 %v2052, %v2053
    %v2055 = vand.u32 %v2054, 4294901760
    %2056 = vmatpush1.msra.mxu0 %v2055
    %2057 = vmatprep.subr.mxu0 0.0
    %v2058 = vand.u32 %v104, 4294901760
    %v2059 = vsub.f32 %v104, %v2058
    %v2060 = vand.u32 %v2059, 4294901760
    %v2061 = vsub.f32 %v2059, %v2060
    %v2062 = vand.u32 %v2061, 4294901760
    %2063 = vmatpush1.msra.mxu0 %v2062
    %2064 = vmatprep.subr.mxu0 0.0
    %v2065 = vand.u32 %v105, 4294901760
    %v2066 = vsub.f32 %v105, %v2065
    %v2067 = vand.u32 %v2066, 4294901760
    %v2068 = vsub.f32 %v2066, %v2067
    %v2069 = vand.u32 %v2068, 4294901760
    %2070 = vmatpush1.msra.mxu0 %v2069
    %2071 = vmatprep.subr.mxu0 0.0
    %v2072 = vand.u32 %v106, 4294901760
    %v2073 = vsub.f32 %v106, %v2072
    %v2074 = vand.u32 %v2073, 4294901760
    %v2075 = vsub.f32 %v2073, %v2074
    %v2076 = vand.u32 %v2075, 4294901760
    %2077 = vmatpush1.msra.mxu0 %v2076
    %2078 = vmatprep.subr.mxu0 0.0
    %v2079 = vand.u32 %v107, 4294901760
    %v2080 = vsub.f32 %v107, %v2079
    %v2081 = vand.u32 %v2080, 4294901760
    %v2082 = vsub.f32 %v2080, %v2081
    %v2083 = vand.u32 %v2082, 4294901760
    %2084 = vmatpush1.msra.mxu0 %v2083
    %2085 = vmatprep.subr.mxu0 0.0
    %v2086 = vand.u32 %v108, 4294901760
    %v2087 = vsub.f32 %v108, %v2086
    %v2088 = vand.u32 %v2087, 4294901760
    %v2089 = vsub.f32 %v2087, %v2088
    %v2090 = vand.u32 %v2089, 4294901760
    %2091 = vmatpush1.msra.mxu0 %v2090
    %2092 = vmatprep.subr.mxu0 0.0
    %v2093 = vand.u32 %v109, 4294901760
    %v2094 = vsub.f32 %v109, %v2093
    %v2095 = vand.u32 %v2094, 4294901760
    %v2096 = vsub.f32 %v2094, %v2095
    %v2097 = vand.u32 %v2096, 4294901760
    %2098 = vmatpush1.msra.mxu0 %v2097
    %2099 = vmatprep.subr.mxu0 0.0
    %v2100 = vand.u32 %v110, 4294901760
    %v2101 = vsub.f32 %v110, %v2100
    %v2102 = vand.u32 %v2101, 4294901760
    %v2103 = vsub.f32 %v2101, %v2102
    %v2104 = vand.u32 %v2103, 4294901760
    %2105 = vmatpush1.msra.mxu0 %v2104
    %2106 = vmatprep.subr.mxu0 0.0
    %v2107 = vand.u32 %v111, 4294901760
    %v2108 = vsub.f32 %v111, %v2107
    %v2109 = vand.u32 %v2108, 4294901760
    %v2110 = vsub.f32 %v2108, %v2109
    %v2111 = vand.u32 %v2110, 4294901760
    %2112 = vmatpush1.msra.mxu0 %v2111
    %2113 = vmatprep.subr.mxu0 0.0
    %v2114 = vand.u32 %v112, 4294901760
    %v2115 = vsub.f32 %v112, %v2114
    %v2116 = vand.u32 %v2115, 4294901760
    %v2117 = vsub.f32 %v2115, %v2116
    %v2118 = vand.u32 %v2117, 4294901760
    %2119 = vmatpush1.msra.mxu0 %v2118
    %2120 = vmatprep.subr.mxu0 0.0
    %v2121 = vand.u32 %v113, 4294901760
    %v2122 = vsub.f32 %v113, %v2121
    %v2123 = vand.u32 %v2122, 4294901760
    %v2124 = vsub.f32 %v2122, %v2123
    %v2125 = vand.u32 %v2124, 4294901760
    %2126 = vmatpush1.msra.mxu0 %v2125
    %2127 = vmatprep.subr.mxu0 0.0
    %v2128 = vand.u32 %v114, 4294901760
    %v2129 = vsub.f32 %v114, %v2128
    %v2130 = vand.u32 %v2129, 4294901760
    %v2131 = vsub.f32 %v2129, %v2130
    %v2132 = vand.u32 %v2131, 4294901760
    %2133 = vmatpush1.msra.mxu0 %v2132
    %2134 = vmatprep.subr.mxu0 0.0
    %v2135 = vand.u32 %v115, 4294901760
    %v2136 = vsub.f32 %v115, %v2135
    %v2137 = vand.u32 %v2136, 4294901760
    %v2138 = vsub.f32 %v2136, %v2137
    %v2139 = vand.u32 %v2138, 4294901760
    %2140 = vmatpush1.msra.mxu0 %v2139
    %2141 = vmatprep.subr.mxu0 0.0
    %v2142 = vand.u32 %v116, 4294901760
    %v2143 = vsub.f32 %v116, %v2142
    %v2144 = vand.u32 %v2143, 4294901760
    %v2145 = vsub.f32 %v2143, %v2144
    %v2146 = vand.u32 %v2145, 4294901760
    %2147 = vmatpush1.msra.mxu0 %v2146
    %2148 = vmatprep.subr.mxu0 0.0
    %v2149 = vand.u32 %v117, 4294901760
    %v2150 = vsub.f32 %v117, %v2149
    %v2151 = vand.u32 %v2150, 4294901760
    %v2152 = vsub.f32 %v2150, %v2151
    %v2153 = vand.u32 %v2152, 4294901760
    %2154 = vmatpush1.msra.mxu0 %v2153
    %2155 = vmatprep.subr.mxu0 0.0
    %v2156 = vand.u32 %v118, 4294901760
    %v2157 = vsub.f32 %v118, %v2156
    %v2158 = vand.u32 %v2157, 4294901760
    %v2159 = vsub.f32 %v2157, %v2158
    %v2160 = vand.u32 %v2159, 4294901760
    %2161 = vmatpush1.msra.mxu0 %v2160
    %2162 = vmatprep.subr.mxu0 0.0
    %v2163 = vand.u32 %v119, 4294901760
    %v2164 = vsub.f32 %v119, %v2163
    %v2165 = vand.u32 %v2164, 4294901760
    %v2166 = vsub.f32 %v2164, %v2165
    %v2167 = vand.u32 %v2166, 4294901760
    %2168 = vmatpush1.msra.mxu0 %v2167
    %2169 = vmatprep.subr.mxu0 0.0
    %v2170 = vand.u32 %v120, 4294901760
    %v2171 = vsub.f32 %v120, %v2170
    %v2172 = vand.u32 %v2171, 4294901760
    %v2173 = vsub.f32 %v2171, %v2172
    %v2174 = vand.u32 %v2173, 4294901760
    %2175 = vmatpush1.msra.mxu0 %v2174
    %2176 = vmatprep.subr.mxu0 0.0
    %v2177 = vand.u32 %v121, 4294901760
    %v2178 = vsub.f32 %v121, %v2177
    %v2179 = vand.u32 %v2178, 4294901760
    %v2180 = vsub.f32 %v2178, %v2179
    %v2181 = vand.u32 %v2180, 4294901760
    %2182 = vmatpush1.msra.mxu0 %v2181
    %2183 = vmatprep.subr.mxu0 0.0
    %v2184 = vand.u32 %v122, 4294901760
    %v2185 = vsub.f32 %v122, %v2184
    %v2186 = vand.u32 %v2185, 4294901760
    %v2187 = vsub.f32 %v2185, %v2186
    %v2188 = vand.u32 %v2187, 4294901760
    %2189 = vmatpush1.msra.mxu0 %v2188
    %v2190 = vand.u32 %v26, 4294901760
    %2191 = vmatprep.mubr.f32.mxu0 %v2190
    %v2192 = vand.u32 %v25, 4294901760
    %2193 = vmatmul.mubr.f32.gmra.mrb[0].mxu0 %v2192
    %v2194 = vpop.f32.mrb[0].mxu0
    %v2195 = vadd.f32 %v1963, %v2194
    %v2196 = vpop.f32.mrb[0].mxu0
    %2197 = vdwg.mxu0
    %2198 = vmatprep.subr.mxu0 0.0
    %v2199 = vand.u32 %v91, 4294901760
    %v2200 = vsub.f32 %v91, %v2199
    %2201 = vmatpush1.msra.mxu0 %v2200
    %2202 = vmatprep.subr.mxu0 0.0
    %v2203 = vand.u32 %v92, 4294901760
    %v2204 = vsub.f32 %v92, %v2203
    %2205 = vmatpush1.msra.mxu0 %v2204
    %2206 = vmatprep.subr.mxu0 0.0
    %v2207 = vand.u32 %v93, 4294901760
    %v2208 = vsub.f32 %v93, %v2207
    %2209 = vmatpush1.msra.mxu0 %v2208
    %2210 = vmatprep.subr.mxu0 0.0
    %v2211 = vand.u32 %v94, 4294901760
    %v2212 = vsub.f32 %v94, %v2211
    %2213 = vmatpush1.msra.mxu0 %v2212
    %2214 = vmatprep.subr.mxu0 0.0
    %v2215 = vand.u32 %v95, 4294901760
    %v2216 = vsub.f32 %v95, %v2215
    %2217 = vmatpush1.msra.mxu0 %v2216
    %2218 = vmatprep.subr.mxu0 0.0
    %v2219 = vand.u32 %v96, 4294901760
    %v2220 = vsub.f32 %v96, %v2219
    %2221 = vmatpush1.msra.mxu0 %v2220
    %2222 = vmatprep.subr.mxu0 0.0
    %v2223 = vand.u32 %v97, 4294901760
    %v2224 = vsub.f32 %v97, %v2223
    %2225 = vmatpush1.msra.mxu0 %v2224
    %2226 = vmatprep.subr.mxu0 0.0
    %v2227 = vand.u32 %v98, 4294901760
    %v2228 = vsub.f32 %v98, %v2227
    %2229 = vmatpush1.msra.mxu0 %v2228
    %2230 = vmatprep.subr.mxu0 0.0
    %v2231 = vand.u32 %v99, 4294901760
    %v2232 = vsub.f32 %v99, %v2231
    %2233 = vmatpush1.msra.mxu0 %v2232
    %2234 = vmatprep.subr.mxu0 0.0
    %v2235 = vand.u32 %v100, 4294901760
    %v2236 = vsub.f32 %v100, %v2235
    %2237 = vmatpush1.msra.mxu0 %v2236
    %2238 = vmatprep.subr.mxu0 0.0
    %v2239 = vand.u32 %v101, 4294901760
    %v2240 = vsub.f32 %v101, %v2239
    %2241 = vmatpush1.msra.mxu0 %v2240
    %2242 = vmatprep.subr.mxu0 0.0
    %v2243 = vand.u32 %v102, 4294901760
    %v2244 = vsub.f32 %v102, %v2243
    %2245 = vmatpush1.msra.mxu0 %v2244
    %2246 = vmatprep.subr.mxu0 0.0
    %v2247 = vand.u32 %v103, 4294901760
    %v2248 = vsub.f32 %v103, %v2247
    %2249 = vmatpush1.msra.mxu0 %v2248
    %2250 = vmatprep.subr.mxu0 0.0
    %v2251 = vand.u32 %v104, 4294901760
    %v2252 = vsub.f32 %v104, %v2251
    %2253 = vmatpush1.msra.mxu0 %v2252
    %2254 = vmatprep.subr.mxu0 0.0
    %v2255 = vand.u32 %v105, 4294901760
    %v2256 = vsub.f32 %v105, %v2255
    %2257 = vmatpush1.msra.mxu0 %v2256
    %2258 = vmatprep.subr.mxu0 0.0
    %v2259 = vand.u32 %v106, 4294901760
    %v2260 = vsub.f32 %v106, %v2259
    %2261 = vmatpush1.msra.mxu0 %v2260
    %2262 = vmatprep.subr.mxu0 0.0
    %v2263 = vand.u32 %v107, 4294901760
    %v2264 = vsub.f32 %v107, %v2263
    %2265 = vmatpush1.msra.mxu0 %v2264
    %2266 = vmatprep.subr.mxu0 0.0
    %v2267 = vand.u32 %v108, 4294901760
    %v2268 = vsub.f32 %v108, %v2267
    %2269 = vmatpush1.msra.mxu0 %v2268
    %2270 = vmatprep.subr.mxu0 0.0
    %v2271 = vand.u32 %v109, 4294901760
    %v2272 = vsub.f32 %v109, %v2271
    %2273 = vmatpush1.msra.mxu0 %v2272
    %2274 = vmatprep.subr.mxu0 0.0
    %v2275 = vand.u32 %v110, 4294901760
    %v2276 = vsub.f32 %v110, %v2275
    %2277 = vmatpush1.msra.mxu0 %v2276
    %2278 = vmatprep.subr.mxu0 0.0
    %v2279 = vand.u32 %v111, 4294901760
    %v2280 = vsub.f32 %v111, %v2279
    %2281 = vmatpush1.msra.mxu0 %v2280
    %2282 = vmatprep.subr.mxu0 0.0
    %v2283 = vand.u32 %v112, 4294901760
    %v2284 = vsub.f32 %v112, %v2283
    %2285 = vmatpush1.msra.mxu0 %v2284
    %2286 = vmatprep.subr.mxu0 0.0
    %v2287 = vand.u32 %v113, 4294901760
    %v2288 = vsub.f32 %v113, %v2287
    %2289 = vmatpush1.msra.mxu0 %v2288
    %2290 = vmatprep.subr.mxu0 0.0
    %v2291 = vand.u32 %v114, 4294901760
    %v2292 = vsub.f32 %v114, %v2291
    %2293 = vmatpush1.msra.mxu0 %v2292
    %2294 = vmatprep.subr.mxu0 0.0
    %v2295 = vand.u32 %v115, 4294901760
    %v2296 = vsub.f32 %v115, %v2295
    %2297 = vmatpush1.msra.mxu0 %v2296
    %2298 = vmatprep.subr.mxu0 0.0
    %v2299 = vand.u32 %v116, 4294901760
    %v2300 = vsub.f32 %v116, %v2299
    %2301 = vmatpush1.msra.mxu0 %v2300
    %2302 = vmatprep.subr.mxu0 0.0
    %v2303 = vand.u32 %v117, 4294901760
    %v2304 = vsub.f32 %v117, %v2303
    %2305 = vmatpush1.msra.mxu0 %v2304
    %2306 = vmatprep.subr.mxu0 0.0
    %v2307 = vand.u32 %v118, 4294901760
    %v2308 = vsub.f32 %v118, %v2307
    %2309 = vmatpush1.msra.mxu0 %v2308
    %2310 = vmatprep.subr.mxu0 0.0
    %v2311 = vand.u32 %v119, 4294901760
    %v2312 = vsub.f32 %v119, %v2311
    %2313 = vmatpush1.msra.mxu0 %v2312
    %2314 = vmatprep.subr.mxu0 0.0
    %v2315 = vand.u32 %v120, 4294901760
    %v2316 = vsub.f32 %v120, %v2315
    %2317 = vmatpush1.msra.mxu0 %v2316
    %2318 = vmatprep.subr.mxu0 0.0
    %v2319 = vand.u32 %v121, 4294901760
    %v2320 = vsub.f32 %v121, %v2319
    %2321 = vmatpush1.msra.mxu0 %v2320
    %2322 = vmatprep.subr.mxu0 0.0
    %v2323 = vand.u32 %v122, 4294901760
    %v2324 = vsub.f32 %v122, %v2323
    %2325 = vmatpush1.msra.mxu0 %v2324
    %v2326 = vand.u32 %v26, 4294901760
    %v2327 = vsub.f32 %v26, %v2326
    %2328 = vmatprep.mubr.f32.mxu0 %v2327
    %v2329 = vand.u32 %v25, 4294901760
    %v2330 = vsub.f32 %v25, %v2329
    %2331 = vmatmul.mubr.f32.gmra.mrb[0].mxu0 %v2330
    %v2332 = vpop.f32.mrb[0].mxu0
    %v2333 = vadd.f32 %v2195, %v2332
    %v2334 = vpop.f32.mrb[0].mxu0
    %2335 = vdwg.mxu0
    %2336 = vmatprep.subr.mxu0 0.0
    %v2337 = vand.u32 %v91, 4294901760
    %2338 = vmatpush1.msra.mxu0 %v2337
    %2339 = vmatprep.subr.mxu0 0.0
    %v2340 = vand.u32 %v92, 4294901760
    %2341 = vmatpush1.msra.mxu0 %v2340
    %2342 = vmatprep.subr.mxu0 0.0
    %v2343 = vand.u32 %v93, 4294901760
    %2344 = vmatpush1.msra.mxu0 %v2343
    %2345 = vmatprep.subr.mxu0 0.0
    %v2346 = vand.u32 %v94, 4294901760
    %2347 = vmatpush1.msra.mxu0 %v2346
    %2348 = vmatprep.subr.mxu0 0.0
    %v2349 = vand.u32 %v95, 4294901760
    %2350 = vmatpush1.msra.mxu0 %v2349
    %2351 = vmatprep.subr.mxu0 0.0
    %v2352 = vand.u32 %v96, 4294901760
    %2353 = vmatpush1.msra.mxu0 %v2352
    %2354 = vmatprep.subr.mxu0 0.0
    %v2355 = vand.u32 %v97, 4294901760
    %2356 = vmatpush1.msra.mxu0 %v2355
    %2357 = vmatprep.subr.mxu0 0.0
    %v2358 = vand.u32 %v98, 4294901760
    %2359 = vmatpush1.msra.mxu0 %v2358
    %2360 = vmatprep.subr.mxu0 0.0
    %v2361 = vand.u32 %v99, 4294901760
    %2362 = vmatpush1.msra.mxu0 %v2361
    %2363 = vmatprep.subr.mxu0 0.0
    %v2364 = vand.u32 %v100, 4294901760
    %2365 = vmatpush1.msra.mxu0 %v2364
    %2366 = vmatprep.subr.mxu0 0.0
    %v2367 = vand.u32 %v101, 4294901760
    %2368 = vmatpush1.msra.mxu0 %v2367
    %2369 = vmatprep.subr.mxu0 0.0
    %v2370 = vand.u32 %v102, 4294901760
    %2371 = vmatpush1.msra.mxu0 %v2370
    %2372 = vmatprep.subr.mxu0 0.0
    %v2373 = vand.u32 %v103, 4294901760
    %2374 = vmatpush1.msra.mxu0 %v2373
    %2375 = vmatprep.subr.mxu0 0.0
    %v2376 = vand.u32 %v104, 4294901760
    %2377 = vmatpush1.msra.mxu0 %v2376
    %2378 = vmatprep.subr.mxu0 0.0
    %v2379 = vand.u32 %v105, 4294901760
    %2380 = vmatpush1.msra.mxu0 %v2379
    %2381 = vmatprep.subr.mxu0 0.0
    %v2382 = vand.u32 %v106, 4294901760
    %2383 = vmatpush1.msra.mxu0 %v2382
    %2384 = vmatprep.subr.mxu0 0.0
    %v2385 = vand.u32 %v107, 4294901760
    %2386 = vmatpush1.msra.mxu0 %v2385
    %2387 = vmatprep.subr.mxu0 0.0
    %v2388 = vand.u32 %v108, 4294901760
    %2389 = vmatpush1.msra.mxu0 %v2388
    %2390 = vmatprep.subr.mxu0 0.0
    %v2391 = vand.u32 %v109, 4294901760
    %2392 = vmatpush1.msra.mxu0 %v2391
    %2393 = vmatprep.subr.mxu0 0.0
    %v2394 = vand.u32 %v110, 4294901760
    %2395 = vmatpush1.msra.mxu0 %v2394
    %2396 = vmatprep.subr.mxu0 0.0
    %v2397 = vand.u32 %v111, 4294901760
    %2398 = vmatpush1.msra.mxu0 %v2397
    %2399 = vmatprep.subr.mxu0 0.0
    %v2400 = vand.u32 %v112, 4294901760
    %2401 = vmatpush1.msra.mxu0 %v2400
    %2402 = vmatprep.subr.mxu0 0.0
    %v2403 = vand.u32 %v113, 4294901760
    %2404 = vmatpush1.msra.mxu0 %v2403
    %2405 = vmatprep.subr.mxu0 0.0
    %v2406 = vand.u32 %v114, 4294901760
    %2407 = vmatpush1.msra.mxu0 %v2406
    %2408 = vmatprep.subr.mxu0 0.0
    %v2409 = vand.u32 %v115, 4294901760
    %2410 = vmatpush1.msra.mxu0 %v2409
    %2411 = vmatprep.subr.mxu0 0.0
    %v2412 = vand.u32 %v116, 4294901760
    %2413 = vmatpush1.msra.mxu0 %v2412
    %2414 = vmatprep.subr.mxu0 0.0
    %v2415 = vand.u32 %v117, 4294901760
    %2416 = vmatpush1.msra.mxu0 %v2415
    %2417 = vmatprep.subr.mxu0 0.0
    %v2418 = vand.u32 %v118, 4294901760
    %2419 = vmatpush1.msra.mxu0 %v2418
    %2420 = vmatprep.subr.mxu0 0.0
    %v2421 = vand.u32 %v119, 4294901760
    %2422 = vmatpush1.msra.mxu0 %v2421
    %2423 = vmatprep.subr.mxu0 0.0
    %v2424 = vand.u32 %v120, 4294901760
    %2425 = vmatpush1.msra.mxu0 %v2424
    %2426 = vmatprep.subr.mxu0 0.0
    %v2427 = vand.u32 %v121, 4294901760
    %2428 = vmatpush1.msra.mxu0 %v2427
    %2429 = vmatprep.subr.mxu0 0.0
    %v2430 = vand.u32 %v122, 4294901760
    %2431 = vmatpush1.msra.mxu0 %v2430
    %v2432 = vand.u32 %v26, 4294901760
    %v2433 = vsub.f32 %v26, %v2432
    %v2434 = vand.u32 %v2433, 4294901760
    %2435 = vmatprep.mubr.f32.mxu0 %v2434
    %v2436 = vand.u32 %v25, 4294901760
    %v2437 = vsub.f32 %v25, %v2436
    %v2438 = vand.u32 %v2437, 4294901760
    %2439 = vmatmul.mubr.f32.gmra.mrb[0].mxu0 %v2438
    %v2440 = vpop.f32.mrb[0].mxu0
    %v2441 = vadd.f32 %v2333, %v2440
    %v2442 = vpop.f32.mrb[0].mxu0
    %2443 = vdwg.mxu0
    %2444 = vmatprep.subr.mxu0 0.0
    %v2445 = vand.u32 %v91, 4294901760
    %v2446 = vsub.f32 %v91, %v2445
    %v2447 = vand.u32 %v2446, 4294901760
    %2448 = vmatpush1.msra.mxu0 %v2447
    %2449 = vmatprep.subr.mxu0 0.0
    %v2450 = vand.u32 %v92, 4294901760
    %v2451 = vsub.f32 %v92, %v2450
    %v2452 = vand.u32 %v2451, 4294901760
    %2453 = vmatpush1.msra.mxu0 %v2452
    %2454 = vmatprep.subr.mxu0 0.0
    %v2455 = vand.u32 %v93, 4294901760
    %v2456 = vsub.f32 %v93, %v2455
    %v2457 = vand.u32 %v2456, 4294901760
    %2458 = vmatpush1.msra.mxu0 %v2457
    %2459 = vmatprep.subr.mxu0 0.0
    %v2460 = vand.u32 %v94, 4294901760
    %v2461 = vsub.f32 %v94, %v2460
    %v2462 = vand.u32 %v2461, 4294901760
    %2463 = vmatpush1.msra.mxu0 %v2462
    %2464 = vmatprep.subr.mxu0 0.0
    %v2465 = vand.u32 %v95, 4294901760
    %v2466 = vsub.f32 %v95, %v2465
    %v2467 = vand.u32 %v2466, 4294901760
    %2468 = vmatpush1.msra.mxu0 %v2467
    %2469 = vmatprep.subr.mxu0 0.0
    %v2470 = vand.u32 %v96, 4294901760
    %v2471 = vsub.f32 %v96, %v2470
    %v2472 = vand.u32 %v2471, 4294901760
    %2473 = vmatpush1.msra.mxu0 %v2472
    %2474 = vmatprep.subr.mxu0 0.0
    %v2475 = vand.u32 %v97, 4294901760
    %v2476 = vsub.f32 %v97, %v2475
    %v2477 = vand.u32 %v2476, 4294901760
    %2478 = vmatpush1.msra.mxu0 %v2477
    %2479 = vmatprep.subr.mxu0 0.0
    %v2480 = vand.u32 %v98, 4294901760
    %v2481 = vsub.f32 %v98, %v2480
    %v2482 = vand.u32 %v2481, 4294901760
    %2483 = vmatpush1.msra.mxu0 %v2482
    %2484 = vmatprep.subr.mxu0 0.0
    %v2485 = vand.u32 %v99, 4294901760
    %v2486 = vsub.f32 %v99, %v2485
    %v2487 = vand.u32 %v2486, 4294901760
    %2488 = vmatpush1.msra.mxu0 %v2487
    %2489 = vmatprep.subr.mxu0 0.0
    %v2490 = vand.u32 %v100, 4294901760
    %v2491 = vsub.f32 %v100, %v2490
    %v2492 = vand.u32 %v2491, 4294901760
    %2493 = vmatpush1.msra.mxu0 %v2492
    %2494 = vmatprep.subr.mxu0 0.0
    %v2495 = vand.u32 %v101, 4294901760
    %v2496 = vsub.f32 %v101, %v2495
    %v2497 = vand.u32 %v2496, 4294901760
    %2498 = vmatpush1.msra.mxu0 %v2497
    %2499 = vmatprep.subr.mxu0 0.0
    %v2500 = vand.u32 %v102, 4294901760
    %v2501 = vsub.f32 %v102, %v2500
    %v2502 = vand.u32 %v2501, 4294901760
    %2503 = vmatpush1.msra.mxu0 %v2502
    %2504 = vmatprep.subr.mxu0 0.0
    %v2505 = vand.u32 %v103, 4294901760
    %v2506 = vsub.f32 %v103, %v2505
    %v2507 = vand.u32 %v2506, 4294901760
    %2508 = vmatpush1.msra.mxu0 %v2507
    %2509 = vmatprep.subr.mxu0 0.0
    %v2510 = vand.u32 %v104, 4294901760
    %v2511 = vsub.f32 %v104, %v2510
    %v2512 = vand.u32 %v2511, 4294901760
    %2513 = vmatpush1.msra.mxu0 %v2512
    %2514 = vmatprep.subr.mxu0 0.0
    %v2515 = vand.u32 %v105, 4294901760
    %v2516 = vsub.f32 %v105, %v2515
    %v2517 = vand.u32 %v2516, 4294901760
    %2518 = vmatpush1.msra.mxu0 %v2517
    %2519 = vmatprep.subr.mxu0 0.0
    %v2520 = vand.u32 %v106, 4294901760
    %v2521 = vsub.f32 %v106, %v2520
    %v2522 = vand.u32 %v2521, 4294901760
    %2523 = vmatpush1.msra.mxu0 %v2522
    %2524 = vmatprep.subr.mxu0 0.0
    %v2525 = vand.u32 %v107, 4294901760
    %v2526 = vsub.f32 %v107, %v2525
    %v2527 = vand.u32 %v2526, 4294901760
    %2528 = vmatpush1.msra.mxu0 %v2527
    %2529 = vmatprep.subr.mxu0 0.0
    %v2530 = vand.u32 %v108, 4294901760
    %v2531 = vsub.f32 %v108, %v2530
    %v2532 = vand.u32 %v2531, 4294901760
    %2533 = vmatpush1.msra.mxu0 %v2532
    %2534 = vmatprep.subr.mxu0 0.0
    %v2535 = vand.u32 %v109, 4294901760
    %v2536 = vsub.f32 %v109, %v2535
    %v2537 = vand.u32 %v2536, 4294901760
    %2538 = vmatpush1.msra.mxu0 %v2537
    %2539 = vmatprep.subr.mxu0 0.0
    %v2540 = vand.u32 %v110, 4294901760
    %v2541 = vsub.f32 %v110, %v2540
    %v2542 = vand.u32 %v2541, 4294901760
    %2543 = vmatpush1.msra.mxu0 %v2542
    %2544 = vmatprep.subr.mxu0 0.0
    %v2545 = vand.u32 %v111, 4294901760
    %v2546 = vsub.f32 %v111, %v2545
    %v2547 = vand.u32 %v2546, 4294901760
    %2548 = vmatpush1.msra.mxu0 %v2547
    %2549 = vmatprep.subr.mxu0 0.0
    %v2550 = vand.u32 %v112, 4294901760
    %v2551 = vsub.f32 %v112, %v2550
    %v2552 = vand.u32 %v2551, 4294901760
    %2553 = vmatpush1.msra.mxu0 %v2552
    %2554 = vmatprep.subr.mxu0 0.0
    %v2555 = vand.u32 %v113, 4294901760
    %v2556 = vsub.f32 %v113, %v2555
    %v2557 = vand.u32 %v2556, 4294901760
    %2558 = vmatpush1.msra.mxu0 %v2557
    %2559 = vmatprep.subr.mxu0 0.0
    %v2560 = vand.u32 %v114, 4294901760
    %v2561 = vsub.f32 %v114, %v2560
    %v2562 = vand.u32 %v2561, 4294901760
    %2563 = vmatpush1.msra.mxu0 %v2562
    %2564 = vmatprep.subr.mxu0 0.0
    %v2565 = vand.u32 %v115, 4294901760
    %v2566 = vsub.f32 %v115, %v2565
    %v2567 = vand.u32 %v2566, 4294901760
    %2568 = vmatpush1.msra.mxu0 %v2567
    %2569 = vmatprep.subr.mxu0 0.0
    %v2570 = vand.u32 %v116, 4294901760
    %v2571 = vsub.f32 %v116, %v2570
    %v2572 = vand.u32 %v2571, 4294901760
    %2573 = vmatpush1.msra.mxu0 %v2572
    %2574 = vmatprep.subr.mxu0 0.0
    %v2575 = vand.u32 %v117, 4294901760
    %v2576 = vsub.f32 %v117, %v2575
    %v2577 = vand.u32 %v2576, 4294901760
    %2578 = vmatpush1.msra.mxu0 %v2577
    %2579 = vmatprep.subr.mxu0 0.0
    %v2580 = vand.u32 %v118, 4294901760
    %v2581 = vsub.f32 %v118, %v2580
    %v2582 = vand.u32 %v2581, 4294901760
    %2583 = vmatpush1.msra.mxu0 %v2582
    %2584 = vmatprep.subr.mxu0 0.0
    %v2585 = vand.u32 %v119, 4294901760
    %v2586 = vsub.f32 %v119, %v2585
    %v2587 = vand.u32 %v2586, 4294901760
    %2588 = vmatpush1.msra.mxu0 %v2587
    %2589 = vmatprep.subr.mxu0 0.0
    %v2590 = vand.u32 %v120, 4294901760
    %v2591 = vsub.f32 %v120, %v2590
    %v2592 = vand.u32 %v2591, 4294901760
    %2593 = vmatpush1.msra.mxu0 %v2592
    %2594 = vmatprep.subr.mxu0 0.0
    %v2595 = vand.u32 %v121, 4294901760
    %v2596 = vsub.f32 %v121, %v2595
    %v2597 = vand.u32 %v2596, 4294901760
    %2598 = vmatpush1.msra.mxu0 %v2597
    %2599 = vmatprep.subr.mxu0 0.0
    %v2600 = vand.u32 %v122, 4294901760
    %v2601 = vsub.f32 %v122, %v2600
    %v2602 = vand.u32 %v2601, 4294901760
    %2603 = vmatpush1.msra.mxu0 %v2602
    %v2604 = vand.u32 %v26, 4294901760
    %2605 = vmatprep.mubr.f32.mxu0 %v2604
    %v2606 = vand.u32 %v25, 4294901760
    %2607 = vmatmul.mubr.f32.gmra.mrb[0].mxu0 %v2606
    %v2608 = vpop.f32.mrb[0].mxu0
    %v2609 = vadd.f32 %v2441, %v2608
    %v2610 = vpop.f32.mrb[0].mxu0
    %2611 = vdwg.mxu0
    %2612 = vmatprep.subr.mxu0 0.0
    %v2613 = vand.u32 %v91, 4294901760
    %2614 = vmatpush1.msra.mxu0 %v2613
    %2615 = vmatprep.subr.mxu0 0.0
    %v2616 = vand.u32 %v92, 4294901760
    %2617 = vmatpush1.msra.mxu0 %v2616
    %2618 = vmatprep.subr.mxu0 0.0
    %v2619 = vand.u32 %v93, 4294901760
    %2620 = vmatpush1.msra.mxu0 %v2619
    %2621 = vmatprep.subr.mxu0 0.0
    %v2622 = vand.u32 %v94, 4294901760
    %2623 = vmatpush1.msra.mxu0 %v2622
    %2624 = vmatprep.subr.mxu0 0.0
    %v2625 = vand.u32 %v95, 4294901760
    %2626 = vmatpush1.msra.mxu0 %v2625
    %2627 = vmatprep.subr.mxu0 0.0
    %v2628 = vand.u32 %v96, 4294901760
    %2629 = vmatpush1.msra.mxu0 %v2628
    %2630 = vmatprep.subr.mxu0 0.0
    %v2631 = vand.u32 %v97, 4294901760
    %2632 = vmatpush1.msra.mxu0 %v2631
    %2633 = vmatprep.subr.mxu0 0.0
    %v2634 = vand.u32 %v98, 4294901760
    %2635 = vmatpush1.msra.mxu0 %v2634
    %2636 = vmatprep.subr.mxu0 0.0
    %v2637 = vand.u32 %v99, 4294901760
    %2638 = vmatpush1.msra.mxu0 %v2637
    %2639 = vmatprep.subr.mxu0 0.0
    %v2640 = vand.u32 %v100, 4294901760
    %2641 = vmatpush1.msra.mxu0 %v2640
    %2642 = vmatprep.subr.mxu0 0.0
    %v2643 = vand.u32 %v101, 4294901760
    %2644 = vmatpush1.msra.mxu0 %v2643
    %2645 = vmatprep.subr.mxu0 0.0
    %v2646 = vand.u32 %v102, 4294901760
    %2647 = vmatpush1.msra.mxu0 %v2646
    %2648 = vmatprep.subr.mxu0 0.0
    %v2649 = vand.u32 %v103, 4294901760
    %2650 = vmatpush1.msra.mxu0 %v2649
    %2651 = vmatprep.subr.mxu0 0.0
    %v2652 = vand.u32 %v104, 4294901760
    %2653 = vmatpush1.msra.mxu0 %v2652
    %2654 = vmatprep.subr.mxu0 0.0
    %v2655 = vand.u32 %v105, 4294901760
    %2656 = vmatpush1.msra.mxu0 %v2655
    %2657 = vmatprep.subr.mxu0 0.0
    %v2658 = vand.u32 %v106, 4294901760
    %2659 = vmatpush1.msra.mxu0 %v2658
    %2660 = vmatprep.subr.mxu0 0.0
    %v2661 = vand.u32 %v107, 4294901760
    %2662 = vmatpush1.msra.mxu0 %v2661
    %2663 = vmatprep.subr.mxu0 0.0
    %v2664 = vand.u32 %v108, 4294901760
    %2665 = vmatpush1.msra.mxu0 %v2664
    %2666 = vmatprep.subr.mxu0 0.0
    %v2667 = vand.u32 %v109, 4294901760
    %2668 = vmatpush1.msra.mxu0 %v2667
    %2669 = vmatprep.subr.mxu0 0.0
    %v2670 = vand.u32 %v110, 4294901760
    %2671 = vmatpush1.msra.mxu0 %v2670
    %2672 = vmatprep.subr.mxu0 0.0
    %v2673 = vand.u32 %v111, 4294901760
    %2674 = vmatpush1.msra.mxu0 %v2673
    %2675 = vmatprep.subr.mxu0 0.0
    %v2676 = vand.u32 %v112, 4294901760
    %2677 = vmatpush1.msra.mxu0 %v2676
    %2678 = vmatprep.subr.mxu0 0.0
    %v2679 = vand.u32 %v113, 4294901760
    %2680 = vmatpush1.msra.mxu0 %v2679
    %2681 = vmatprep.subr.mxu0 0.0
    %v2682 = vand.u32 %v114, 4294901760
    %2683 = vmatpush1.msra.mxu0 %v2682
    %2684 = vmatprep.subr.mxu0 0.0
    %v2685 = vand.u32 %v115, 4294901760
    %2686 = vmatpush1.msra.mxu0 %v2685
    %2687 = vmatprep.subr.mxu0 0.0
    %v2688 = vand.u32 %v116, 4294901760
    %2689 = vmatpush1.msra.mxu0 %v2688
    %2690 = vmatprep.subr.mxu0 0.0
    %v2691 = vand.u32 %v117, 4294901760
    %2692 = vmatpush1.msra.mxu0 %v2691
    %2693 = vmatprep.subr.mxu0 0.0
    %v2694 = vand.u32 %v118, 4294901760
    %2695 = vmatpush1.msra.mxu0 %v2694
    %2696 = vmatprep.subr.mxu0 0.0
    %v2697 = vand.u32 %v119, 4294901760
    %2698 = vmatpush1.msra.mxu0 %v2697
    %2699 = vmatprep.subr.mxu0 0.0
    %v2700 = vand.u32 %v120, 4294901760
    %2701 = vmatpush1.msra.mxu0 %v2700
    %2702 = vmatprep.subr.mxu0 0.0
    %v2703 = vand.u32 %v121, 4294901760
    %2704 = vmatpush1.msra.mxu0 %v2703
    %2705 = vmatprep.subr.mxu0 0.0
    %v2706 = vand.u32 %v122, 4294901760
    %2707 = vmatpush1.msra.mxu0 %v2706
    %v2708 = vand.u32 %v26, 4294901760
    %2709 = vmatprep.mubr.f32.mxu0 %v2708
    %v2710 = vand.u32 %v25, 4294901760
    %2711 = vmatmul.mubr.f32.gmra.mrb[0].mxu0 %v2710
    %v2712 = vpop.f32.mrb[0].mxu0
    %v2713 = vadd.f32 %v2609, %v2712
    %v2714 = vpop.f32.mrb[0].mxu0
    %2715 = vdwg.mxu0
    %v2716 = vmax.f32 %v2713, 0.0
    %v2717 = vld [vmem:[%s3] sm:$0xff]
    %v2718 = vld [vmem:[%s3 + $0x8] sm:$0xff]
    %v2719 = vld [vmem:[%s3 + $0x10] sm:$0xff]
    %v2720 = vld [vmem:[%s3 + $0x18] sm:$0x3f]
    %v2721 = vld [vmem:[%s4] sm:$0x1]
    %v2723 = vlaneseq
    %v2724 = vshrl.u32 %v2723, 7
    %v2725 = vsub.s32 0, %v2724
    %v2726 = vrot.slane %v2721, %v2725
    %vm2728 = vcmask 244736
    %v2730 = vsel %vm2728, %v2716, 0
    %vm2732 = vcmask 1045504
    %v2734 = vsel %vm2732, %v2720, 0
    %2736 = vmatprep.subr.mxu0 0.0
    %v2737 = vand.u32 %v2717, 4294901760
    %2738 = vmatpush1.msra.mxu0 %v2737
    %2739 = vmatprep.subr.mxu0 0.0
    %v2740 = vand.u32 %v2718, 4294901760
    %2741 = vmatpush1.msra.mxu0 %v2740
    %2742 = vmatprep.subr.mxu0 0.0
    %v2743 = vand.u32 %v2719, 4294901760
    %2744 = vmatpush1.msra.mxu0 %v2743
    %2745 = vmatprep.subr.mxu0 0.0
    %v2746 = vand.u32 %v2734, 4294901760
    %2747 = vmatpush1.msra.mxu0 %v2746
    %2748 = vmatprep.subr.mxu0 0.0
    %2749 = vmatpush1.msra.mxu0 0.0
    %2750 = vmatprep.subr.mxu0 0.0
    %2751 = vmatpush1.msra.mxu0 0.0
    %2752 = vmatprep.subr.mxu0 0.0
    %2753 = vmatpush1.msra.mxu0 0.0
    %2754 = vmatprep.subr.mxu0 0.0
    %2755 = vmatpush1.msra.mxu0 0.0
    %2756 = vmatprep.subr.mxu0 0.0
    %2757 = vmatpush1.msra.mxu0 0.0
    %2758 = vmatprep.subr.mxu0 0.0
    %2759 = vmatpush1.msra.mxu0 0.0
    %2760 = vmatprep.subr.mxu0 0.0
    %2761 = vmatpush1.msra.mxu0 0.0
    %2762 = vmatprep.subr.mxu0 0.0
    %2763 = vmatpush1.msra.mxu0 0.0
    %2764 = vmatprep.subr.mxu0 0.0
    %2765 = vmatpush1.msra.mxu0 0.0
    %2766 = vmatprep.subr.mxu0 0.0
    %2767 = vmatpush1.msra.mxu0 0.0
    %2768 = vmatprep.subr.mxu0 0.0
    %2769 = vmatpush1.msra.mxu0 0.0
    %2770 = vmatprep.subr.mxu0 0.0
    %2771 = vmatpush1.msra.mxu0 0.0
    %2772 = vmatprep.subr.mxu0 0.0
    %2773 = vmatpush1.msra.mxu0 0.0
    %2774 = vmatprep.subr.mxu0 0.0
    %2775 = vmatpush1.msra.mxu0 0.0
    %2776 = vmatprep.subr.mxu0 0.0
    %2777 = vmatpush1.msra.mxu0 0.0
    %2778 = vmatprep.subr.mxu0 0.0
    %2779 = vmatpush1.msra.mxu0 0.0
    %2780 = vmatprep.subr.mxu0 0.0
    %2781 = vmatpush1.msra.mxu0 0.0
    %2782 = vmatprep.subr.mxu0 0.0
    %2783 = vmatpush1.msra.mxu0 0.0
    %2784 = vmatprep.subr.mxu0 0.0
    %2785 = vmatpush1.msra.mxu0 0.0
    %2786 = vmatprep.subr.mxu0 0.0
    %2787 = vmatpush1.msra.mxu0 0.0
    %2788 = vmatprep.subr.mxu0 0.0
    %2789 = vmatpush1.msra.mxu0 0.0
    %2790 = vmatprep.subr.mxu0 0.0
    %2791 = vmatpush1.msra.mxu0 0.0
    %2792 = vmatprep.subr.mxu0 0.0
    %2793 = vmatpush1.msra.mxu0 0.0
    %2794 = vmatprep.subr.mxu0 0.0
    %2795 = vmatpush1.msra.mxu0 0.0
    %2796 = vmatprep.subr.mxu0 0.0
    %2797 = vmatpush1.msra.mxu0 0.0
    %2798 = vmatprep.subr.mxu0 0.0
    %2799 = vmatpush1.msra.mxu0 0.0
    %2800 = vmatprep.subr.mxu0 0.0
    %2801 = vmatpush1.msra.mxu0 0.0
    %2802 = vmatprep.subr.mxu0 0.0
    %2803 = vmatpush1.msra.mxu0 0.0
    %2804 = vmatprep.mubr.f32.mxu0 0.0
    %v2805 = vand.u32 %v2730, 4294901760
    %v2806 = vsub.f32 %v2730, %v2805
    %v2807 = vand.u32 %v2806, 4294901760
    %v2808 = vsub.f32 %v2806, %v2807
    %v2809 = vand.u32 %v2808, 4294901760
    %2810 = vmatmul.mubr.f32.gmra.mrb[0].mxu0 %v2809
    %v2811 = vpop.f32.mrb[0].mxu0
    %v2812 = vadd.f32 %v2726, %v2811
    %v2813 = vpop.f32.mrb[0].mxu0
    %2814 = vdwg.mxu0
    %2815 = vmatprep.subr.mxu0 0.0
    %v2816 = vand.u32 %v2717, 4294901760
    %v2817 = vsub.f32 %v2717, %v2816
    %v2818 = vand.u32 %v2817, 4294901760
    %v2819 = vsub.f32 %v2817, %v2818
    %v2820 = vand.u32 %v2819, 4294901760
    %2821 = vmatpush1.msra.mxu0 %v2820
    %2822 = vmatprep.subr.mxu0 0.0
    %v2823 = vand.u32 %v2718, 4294901760
    %v2824 = vsub.f32 %v2718, %v2823
    %v2825 = vand.u32 %v2824, 4294901760
    %v2826 = vsub.f32 %v2824, %v2825
    %v2827 = vand.u32 %v2826, 4294901760
    %2828 = vmatpush1.msra.mxu0 %v2827
    %2829 = vmatprep.subr.mxu0 0.0
    %v2830 = vand.u32 %v2719, 4294901760
    %v2831 = vsub.f32 %v2719, %v2830
    %v2832 = vand.u32 %v2831, 4294901760
    %v2833 = vsub.f32 %v2831, %v2832
    %v2834 = vand.u32 %v2833, 4294901760
    %2835 = vmatpush1.msra.mxu0 %v2834
    %2836 = vmatprep.subr.mxu0 0.0
    %v2837 = vand.u32 %v2734, 4294901760
    %v2838 = vsub.f32 %v2734, %v2837
    %v2839 = vand.u32 %v2838, 4294901760
    %v2840 = vsub.f32 %v2838, %v2839
    %v2841 = vand.u32 %v2840, 4294901760
    %2842 = vmatpush1.msra.mxu0 %v2841
    %2843 = vmatprep.subr.mxu0 0.0
    %2844 = vmatpush1.msra.mxu0 0.0
    %2845 = vmatprep.subr.mxu0 0.0
    %2846 = vmatpush1.msra.mxu0 0.0
    %2847 = vmatprep.subr.mxu0 0.0
    %2848 = vmatpush1.msra.mxu0 0.0
    %2849 = vmatprep.subr.mxu0 0.0
    %2850 = vmatpush1.msra.mxu0 0.0
    %2851 = vmatprep.subr.mxu0 0.0
    %2852 = vmatpush1.msra.mxu0 0.0
    %2853 = vmatprep.subr.mxu0 0.0
    %2854 = vmatpush1.msra.mxu0 0.0
    %2855 = vmatprep.subr.mxu0 0.0
    %2856 = vmatpush1.msra.mxu0 0.0
    %2857 = vmatprep.subr.mxu0 0.0
    %2858 = vmatpush1.msra.mxu0 0.0
    %2859 = vmatprep.subr.mxu0 0.0
    %2860 = vmatpush1.msra.mxu0 0.0
    %2861 = vmatprep.subr.mxu0 0.0
    %2862 = vmatpush1.msra.mxu0 0.0
    %2863 = vmatprep.subr.mxu0 0.0
    %2864 = vmatpush1.msra.mxu0 0.0
    %2865 = vmatprep.subr.mxu0 0.0
    %2866 = vmatpush1.msra.mxu0 0.0
    %2867 = vmatprep.subr.mxu0 0.0
    %2868 = vmatpush1.msra.mxu0 0.0
    %2869 = vmatprep.subr.mxu0 0.0
    %2870 = vmatpush1.msra.mxu0 0.0
    %2871 = vmatprep.subr.mxu0 0.0
    %2872 = vmatpush1.msra.mxu0 0.0
    %2873 = vmatprep.subr.mxu0 0.0
    %2874 = vmatpush1.msra.mxu0 0.0
    %2875 = vmatprep.subr.mxu0 0.0
    %2876 = vmatpush1.msra.mxu0 0.0
    %2877 = vmatprep.subr.mxu0 0.0
    %2878 = vmatpush1.msra.mxu0 0.0
    %2879 = vmatprep.subr.mxu0 0.0
    %2880 = vmatpush1.msra.mxu0 0.0
    %2881 = vmatprep.subr.mxu0 0.0
    %2882 = vmatpush1.msra.mxu0 0.0
    %2883 = vmatprep.subr.mxu0 0.0
    %2884 = vmatpush1.msra.mxu0 0.0
    %2885 = vmatprep.subr.mxu0 0.0
    %2886 = vmatpush1.msra.mxu0 0.0
    %2887 = vmatprep.subr.mxu0 0.0
    %2888 = vmatpush1.msra.mxu0 0.0
    %2889 = vmatprep.subr.mxu0 0.0
    %2890 = vmatpush1.msra.mxu0 0.0
    %2891 = vmatprep.subr.mxu0 0.0
    %2892 = vmatpush1.msra.mxu0 0.0
    %2893 = vmatprep.subr.mxu0 0.0
    %2894 = vmatpush1.msra.mxu0 0.0
    %2895 = vmatprep.subr.mxu0 0.0
    %2896 = vmatpush1.msra.mxu0 0.0
    %2897 = vmatprep.subr.mxu0 0.0
    %2898 = vmatpush1.msra.mxu0 0.0
    %2899 = vmatprep.mubr.f32.mxu0 0.0
    %v2900 = vand.u32 %v2730, 4294901760
    %2901 = vmatmul.mubr.f32.gmra.mrb[0].mxu0 %v2900
    %v2902 = vpop.f32.mrb[0].mxu0
    %v2903 = vadd.f32 %v2812, %v2902
    %v2904 = vpop.f32.mrb[0].mxu0
    %2905 = vdwg.mxu0
    %2906 = vmatprep.subr.mxu0 0.0
    %v2907 = vand.u32 %v2717, 4294901760
    %v2908 = vsub.f32 %v2717, %v2907
    %2909 = vmatpush1.msra.mxu0 %v2908
    %2910 = vmatprep.subr.mxu0 0.0
    %v2911 = vand.u32 %v2718, 4294901760
    %v2912 = vsub.f32 %v2718, %v2911
    %2913 = vmatpush1.msra.mxu0 %v2912
    %2914 = vmatprep.subr.mxu0 0.0
    %v2915 = vand.u32 %v2719, 4294901760
    %v2916 = vsub.f32 %v2719, %v2915
    %2917 = vmatpush1.msra.mxu0 %v2916
    %2918 = vmatprep.subr.mxu0 0.0
    %v2919 = vand.u32 %v2734, 4294901760
    %v2920 = vsub.f32 %v2734, %v2919
    %2921 = vmatpush1.msra.mxu0 %v2920
    %2922 = vmatprep.subr.mxu0 0.0
    %2923 = vmatpush1.msra.mxu0 0.0
    %2924 = vmatprep.subr.mxu0 0.0
    %2925 = vmatpush1.msra.mxu0 0.0
    %2926 = vmatprep.subr.mxu0 0.0
    %2927 = vmatpush1.msra.mxu0 0.0
    %2928 = vmatprep.subr.mxu0 0.0
    %2929 = vmatpush1.msra.mxu0 0.0
    %2930 = vmatprep.subr.mxu0 0.0
    %2931 = vmatpush1.msra.mxu0 0.0
    %2932 = vmatprep.subr.mxu0 0.0
    %2933 = vmatpush1.msra.mxu0 0.0
    %2934 = vmatprep.subr.mxu0 0.0
    %2935 = vmatpush1.msra.mxu0 0.0
    %2936 = vmatprep.subr.mxu0 0.0
    %2937 = vmatpush1.msra.mxu0 0.0
    %2938 = vmatprep.subr.mxu0 0.0
    %2939 = vmatpush1.msra.mxu0 0.0
    %2940 = vmatprep.subr.mxu0 0.0
    %2941 = vmatpush1.msra.mxu0 0.0
    %2942 = vmatprep.subr.mxu0 0.0
    %2943 = vmatpush1.msra.mxu0 0.0
    %2944 = vmatprep.subr.mxu0 0.0
    %2945 = vmatpush1.msra.mxu0 0.0
    %2946 = vmatprep.subr.mxu0 0.0
    %2947 = vmatpush1.msra.mxu0 0.0
    %2948 = vmatprep.subr.mxu0 0.0
    %2949 = vmatpush1.msra.mxu0 0.0
    %2950 = vmatprep.subr.mxu0 0.0
    %2951 = vmatpush1.msra.mxu0 0.0
    %2952 = vmatprep.subr.mxu0 0.0
    %2953 = vmatpush1.msra.mxu0 0.0
    %2954 = vmatprep.subr.mxu0 0.0
    %2955 = vmatpush1.msra.mxu0 0.0
    %2956 = vmatprep.subr.mxu0 0.0
    %2957 = vmatpush1.msra.mxu0 0.0
    %2958 = vmatprep.subr.mxu0 0.0
    %2959 = vmatpush1.msra.mxu0 0.0
    %2960 = vmatprep.subr.mxu0 0.0
    %2961 = vmatpush1.msra.mxu0 0.0
    %2962 = vmatprep.subr.mxu0 0.0
    %2963 = vmatpush1.msra.mxu0 0.0
    %2964 = vmatprep.subr.mxu0 0.0
    %2965 = vmatpush1.msra.mxu0 0.0
    %2966 = vmatprep.subr.mxu0 0.0
    %2967 = vmatpush1.msra.mxu0 0.0
    %2968 = vmatprep.subr.mxu0 0.0
    %2969 = vmatpush1.msra.mxu0 0.0
    %2970 = vmatprep.subr.mxu0 0.0
    %2971 = vmatpush1.msra.mxu0 0.0
    %2972 = vmatprep.subr.mxu0 0.0
    %2973 = vmatpush1.msra.mxu0 0.0
    %2974 = vmatprep.subr.mxu0 0.0
    %2975 = vmatpush1.msra.mxu0 0.0
    %2976 = vmatprep.subr.mxu0 0.0
    %2977 = vmatpush1.msra.mxu0 0.0
    %2978 = vmatprep.mubr.f32.mxu0 0.0
    %v2979 = vand.u32 %v2730, 4294901760
    %v2980 = vsub.f32 %v2730, %v2979
    %2981 = vmatmul.mubr.f32.gmra.mrb[0].mxu0 %v2980
    %v2982 = vpop.f32.mrb[0].mxu0
    %v2983 = vadd.f32 %v2903, %v2982
    %v2984 = vpop.f32.mrb[0].mxu0
    %2985 = vdwg.mxu0
    %2986 = vmatprep.subr.mxu0 0.0
    %v2987 = vand.u32 %v2717, 4294901760
    %2988 = vmatpush1.msra.mxu0 %v2987
    %2989 = vmatprep.subr.mxu0 0.0
    %v2990 = vand.u32 %v2718, 4294901760
    %2991 = vmatpush1.msra.mxu0 %v2990
    %2992 = vmatprep.subr.mxu0 0.0
    %v2993 = vand.u32 %v2719, 4294901760
    %2994 = vmatpush1.msra.mxu0 %v2993
    %2995 = vmatprep.subr.mxu0 0.0
    %v2996 = vand.u32 %v2734, 4294901760
    %2997 = vmatpush1.msra.mxu0 %v2996
    %2998 = vmatprep.subr.mxu0 0.0
    %2999 = vmatpush1.msra.mxu0 0.0
    %3000 = vmatprep.subr.mxu0 0.0
    %3001 = vmatpush1.msra.mxu0 0.0
    %3002 = vmatprep.subr.mxu0 0.0
    %3003 = vmatpush1.msra.mxu0 0.0
    %3004 = vmatprep.subr.mxu0 0.0
    %3005 = vmatpush1.msra.mxu0 0.0
    %3006 = vmatprep.subr.mxu0 0.0
    %3007 = vmatpush1.msra.mxu0 0.0
    %3008 = vmatprep.subr.mxu0 0.0
    %3009 = vmatpush1.msra.mxu0 0.0
    %3010 = vmatprep.subr.mxu0 0.0
    %3011 = vmatpush1.msra.mxu0 0.0
    %3012 = vmatprep.subr.mxu0 0.0
    %3013 = vmatpush1.msra.mxu0 0.0
    %3014 = vmatprep.subr.mxu0 0.0
    %3015 = vmatpush1.msra.mxu0 0.0
    %3016 = vmatprep.subr.mxu0 0.0
    %3017 = vmatpush1.msra.mxu0 0.0
    %3018 = vmatprep.subr.mxu0 0.0
    %3019 = vmatpush1.msra.mxu0 0.0
    %3020 = vmatprep.subr.mxu0 0.0
    %3021 = vmatpush1.msra.mxu0 0.0
    %3022 = vmatprep.subr.mxu0 0.0
    %3023 = vmatpush1.msra.mxu0 0.0
    %3024 = vmatprep.subr.mxu0 0.0
    %3025 = vmatpush1.msra.mxu0 0.0
    %3026 = vmatprep.subr.mxu0 0.0
    %3027 = vmatpush1.msra.mxu0 0.0
    %3028 = vmatprep.subr.mxu0 0.0
    %3029 = vmatpush1.msra.mxu0 0.0
    %3030 = vmatprep.subr.mxu0 0.0
    %3031 = vmatpush1.msra.mxu0 0.0
    %3032 = vmatprep.subr.mxu0 0.0
    %3033 = vmatpush1.msra.mxu0 0.0
    %3034 = vmatprep.subr.mxu0 0.0
    %3035 = vmatpush1.msra.mxu0 0.0
    %3036 = vmatprep.subr.mxu0 0.0
    %3037 = vmatpush1.msra.mxu0 0.0
    %3038 = vmatprep.subr.mxu0 0.0
    %3039 = vmatpush1.msra.mxu0 0.0
    %3040 = vmatprep.subr.mxu0 0.0
    %3041 = vmatpush1.msra.mxu0 0.0
    %3042 = vmatprep.subr.mxu0 0.0
    %3043 = vmatpush1.msra.mxu0 0.0
    %3044 = vmatprep.subr.mxu0 0.0
    %3045 = vmatpush1.msra.mxu0 0.0
    %3046 = vmatprep.subr.mxu0 0.0
    %3047 = vmatpush1.msra.mxu0 0.0
    %3048 = vmatprep.subr.mxu0 0.0
    %3049 = vmatpush1.msra.mxu0 0.0
    %3050 = vmatprep.subr.mxu0 0.0
    %3051 = vmatpush1.msra.mxu0 0.0
    %3052 = vmatprep.subr.mxu0 0.0
    %3053 = vmatpush1.msra.mxu0 0.0
    %3054 = vmatprep.mubr.f32.mxu0 0.0
    %v3055 = vand.u32 %v2730, 4294901760
    %v3056 = vsub.f32 %v2730, %v3055
    %v3057 = vand.u32 %v3056, 4294901760
    %3058 = vmatmul.mubr.f32.gmra.mrb[0].mxu0 %v3057
    %v3059 = vpop.f32.mrb[0].mxu0
    %v3060 = vadd.f32 %v2983, %v3059
    %v3061 = vpop.f32.mrb[0].mxu0
    %3062 = vdwg.mxu0
    %3063 = vmatprep.subr.mxu0 0.0
    %v3064 = vand.u32 %v2717, 4294901760
    %v3065 = vsub.f32 %v2717, %v3064
    %v3066 = vand.u32 %v3065, 4294901760
    %3067 = vmatpush1.msra.mxu0 %v3066
    %3068 = vmatprep.subr.mxu0 0.0
    %v3069 = vand.u32 %v2718, 4294901760
    %v3070 = vsub.f32 %v2718, %v3069
    %v3071 = vand.u32 %v3070, 4294901760
    %3072 = vmatpush1.msra.mxu0 %v3071
    %3073 = vmatprep.subr.mxu0 0.0
    %v3074 = vand.u32 %v2719, 4294901760
    %v3075 = vsub.f32 %v2719, %v3074
    %v3076 = vand.u32 %v3075, 4294901760
    %3077 = vmatpush1.msra.mxu0 %v3076
    %3078 = vmatprep.subr.mxu0 0.0
    %v3079 = vand.u32 %v2734, 4294901760
    %v3080 = vsub.f32 %v2734, %v3079
    %v3081 = vand.u32 %v3080, 4294901760
    %3082 = vmatpush1.msra.mxu0 %v3081
    %3083 = vmatprep.subr.mxu0 0.0
    %3084 = vmatpush1.msra.mxu0 0.0
    %3085 = vmatprep.subr.mxu0 0.0
    %3086 = vmatpush1.msra.mxu0 0.0
    %3087 = vmatprep.subr.mxu0 0.0
    %3088 = vmatpush1.msra.mxu0 0.0
    %3089 = vmatprep.subr.mxu0 0.0
    %3090 = vmatpush1.msra.mxu0 0.0
    %3091 = vmatprep.subr.mxu0 0.0
    %3092 = vmatpush1.msra.mxu0 0.0
    %3093 = vmatprep.subr.mxu0 0.0
    %3094 = vmatpush1.msra.mxu0 0.0
    %3095 = vmatprep.subr.mxu0 0.0
    %3096 = vmatpush1.msra.mxu0 0.0
    %3097 = vmatprep.subr.mxu0 0.0
    %3098 = vmatpush1.msra.mxu0 0.0
    %3099 = vmatprep.subr.mxu0 0.0
    %3100 = vmatpush1.msra.mxu0 0.0
    %3101 = vmatprep.subr.mxu0 0.0
    %3102 = vmatpush1.msra.mxu0 0.0
    %3103 = vmatprep.subr.mxu0 0.0
    %3104 = vmatpush1.msra.mxu0 0.0
    %3105 = vmatprep.subr.mxu0 0.0
    %3106 = vmatpush1.msra.mxu0 0.0
    %3107 = vmatprep.subr.mxu0 0.0
    %3108 = vmatpush1.msra.mxu0 0.0
    %3109 = vmatprep.subr.mxu0 0.0
    %3110 = vmatpush1.msra.mxu0 0.0
    %3111 = vmatprep.subr.mxu0 0.0
    %3112 = vmatpush1.msra.mxu0 0.0
    %3113 = vmatprep.subr.mxu0 0.0
    %3114 = vmatpush1.msra.mxu0 0.0
    %3115 = vmatprep.subr.mxu0 0.0
    %3116 = vmatpush1.msra.mxu0 0.0
    %3117 = vmatprep.subr.mxu0 0.0
    %3118 = vmatpush1.msra.mxu0 0.0
    %3119 = vmatprep.subr.mxu0 0.0
    %3120 = vmatpush1.msra.mxu0 0.0
    %3121 = vmatprep.subr.mxu0 0.0
    %3122 = vmatpush1.msra.mxu0 0.0
    %3123 = vmatprep.subr.mxu0 0.0
    %3124 = vmatpush1.msra.mxu0 0.0
    %3125 = vmatprep.subr.mxu0 0.0
    %3126 = vmatpush1.msra.mxu0 0.0
    %3127 = vmatprep.subr.mxu0 0.0
    %3128 = vmatpush1.msra.mxu0 0.0
    %3129 = vmatprep.subr.mxu0 0.0
    %3130 = vmatpush1.msra.mxu0 0.0
    %3131 = vmatprep.subr.mxu0 0.0
    %3132 = vmatpush1.msra.mxu0 0.0
    %3133 = vmatprep.subr.mxu0 0.0
    %3134 = vmatpush1.msra.mxu0 0.0
    %3135 = vmatprep.subr.mxu0 0.0
    %3136 = vmatpush1.msra.mxu0 0.0
    %3137 = vmatprep.subr.mxu0 0.0
    %3138 = vmatpush1.msra.mxu0 0.0
    %3139 = vmatprep.mubr.f32.mxu0 0.0
    %v3140 = vand.u32 %v2730, 4294901760
    %3141 = vmatmul.mubr.f32.gmra.mrb[0].mxu0 %v3140
    %v3142 = vpop.f32.mrb[0].mxu0
    %v3143 = vadd.f32 %v3060, %v3142
    %v3144 = vpop.f32.mrb[0].mxu0
    %3145 = vdwg.mxu0
    %3146 = vmatprep.subr.mxu0 0.0
    %v3147 = vand.u32 %v2717, 4294901760
    %3148 = vmatpush1.msra.mxu0 %v3147
    %3149 = vmatprep.subr.mxu0 0.0
    %v3150 = vand.u32 %v2718, 4294901760
    %3151 = vmatpush1.msra.mxu0 %v3150
    %3152 = vmatprep.subr.mxu0 0.0
    %v3153 = vand.u32 %v2719, 4294901760
    %3154 = vmatpush1.msra.mxu0 %v3153
    %3155 = vmatprep.subr.mxu0 0.0
    %v3156 = vand.u32 %v2734, 4294901760
    %3157 = vmatpush1.msra.mxu0 %v3156
    %3158 = vmatprep.subr.mxu0 0.0
    %3159 = vmatpush1.msra.mxu0 0.0
    %3160 = vmatprep.subr.mxu0 0.0
    %3161 = vmatpush1.msra.mxu0 0.0
    %3162 = vmatprep.subr.mxu0 0.0
    %3163 = vmatpush1.msra.mxu0 0.0
    %3164 = vmatprep.subr.mxu0 0.0
    %3165 = vmatpush1.msra.mxu0 0.0
    %3166 = vmatprep.subr.mxu0 0.0
    %3167 = vmatpush1.msra.mxu0 0.0
    %3168 = vmatprep.subr.mxu0 0.0
    %3169 = vmatpush1.msra.mxu0 0.0
    %3170 = vmatprep.subr.mxu0 0.0
    %3171 = vmatpush1.msra.mxu0 0.0
    %3172 = vmatprep.subr.mxu0 0.0
    %3173 = vmatpush1.msra.mxu0 0.0
    %3174 = vmatprep.subr.mxu0 0.0
    %3175 = vmatpush1.msra.mxu0 0.0
    %3176 = vmatprep.subr.mxu0 0.0
    %3177 = vmatpush1.msra.mxu0 0.0
    %3178 = vmatprep.subr.mxu0 0.0
    %3179 = vmatpush1.msra.mxu0 0.0
    %3180 = vmatprep.subr.mxu0 0.0
    %3181 = vmatpush1.msra.mxu0 0.0
    %3182 = vmatprep.subr.mxu0 0.0
    %3183 = vmatpush1.msra.mxu0 0.0
    %3184 = vmatprep.subr.mxu0 0.0
    %3185 = vmatpush1.msra.mxu0 0.0
    %3186 = vmatprep.subr.mxu0 0.0
    %3187 = vmatpush1.msra.mxu0 0.0
    %3188 = vmatprep.subr.mxu0 0.0
    %3189 = vmatpush1.msra.mxu0 0.0
    %3190 = vmatprep.subr.mxu0 0.0
    %3191 = vmatpush1.msra.mxu0 0.0
    %3192 = vmatprep.subr.mxu0 0.0
    %3193 = vmatpush1.msra.mxu0 0.0
    %3194 = vmatprep.subr.mxu0 0.0
    %3195 = vmatpush1.msra.mxu0 0.0
    %3196 = vmatprep.subr.mxu0 0.0
    %3197 = vmatpush1.msra.mxu0 0.0
    %3198 = vmatprep.subr.mxu0 0.0
    %3199 = vmatpush1.msra.mxu0 0.0
    %3200 = vmatprep.subr.mxu0 0.0
    %3201 = vmatpush1.msra.mxu0 0.0
    %3202 = vmatprep.subr.mxu0 0.0
    %3203 = vmatpush1.msra.mxu0 0.0
    %3204 = vmatprep.subr.mxu0 0.0
    %3205 = vmatpush1.msra.mxu0 0.0
    %3206 = vmatprep.subr.mxu0 0.0
    %3207 = vmatpush1.msra.mxu0 0.0
    %3208 = vmatprep.subr.mxu0 0.0
    %3209 = vmatpush1.msra.mxu0 0.0
    %3210 = vmatprep.subr.mxu0 0.0
    %3211 = vmatpush1.msra.mxu0 0.0
    %3212 = vmatprep.subr.mxu0 0.0
    %3213 = vmatpush1.msra.mxu0 0.0
    %3214 = vmatprep.mubr.f32.mxu0 0.0
    %v3215 = vand.u32 %v2730, 4294901760
    %3216 = vmatmul.mubr.f32.gmra.mrb[0].mxu0 %v3215
    %v3217 = vpop.f32.mrb[0].mxu0
    %v3218 = vadd.f32 %v3143, %v3217
    %v3219 = vpop.f32.mrb[0].mxu0
    %3220 = vdwg.mxu0
    %3221 = vxpose.xlu0.b32.start [1/16] %v3218, 128
    %3222 = vxpose.xlu0.b32.cont [2/16] 0.0, 128
    %3223 = vxpose.xlu0.b32.cont [3/16] 0.0, 128
    %3224 = vxpose.xlu0.b32.cont [4/16] 0.0, 128
    %3225 = vxpose.xlu0.b32.cont [5/16] 0.0, 128
    %3226 = vxpose.xlu0.b32.cont [6/16] 0.0, 128
    %3227 = vxpose.xlu0.b32.cont [7/16] 0.0, 128
    %3228 = vxpose.xlu0.b32.cont [8/16] 0.0, 128
    %3229 = vxpose.xlu0.b32.cont [9/16] 0.0, 128
    %3230 = vxpose.xlu0.b32.cont [10/16] 0.0, 128
    %3231 = vxpose.xlu0.b32.cont [11/16] 0.0, 128
    %3232 = vxpose.xlu0.b32.cont [12/16] 0.0, 128
    %3233 = vxpose.xlu0.b32.cont [13/16] 0.0, 128
    %3234 = vxpose.xlu0.b32.cont [14/16] 0.0, 128
    %3235 = vxpose.xlu0.b32.cont [15/16] 0.0, 128
    %3236 = vxpose.xlu0.b32.end [16/16] 0.0, 128
    %v3237 = vpop.trf.xlu0
    %v3238 = vpop.trf.xlu0
    %v3239 = vpop.trf.xlu0
    %v3240 = vpop.trf.xlu0
    %v3241 = vpop.trf.xlu0
    %v3242 = vpop.trf.xlu0
    %v3243 = vpop.trf.xlu0
    %v3244 = vpop.trf.xlu0
    %v3245 = vpop.trf.xlu0
    %v3246 = vpop.trf.xlu0
    %v3247 = vpop.trf.xlu0
    %v3248 = vpop.trf.xlu0
    %v3249 = vpop.trf.xlu0
    %v3250 = vpop.trf.xlu0
    %v3251 = vpop.trf.xlu0
    %v3252 = vpop.trf.xlu0
    %vm3253 = vcmask 59392
    %3254 = vst.msk [vmem:[#allocation2] sm:$0x7] %vm3253, %v3237
    // Predicated region
    $region22: #{tpu_custom_call.1} parent=1 // pred_check
      _
    $region23: #{tpu_custom_call.1} parent=1 // pred_check_branch
      %3256 = sbr.rel (0) target = $region25
    $region24: #{tpu_custom_call.1} parent=1 // pred_region
      %s3258 = ssub.s32 64, 64
      %3259 = vsyncadd [#allocation3], %s3258
      %s3261 = sshll.u32 [#allocation2], 4
      %s3262 = int_to_ptr.vmem [resolvable:$true] %s3261
      %3264 = dma.vmem_to_hbm [thread:$0]  %s3262, 64, %s5, [#allocation3]
    $region25: #{tpu_custom_call.1} parent=1 // pred_fallthru
      _
    // Predicated region
    $region26: #{tpu_custom_call.1} parent=1 // pred_check
      _
    $region27: #{tpu_custom_call.1} parent=1 // pred_check_branch
      %3266 = sbr.rel (0) target = $region29
    $region28: #{tpu_custom_call.1} parent=1 // pred_region
      %3267 = dma.done [#allocation3], 64
    $region29: #{tpu_custom_call.1} parent=1 // pred_fallthru
      _
    %3268 = vsyncpa [#allocation3], 1

</llo_original>
